<compile_context>
chip_gen: v5e
topology: v5e:2x2
jax: 0.10.0
libtpu: 0.0.40
codegen_flags: <defaults>
</compile_context>

<pallas_src>
import functools

import jax
import jax.numpy as jnp
import numpy as np
from jax.experimental import pallas as pl
from jax.experimental.pallas import tpu as pltpu

# AdaptiveLIF hyper-parameters (module defaults)
RM, DT, B0, BETA = 1.0, 1.0, 0.01, 1.8


def _drb_kernel(x_ref, win_ref, bin_ref, whh_ref, bhh_ref, alpha_ref, rho_ref,
                out_ref, x_tail, h_hist, u_sc, eta_sc):
    chunk, tb, nin = x_ref.shape          # timesteps per grid step, batch block, inputs
    t_max = win_ref.shape[0]              # max synaptic delay (static)
    h = out_ref.shape[2]
    c = pl.program_id(1)                  # time-chunk index ("arbitrary"/sequential axis)
    mm_dtype = win_ref.dtype
    # bf16 operands -> single MXU pass; the f32 fallback needs HIGHEST to stay exact.
    prec = jax.lax.Precision.HIGHEST if mm_dtype == jnp.float32 else None

    # reset_state() at the first time chunk of every batch block
    @pl.when(c == 0)
    def _():
        x_tail[...] = jnp.zeros_like(x_tail)
        h_hist[...] = jnp.zeros_like(h_hist)
        u_sc[...] = jnp.zeros_like(u_sc)
        eta_sc[...] = jnp.zeros_like(eta_sc)

    # ---------------- feed-forward synapse, hoisted out of the serial loop -------------
    # ext[k] = x at global time c*chunk + k - (t_max-1); the leading (t_max-1) rows are
    # the tail carried from the previous chunk (zeros before t = 0).
    if t_max > 1:
        ext = jnp.concatenate([x_tail[...], x_ref[...]], axis=0)
    else:
        ext = x_ref[...]
    # ff[step*tb + b, :] = b_in + sum_d x_{t-d}[b] @ W_in_d[d]   with  t = c*chunk + step
    ff = jnp.broadcast_to(bin_ref[...], (chunk * tb, h))
    for d in range(t_max):
        lo = t_max - 1 - d                                    # static slice start
        xd = ext[lo:lo + chunk].reshape(chunk * tb, nin).astype(mm_dtype)
        ff = ff + jnp.dot(xd, win_ref[d], preferred_element_type=jnp.float32,
                          precision=prec)
    # carry the last (t_max-1) timesteps of x as the next chunk's tail
    if t_max > 1:
        x_tail[...] = x_ref[pl.ds(chunk - (t_max - 1), t_max - 1)]

    # ---------------- hoisted loads / broadcasts (JAX does not CSE broadcasts) ---------
    b_hh = jnp.broadcast_to(bhh_ref[...], (tb, h))
    alpha = jnp.broadcast_to(alpha_ref[...], (tb, h))
    rho = jnp.broadcast_to(rho_ref[...], (tb, h))
    one_m_alpha = 1.0 - alpha
    one_m_rho = 1.0 - rho
    # The reference adds the recurrent synapse (incl. its bias) only from t >= 1; at the
    # very first global step the spike history is all-zero, so only b_hh needs removing.
    b_hh_first = jnp.where(c == 0, jnp.zeros_like(b_hh), b_hh)

    u = u_sc[...]
    eta = eta_sc[...]
    h_flat = h_hist[...]                  # [tb, t_max*h] shift register, slot d = h_{t-1-d}

    for step in range(chunk):             # fully unrolled, static indices only
        # recurrent synapse: one K-stacked matmul over all delays
        hh = jnp.dot(h_flat, whh_ref[...], preferred_element_type=jnp.float32,
                     precision=prec)
        syn = ff[step * tb:(step + 1) * tb] + hh + (b_hh_first if step == 0 else b_hh)

        # AdaptiveLIF neuron (all state / elementwise math stays in f32)
        u = u * alpha + one_m_alpha * RM * syn
        v_th = B0 + BETA * eta
        spk = (u - v_th > 0.0)
        spikes = spk.astype(jnp.float32)                 # Heaviside fwd of the surrogate
        u = u - spikes * (eta * BETA + B0)
        eta = rho * eta + one_m_rho * spikes

        # shift the spike history: new slot 0 = h_t, drop slot t_max-1 (lane-aligned copy)
        spk_mm = spk.astype(h_flat.dtype)
        if t_max > 1:
            h_flat = jnp.concatenate([spk_mm, h_flat[:, :(t_max - 1) * h]], axis=1)
        else:
            h_flat = spk_mm
        out_ref[step] = spikes.astype(out_ref.dtype)

    u_sc[...] = u
    eta_sc[...] = eta
    h_hist[...] = h_flat


def delayed_recurrent_block_forward(x_seq, params, *, chunk=8, batch_block=None,
                                    out_dtype=jnp.float32, vmem_limit_bytes=None):
    """x_seq: [T, B, in] -> spikes: [T, B, h] (time-major).

    params = prep_kernel_params(raw):
        (W_in_d [t_max,in,h], b_in [1,h], W_hh_stack [t_max*h,h], b_hh [1,h],
         alpha [1,h], rho [1,h])
    For best MXU utilization choose chunk*batch_block >= 256; on v7x keep
    batch_block <= B/2 so both TensorCores get an independent batch block.
    """
    T, B, nin = x_seq.shape
    W_in_d, b_in, W_hh_stack, b_hh, alpha, rho = params
    t_max, nin_w, h = W_in_d.shape
    assert nin_w == nin and W_hh_stack.shape == (t_max * h, h)
    if batch_block is None:
        batch_block = B if B < 16 else B // 2          # give v7x's 2nd core a block
    assert T % chunk == 0 and B % batch_block == 0
    assert chunk >= t_max - 1, "chunk must cover the carried delay tail"
    nb, nc = B // batch_block, T // chunk

    grid_spec = pltpu.PrefetchScalarGridSpec(
        num_scalar_prefetch=0,
        grid=(nb, nc),                          # (parallel batch blocks, sequential time)
        in_specs=[
            pl.BlockSpec((chunk, batch_block, nin), lambda b, c: (c, b, 0)),   # x chunk
            pl.BlockSpec((t_max, nin, h), lambda b, c: (0, 0, 0)),             # W_in_d
            pl.BlockSpec((1, h), lambda b, c: (0, 0)),                         # b_in
            pl.BlockSpec((t_max * h, h), lambda b, c: (0, 0)),                 # W_hh stack
            pl.BlockSpec((1, h), lambda b, c: (0, 0)),                         # b_hh
            pl.BlockSpec((1, h), lambda b, c: (0, 0)),                         # alpha
            pl.BlockSpec((1, h), lambda b, c: (0, 0)),                         # rho
        ],
        out_specs=pl.BlockSpec((chunk, batch_block, h), lambda b, c: (c, b, 0)),
        scratch_shapes=[
            pltpu.VMEM((max(t_max - 1, 1), batch_block, nin), x_seq.dtype),  # x tail
            pltpu.VMEM((batch_block, t_max * h), W_hh_stack.dtype),          # spike history
            pltpu.VMEM((batch_block, h), jnp.float32),                       # membrane u
            pltpu.VMEM((batch_block, h), jnp.float32),                       # adaptation eta
        ],
    )
    cparams = dict(dimension_semantics=("parallel", "arbitrary"))
    if vmem_limit_bytes is not None:
        cparams["vmem_limit_bytes"] = vmem_limit_bytes
    return pl.pallas_call(
        _drb_kernel,
        out_shape=jax.ShapeDtypeStruct((T, B, h), out_dtype),
        grid_spec=grid_spec,
        compiler_params=pltpu.CompilerParams(**cparams),
    )(x_seq, W_in_d, b_in, W_hh_stack, b_hh, alpha, rho)


# --------------------------------------------------------------------------------------
# parameter construction / reference
# --------------------------------------------------------------------------------------
def _quantize(x, scale):
    # Test-data quantization: keeps every synaptic product / partial sum exactly
    # representable (in bf16 operands and f32 accumulators), so MXU / NumPy summation
    # orders give bit-identical currents and the thresholded recurrence cannot flip.
    return jnp.round(x * scale) / scale


def init_raw_params(key, in_size, h_size, t_max, sparsity, *, zero_whh=True):
    ks = jax.random.split(key, 8)
    pct = 100.0 * (1.0 - sparsity)

    # sparse_in: nn.Linear default init ~ U(-1/sqrt(in), 1/sqrt(in))
    bi = 1.0 / np.sqrt(in_size)
    W_in = _quantize(jax.random.uniform(ks[0], (h_size, in_size), jnp.float32, -bi, bi), 1024.0)
    b_in = _quantize(jax.random.uniform(ks[1], (h_size,), jnp.float32, -bi, bi), 1024.0)
    mask_in = (jnp.abs(W_in) >= jnp.percentile(jnp.abs(W_in), pct)).astype(jnp.float32)
    Win_eff = (W_in * mask_in).T                              # [in, h]
    delay_in = jax.random.randint(ks[2], (in_size, h_size), 0, t_max)
    DW_in = (delay_in[None] == jnp.arange(t_max)[:, None, None]).astype(jnp.float32)

    # sparse_hh: mask from the pre-zero Linear init; the module zeroes the weight.
    # zero_whh=False keeps a nonzero weight so the recurrent delay path is exercised.
    bh = 1.0 / np.sqrt(h_size)
    W_hh0 = _quantize(jax.random.uniform(ks[3], (h_size, h_size), jnp.float32, -bh, bh), 1024.0)
    mask_hh = (jnp.abs(W_hh0) >= jnp.percentile(jnp.abs(W_hh0), pct)).astype(jnp.float32)
    W_hh = jnp.zeros_like(W_hh0) if zero_whh else W_hh0
    Whh_eff = (W_hh * mask_hh).T                              # [h, h]
    b_hh = _quantize(jax.random.uniform(ks[4], (h_size,), jnp.float32, -bh, bh), 1024.0)
    delay_hh = jax.random.randint(ks[5], (h_size, h_size), 0, t_max)
    DW_hh = (delay_hh[None] == jnp.arange(t_max)[:, None, None]).astype(jnp.float32)

    # AdaptiveLIF: tau_m ~ N(200, 25), tau_adp ~ N(20, 5)
    tau_m = 200.0 + 25.0 * jax.random.normal(ks[6], (h_size,), jnp.float32)
    tau_adp = 20.0 + 5.0 * jax.random.normal(ks[7], (h_size,), jnp.float32)
    alpha = jnp.exp(-DT / tau_m).reshape(1, h_size)
    rho = jnp.exp(-DT / tau_adp).reshape(1, h_size)

    return (DW_in, Win_eff, b_in.reshape(1, h_size),
            DW_hh, Whh_eff, b_hh.reshape(1, h_size), alpha, rho)


def prep_kernel_params(raw, dtype=jnp.bfloat16):
    """Precompute per-delay masked weights; K-stack the recurrent ones.

    dtype=jnp.bfloat16 is exact for quantized (k/1024) weights & 0/1 spikes; use
    dtype=jnp.float32 for unquantized production weights (kernel then uses HIGHEST).
    """
    DW_in, Win_eff, b_in, DW_hh, Whh_eff, b_hh, alpha, rho = raw
    t_max, _, h = DW_in.shape[0], DW_in.shape[1], DW_in.shape[2]
    W_in_d = (DW_in * Win_eff[None]).astype(dtype)                     # [t_max, in, h]
    W_hh_stack = (DW_hh * Whh_eff[None]).reshape(t_max * h, h).astype(dtype)
    return (W_in_d, b_in, W_hh_stack, b_hh, alpha, rho)


def reference_forward(x_seq, raw):
    """Pure NumPy re-implementation of the original buffer-scatter PyTorch forward."""
    DW_in, Win_eff, b_in, DW_hh, Whh_eff, b_hh, alpha, rho = [
        np.asarray(p, np.float32) for p in raw]
    x_seq = np.asarray(x_seq, np.float32)
    T, B, nin = x_seq.shape
    h = Win_eff.shape[1]
    t_max = DW_in.shape[0]
    buf_in = np.zeros((T, B, nin, h), np.float32)
    buf_hh = np.zeros((T, B, h, h), np.float32)
    u = np.zeros((B, h), np.float32)
    eta = np.zeros((B, h), np.float32)
    h_last = None
    outs = []
    for t in range(T):
        xt = x_seq[t]
        for i in range(t_max):
            if t + i < T:
                buf_in[t + i] += xt[:, :, None] * DW_in[i][None]
        out = (buf_in[t] * Win_eff[None]).sum(1) + b_in
        if h_last is not None:
            cur = t - 1
            for i in range(t_max):
                if cur + i < T:
                    buf_hh[cur + i] += h_last[:, :, None] * DW_hh[i][None]
            out = out + ((buf_hh[cur] * Whh_eff[None]).sum(1) + b_hh)
        u = u * alpha + (1.0 - alpha) * RM * out
        v_th = B0 + BETA * eta
        spk = (u - v_th > 0.0).astype(np.float32)
        u = u - spk * (eta * BETA + B0)
        eta = rho * eta + (1.0 - rho) * spk
        h_last = spk
        outs.append(spk)
    return np.stack(outs)


if __name__ == "__main__":
    T, t_max = 16, 4
    B, in_size, h_size = 16, 128, 128    # lane-dense h, B gives 2 parallel batch blocks
    sparsity = 0.3
    CHUNK = 8                            # 2 time chunks -> exercises cross-chunk state

    key = jax.random.PRNGKey(0)
    kx, kp = jax.random.split(key)
    # scale x so the adaptive-LIF neurons actually spike within T=16 steps; quantize so
    # the kernel-vs-reference comparison is exact regardless of summation order / bf16.
    x_seq = 4.0 * _quantize(jax.random.normal(kx, (T, B, in_size), jnp.float32), 8.0)

    fwd = jax.jit(functools.partial(delayed_recurrent_block_forward, chunk=CHUNK))

    # Case 1: faithful module init (W_hh zeroed, as in delayed_recurrent_block.__init__)
    # Case 2: nonzero W_hh so the delayed recurrent (hh) path is genuinely exercised.
    for zero_whh in (True, False):
        raw = init_raw_params(kp, in_size, h_size, t_max, sparsity, zero_whh=zero_whh)
        spikes = jax.block_until_ready(fwd(x_seq, prep_kernel_params(raw)))
        ref = reference_forward(x_seq, raw)
        assert spikes.shape == (T, B, h_size)
        assert np.array_equal(np.asarray(spikes, np.float32), ref), \
            f"mismatch vs reference (zero_whh={zero_whh})"

    print("KERNEL_OK")
</pallas_src>

<mosaic_0001>
module attributes {stable_mosaic.version = 11 : i64} {
  func.func @_drb_kernel(%arg0: i32, %arg1: i32, %arg2: memref<8x8x128xf32, #tpu.memory_space<vmem>>, %arg3: memref<4x128x128xbf16, #tpu.memory_space<vmem>>, %arg4: memref<1x128xf32, #tpu.memory_space<vmem>>, %arg5: memref<512x128xbf16, #tpu.memory_space<vmem>>, %arg6: memref<1x128xf32, #tpu.memory_space<vmem>>, %arg7: memref<1x128xf32, #tpu.memory_space<vmem>>, %arg8: memref<1x128xf32, #tpu.memory_space<vmem>>, %arg9: memref<8x8x128xf32, #tpu.memory_space<vmem>>, %arg10: memref<3x8x128xf32, #tpu.memory_space<vmem>>, %arg11: memref<8x512xbf16, #tpu.memory_space<vmem>>, %arg12: memref<8x128xf32, #tpu.memory_space<vmem>>, %arg13: memref<8x128xf32, #tpu.memory_space<vmem>>) attributes {dimension_semantics = [#tpu.dimension_semantics<parallel>, #tpu.dimension_semantics<arbitrary>], iteration_bounds = array<i64: 2, 2>, scalar_prefetch = 0 : i64, scratch_operands = 4 : i64, tpu.core_type = #tpu.core_type<tc>, window_params = [{transform_indices = @transform_0, window_bounds = array<i64: 8, 8, 128>}, {pipeline_mode = #tpu.pipeline_mode<synchronous>, transform_indices = @transform_1, window_bounds = array<i64: 4, 128, 128>}, {pipeline_mode = #tpu.pipeline_mode<synchronous>, transform_indices = @transform_2, window_bounds = array<i64: 1, 128>}, {pipeline_mode = #tpu.pipeline_mode<synchronous>, transform_indices = @transform_3, window_bounds = array<i64: 512, 128>}, {pipeline_mode = #tpu.pipeline_mode<synchronous>, transform_indices = @transform_4, window_bounds = array<i64: 1, 128>}, {pipeline_mode = #tpu.pipeline_mode<synchronous>, transform_indices = @transform_5, window_bounds = array<i64: 1, 128>}, {pipeline_mode = #tpu.pipeline_mode<synchronous>, transform_indices = @transform_6, window_bounds = array<i64: 1, 128>}, {transform_indices = @transform_7, window_bounds = array<i64: 8, 8, 128>}]} {
    %c0_i32 = arith.constant 0 : i32
    %0 = arith.cmpi eq, %arg1, %c0_i32 : i32
    %1 = arith.extui %0 : i1 to i32
    %c0_i32_0 = arith.constant 0 : i32
    %2 = arith.cmpi ne, %1, %c0_i32_0 : i32
    scf.if %2 {
      %cst_140 = arith.constant 0.000000e+00 : f32
      %349 = vector.broadcast %cst_140 : f32 to vector<3x8x128xf32>
      %c0_141 = arith.constant 0 : index
      %c0_142 = arith.constant 0 : index
      %c0_143 = arith.constant 0 : index
      %350 = vector.load %arg10[%c0_141, %c0_142, %c0_143] : memref<3x8x128xf32, #tpu.memory_space<vmem>>, vector<3x8x128xf32>
      tpu.vector_store %arg10[%c0_141, %c0_142, %c0_143], %349 {strides = array<i32>} : memref<3x8x128xf32, #tpu.memory_space<vmem>>, vector<3x8x128xf32>,
      %cst_144 = arith.constant 0.000000e+00 : bf16
      %351 = vector.broadcast %cst_144 : bf16 to vector<8x512xbf16>
      %c0_145 = arith.constant 0 : index
      %c0_146 = arith.constant 0 : index
      %352 = vector.load %arg11[%c0_145, %c0_146] : memref<8x512xbf16, #tpu.memory_space<vmem>>, vector<8x512xbf16>
      tpu.vector_store %arg11[%c0_145, %c0_146], %351 {strides = array<i32>} : memref<8x512xbf16, #tpu.memory_space<vmem>>, vector<8x512xbf16>,
      %cst_147 = arith.constant 0.000000e+00 : f32
      %353 = vector.broadcast %cst_147 : f32 to vector<8x128xf32>
      %c0_148 = arith.constant 0 : index
      %c0_149 = arith.constant 0 : index
      %354 = vector.load %arg12[%c0_148, %c0_149] : memref<8x128xf32, #tpu.memory_space<vmem>>, vector<8x128xf32>
      tpu.vector_store %arg12[%c0_148, %c0_149], %353 {strides = array<i32>} : memref<8x128xf32, #tpu.memory_space<vmem>>, vector<8x128xf32>,
      %cst_150 = arith.constant 0.000000e+00 : f32
      %355 = vector.broadcast %cst_150 : f32 to vector<8x128xf32>
      %c0_151 = arith.constant 0 : index
      %c0_152 = arith.constant 0 : index
      %356 = vector.load %arg13[%c0_151, %c0_152] : memref<8x128xf32, #tpu.memory_space<vmem>>, vector<8x128xf32>
      tpu.vector_store %arg13[%c0_151, %c0_152], %355 {strides = array<i32>} : memref<8x128xf32, #tpu.memory_space<vmem>>, vector<8x128xf32>,
    } else {
    }
    %c0 = arith.constant 0 : index
    %c0_1 = arith.constant 0 : index
    %c0_2 = arith.constant 0 : index
    %3 = vector.load %arg10[%c0, %c0_1, %c0_2] : memref<3x8x128xf32, #tpu.memory_space<vmem>>, vector<3x8x128xf32>
    %c0_3 = arith.constant 0 : index
    %c0_4 = arith.constant 0 : index
    %c0_5 = arith.constant 0 : index
    %4 = vector.load %arg2[%c0_3, %c0_4, %c0_5] : memref<8x8x128xf32, #tpu.memory_space<vmem>>, vector<8x8x128xf32>
    %5 = tpu.concatenate %3, %4 in 0 : vector<3x8x128xf32>, vector<8x8x128xf32> -> vector<11x8x128xf32>
    %c0_6 = arith.constant 0 : index
    %c0_7 = arith.constant 0 : index
    %6 = vector.load %arg4[%c0_6, %c0_7] : memref<1x128xf32, #tpu.memory_space<vmem>>, vector<1x128xf32>
    %7 = vector.shape_cast %6 : vector<1x128xf32> to vector<1x128xf32>
    %8 = vector.broadcast %7 : vector<1x128xf32> to vector<64x128xf32>
    %9 = vector.extract_strided_slice %5 {offsets = [3, 0, 0], sizes = [8, 8, 128], strides = [1, 1, 1]} : vector<11x8x128xf32> to vector<8x8x128xf32>
    %10 = vector.shape_cast %9 : vector<8x8x128xf32> to vector<64x128xf32>
    %11 = arith.truncf %10 : vector<64x128xf32> to vector<64x128xbf16>
    %c0_8 = arith.constant 0 : index
    %c0_9 = arith.constant 0 : index
    %c0_10 = arith.constant 0 : index
    %12 = vector.load %arg3[%c0_8, %c0_9, %c0_10] : memref<4x128x128xbf16, #tpu.memory_space<vmem>>, vector<1x128x128xbf16>
    %13 = vector.shape_cast %12 : vector<1x128x128xbf16> to vector<128x128xbf16>
    %cst = arith.constant dense<0.000000e+00> : vector<64x128xf32>
    %14 = tpu.matmul %11, %13, %cst {dimension_numbers = #tpu.dot_dimension_numbers<[1], [0], [0], [1], [0, 0, 1, 1], [], []>} : vector<64x128xbf16>, vector<128x128xbf16>, vector<64x128xf32> -> vector<64x128xf32>
    %15 = arith.addf %8, %14 : vector<64x128xf32>
    %16 = vector.extract_strided_slice %5 {offsets = [2, 0, 0], sizes = [8, 8, 128], strides = [1, 1, 1]} : vector<11x8x128xf32> to vector<8x8x128xf32>
    %17 = vector.shape_cast %16 : vector<8x8x128xf32> to vector<64x128xf32>
    %18 = arith.truncf %17 : vector<64x128xf32> to vector<64x128xbf16>
    %c1 = arith.constant 1 : index
    %c0_11 = arith.constant 0 : index
    %c0_12 = arith.constant 0 : index
    %19 = vector.load %arg3[%c1, %c0_11, %c0_12] : memref<4x128x128xbf16, #tpu.memory_space<vmem>>, vector<1x128x128xbf16>
    %20 = vector.shape_cast %19 : vector<1x128x128xbf16> to vector<128x128xbf16>
    %cst_13 = arith.constant dense<0.000000e+00> : vector<64x128xf32>
    %21 = tpu.matmul %18, %20, %cst_13 {dimension_numbers = #tpu.dot_dimension_numbers<[1], [0], [0], [1], [0, 0, 1, 1], [], []>} : vector<64x128xbf16>, vector<128x128xbf16>, vector<64x128xf32> -> vector<64x128xf32>
    %22 = arith.addf %15, %21 : vector<64x128xf32>
    %23 = vector.extract_strided_slice %5 {offsets = [1, 0, 0], sizes = [8, 8, 128], strides = [1, 1, 1]} : vector<11x8x128xf32> to vector<8x8x128xf32>
    %24 = vector.shape_cast %23 : vector<8x8x128xf32> to vector<64x128xf32>
    %25 = arith.truncf %24 : vector<64x128xf32> to vector<64x128xbf16>
    %c2 = arith.constant 2 : index
    %c0_14 = arith.constant 0 : index
    %c0_15 = arith.constant 0 : index
    %26 = vector.load %arg3[%c2, %c0_14, %c0_15] : memref<4x128x128xbf16, #tpu.memory_space<vmem>>, vector<1x128x128xbf16>
    %27 = vector.shape_cast %26 : vector<1x128x128xbf16> to vector<128x128xbf16>
    %cst_16 = arith.constant dense<0.000000e+00> : vector<64x128xf32>
    %28 = tpu.matmul %25, %27, %cst_16 {dimension_numbers = #tpu.dot_dimension_numbers<[1], [0], [0], [1], [0, 0, 1, 1], [], []>} : vector<64x128xbf16>, vector<128x128xbf16>, vector<64x128xf32> -> vector<64x128xf32>
    %29 = arith.addf %22, %28 : vector<64x128xf32>
    %30 = vector.extract_strided_slice %5 {offsets = [0, 0, 0], sizes = [8, 8, 128], strides = [1, 1, 1]} : vector<11x8x128xf32> to vector<8x8x128xf32>
    %31 = vector.shape_cast %30 : vector<8x8x128xf32> to vector<64x128xf32>
    %32 = arith.truncf %31 : vector<64x128xf32> to vector<64x128xbf16>
    %c3 = arith.constant 3 : index
    %c0_17 = arith.constant 0 : index
    %c0_18 = arith.constant 0 : index
    %33 = vector.load %arg3[%c3, %c0_17, %c0_18] : memref<4x128x128xbf16, #tpu.memory_space<vmem>>, vector<1x128x128xbf16>
    %34 = vector.shape_cast %33 : vector<1x128x128xbf16> to vector<128x128xbf16>
    %cst_19 = arith.constant dense<0.000000e+00> : vector<64x128xf32>
    %35 = tpu.matmul %32, %34, %cst_19 {dimension_numbers = #tpu.dot_dimension_numbers<[1], [0], [0], [1], [0, 0, 1, 1], [], []>} : vector<64x128xbf16>, vector<128x128xbf16>, vector<64x128xf32> -> vector<64x128xf32>
    %36 = arith.addf %29, %35 : vector<64x128xf32>
    %c5 = arith.constant 5 : index
    %c0_20 = arith.constant 0 : index
    %c0_21 = arith.constant 0 : index
    %37 = vector.load %arg2[%c5, %c0_20, %c0_21] : memref<8x8x128xf32, #tpu.memory_space<vmem>>, vector<3x8x128xf32>
    %c0_22 = arith.constant 0 : index
    %c0_23 = arith.constant 0 : index
    %c0_24 = arith.constant 0 : index
    %38 = vector.load %arg10[%c0_22, %c0_23, %c0_24] : memref<3x8x128xf32, #tpu.memory_space<vmem>>, vector<3x8x128xf32>
    tpu.vector_store %arg10[%c0_22, %c0_23, %c0_24], %37 {strides = array<i32>} : memref<3x8x128xf32, #tpu.memory_space<vmem>>, vector<3x8x128xf32>,
    %c0_25 = arith.constant 0 : index
    %c0_26 = arith.constant 0 : index
    %39 = vector.load %arg6[%c0_25, %c0_26] : memref<1x128xf32, #tpu.memory_space<vmem>>, vector<1x128xf32>
    %40 = vector.shape_cast %39 : vector<1x128xf32> to vector<1x128xf32>
    %41 = vector.broadcast %40 : vector<1x128xf32> to vector<8x128xf32>
    %c0_27 = arith.constant 0 : index
    %c0_28 = arith.constant 0 : index
    %42 = vector.load %arg7[%c0_27, %c0_28] : memref<1x128xf32, #tpu.memory_space<vmem>>, vector<1x128xf32>
    %43 = vector.shape_cast %42 : vector<1x128xf32> to vector<1x128xf32>
    %44 = vector.broadcast %43 : vector<1x128xf32> to vector<8x128xf32>
    %c0_29 = arith.constant 0 : index
    %c0_30 = arith.constant 0 : index
    %45 = vector.load %arg8[%c0_29, %c0_30] : memref<1x128xf32, #tpu.memory_space<vmem>>, vector<1x128xf32>
    %46 = vector.shape_cast %45 : vector<1x128xf32> to vector<1x128xf32>
    %47 = vector.broadcast %46 : vector<1x128xf32> to vector<8x128xf32>
    %cst_31 = arith.constant 1.000000e+00 : f32
    %48 = vector.broadcast %cst_31 : f32 to vector<8x128xf32>
    %49 = arith.subf %48, %44 : vector<8x128xf32>
    %cst_32 = arith.constant 1.000000e+00 : f32
    %50 = vector.broadcast %cst_32 : f32 to vector<8x128xf32>
    %51 = arith.subf %50, %47 : vector<8x128xf32>
    %c0_i32_33 = arith.constant 0 : i32
    %52 = arith.cmpi eq, %arg1, %c0_i32_33 : i32
    %cst_34 = arith.constant 0.000000e+00 : f32
    %53 = vector.broadcast %cst_34 : f32 to vector<8x128xf32>
    %54 = arith.select %52, %53, %41 : vector<8x128xf32>
    %c0_35 = arith.constant 0 : index
    %c0_36 = arith.constant 0 : index
    %55 = vector.load %arg12[%c0_35, %c0_36] : memref<8x128xf32, #tpu.memory_space<vmem>>, vector<8x128xf32>
    %c0_37 = arith.constant 0 : index
    %c0_38 = arith.constant 0 : index
    %56 = vector.load %arg13[%c0_37, %c0_38] : memref<8x128xf32, #tpu.memory_space<vmem>>, vector<8x128xf32>
    %c0_39 = arith.constant 0 : index
    %c0_40 = arith.constant 0 : index
    %57 = vector.load %arg11[%c0_39, %c0_40] : memref<8x512xbf16, #tpu.memory_space<vmem>>, vector<8x512xbf16>
    %c0_41 = arith.constant 0 : index
    %c0_42 = arith.constant 0 : index
    %58 = vector.load %arg5[%c0_41, %c0_42] : memref<512x128xbf16, #tpu.memory_space<vmem>>, vector<512x128xbf16>
    %cst_43 = arith.constant dense<0.000000e+00> : vector<8x128xf32>
    %59 = tpu.matmul %57, %58, %cst_43 {dimension_numbers = #tpu.dot_dimension_numbers<[1], [0], [0], [1], [0, 0, 1, 1], [], []>} : vector<8x512xbf16>, vector<512x128xbf16>, vector<8x128xf32> -> vector<8x128xf32>
    %60 = vector.extract_strided_slice %36 {offsets = [0, 0], sizes = [8, 128], strides = [1, 1]} : vector<64x128xf32> to vector<8x128xf32>
    %61 = arith.addf %60, %59 : vector<8x128xf32>
    %62 = arith.addf %61, %54 : vector<8x128xf32>
    %63 = arith.mulf %55, %44 : vector<8x128xf32>
    %cst_44 = arith.constant 1.000000e+00 : f32
    %64 = vector.broadcast %cst_44 : f32 to vector<8x128xf32>
    %65 = arith.mulf %49, %64 : vector<8x128xf32>
    %66 = arith.mulf %65, %62 : vector<8x128xf32>
    %67 = arith.addf %63, %66 : vector<8x128xf32>
    %cst_45 = arith.constant 1.800000e+00 : f32
    %68 = vector.broadcast %cst_45 : f32 to vector<8x128xf32>
    %69 = arith.mulf %68, %56 : vector<8x128xf32>
    %cst_46 = arith.constant 0.00999999977 : f32
    %70 = vector.broadcast %cst_46 : f32 to vector<8x128xf32>
    %71 = arith.addf %70, %69 : vector<8x128xf32>
    %72 = arith.subf %67, %71 : vector<8x128xf32>
    %cst_47 = arith.constant 0.000000e+00 : f32
    %73 = vector.broadcast %cst_47 : f32 to vector<8x128xf32>
    %74 = arith.cmpf ogt, %72, %73 : vector<8x128xf32>
    %75 = arith.extui %74 : vector<8x128xi1> to vector<8x128xi32>
    %76 = arith.sitofp %75 : vector<8x128xi32> to vector<8x128xf32>
    %cst_48 = arith.constant 1.800000e+00 : f32
    %77 = vector.broadcast %cst_48 : f32 to vector<8x128xf32>
    %78 = arith.mulf %56, %77 : vector<8x128xf32>
    %cst_49 = arith.constant 0.00999999977 : f32
    %79 = vector.broadcast %cst_49 : f32 to vector<8x128xf32>
    %80 = arith.addf %78, %79 : vector<8x128xf32>
    %81 = arith.mulf %76, %80 : vector<8x128xf32>
    %82 = arith.subf %67, %81 : vector<8x128xf32>
    %83 = arith.mulf %47, %56 : vector<8x128xf32>
    %84 = arith.mulf %51, %76 : vector<8x128xf32>
    %85 = arith.addf %83, %84 : vector<8x128xf32>
    %86 = arith.extui %74 : vector<8x128xi1> to vector<8x128xi32>
    %87 = arith.sitofp %86 : vector<8x128xi32> to vector<8x128xf32>
    %88 = arith.truncf %87 : vector<8x128xf32> to vector<8x128xbf16>
    %89 = vector.extract_strided_slice %57 {offsets = [0, 0], sizes = [8, 384], strides = [1, 1]} : vector<8x512xbf16> to vector<8x384xbf16>
    %90 = tpu.concatenate %88, %89 in 1 : vector<8x128xbf16>, vector<8x384xbf16> -> vector<8x512xbf16>
    %c0_50 = arith.constant 0 : index
    %c0_51 = arith.constant 0 : index
    %c0_52 = arith.constant 0 : index
    %91 = vector.load %arg9[%c0_50, %c0_51, %c0_52] : memref<8x8x128xf32, #tpu.memory_space<vmem>>, vector<1x8x128xf32>
    %92 = vector.shape_cast %91 : vector<1x8x128xf32> to vector<8x128xf32>
    %93 = vector.shape_cast %76 : vector<8x128xf32> to vector<1x8x128xf32>
    tpu.vector_store %arg9[%c0_50, %c0_51, %c0_52], %93 {strides = array<i32>} : memref<8x8x128xf32, #tpu.memory_space<vmem>>, vector<1x8x128xf32>,
    %c0_53 = arith.constant 0 : index
    %c0_54 = arith.constant 0 : index
    %94 = vector.load %arg5[%c0_53, %c0_54] : memref<512x128xbf16, #tpu.memory_space<vmem>>, vector<512x128xbf16>
    %cst_55 = arith.constant dense<0.000000e+00> : vector<8x128xf32>
    %95 = tpu.matmul %90, %94, %cst_55 {dimension_numbers = #tpu.dot_dimension_numbers<[1], [0], [0], [1], [0, 0, 1, 1], [], []>} : vector<8x512xbf16>, vector<512x128xbf16>, vector<8x128xf32> -> vector<8x128xf32>
    %96 = vector.extract_strided_slice %36 {offsets = [8, 0], sizes = [8, 128], strides = [1, 1]} : vector<64x128xf32> to vector<8x128xf32>
    %97 = arith.addf %96, %95 : vector<8x128xf32>
    %98 = arith.addf %97, %41 : vector<8x128xf32>
    %99 = arith.mulf %82, %44 : vector<8x128xf32>
    %cst_56 = arith.constant 1.000000e+00 : f32
    %100 = vector.broadcast %cst_56 : f32 to vector<8x128xf32>
    %101 = arith.mulf %49, %100 : vector<8x128xf32>
    %102 = arith.mulf %101, %98 : vector<8x128xf32>
    %103 = arith.addf %99, %102 : vector<8x128xf32>
    %cst_57 = arith.constant 1.800000e+00 : f32
    %104 = vector.broadcast %cst_57 : f32 to vector<8x128xf32>
    %105 = arith.mulf %104, %85 : vector<8x128xf32>
    %cst_58 = arith.constant 0.00999999977 : f32
    %106 = vector.broadcast %cst_58 : f32 to vector<8x128xf32>
    %107 = arith.addf %106, %105 : vector<8x128xf32>
    %108 = arith.subf %103, %107 : vector<8x128xf32>
    %cst_59 = arith.constant 0.000000e+00 : f32
    %109 = vector.broadcast %cst_59 : f32 to vector<8x128xf32>
    %110 = arith.cmpf ogt, %108, %109 : vector<8x128xf32>
    %111 = arith.extui %110 : vector<8x128xi1> to vector<8x128xi32>
    %112 = arith.sitofp %111 : vector<8x128xi32> to vector<8x128xf32>
    %cst_60 = arith.constant 1.800000e+00 : f32
    %113 = vector.broadcast %cst_60 : f32 to vector<8x128xf32>
    %114 = arith.mulf %85, %113 : vector<8x128xf32>
    %cst_61 = arith.constant 0.00999999977 : f32
    %115 = vector.broadcast %cst_61 : f32 to vector<8x128xf32>
    %116 = arith.addf %114, %115 : vector<8x128xf32>
    %117 = arith.mulf %112, %116 : vector<8x128xf32>
    %118 = arith.subf %103, %117 : vector<8x128xf32>
    %119 = arith.mulf %47, %85 : vector<8x128xf32>
    %120 = arith.mulf %51, %112 : vector<8x128xf32>
    %121 = arith.addf %119, %120 : vector<8x128xf32>
    %122 = arith.extui %110 : vector<8x128xi1> to vector<8x128xi32>
    %123 = arith.sitofp %122 : vector<8x128xi32> to vector<8x128xf32>
    %124 = arith.truncf %123 : vector<8x128xf32> to vector<8x128xbf16>
    %125 = vector.extract_strided_slice %90 {offsets = [0, 0], sizes = [8, 384], strides = [1, 1]} : vector<8x512xbf16> to vector<8x384xbf16>
    %126 = tpu.concatenate %124, %125 in 1 : vector<8x128xbf16>, vector<8x384xbf16> -> vector<8x512xbf16>
    %c1_62 = arith.constant 1 : index
    %c0_63 = arith.constant 0 : index
    %c0_64 = arith.constant 0 : index
    %127 = vector.load %arg9[%c1_62, %c0_63, %c0_64] : memref<8x8x128xf32, #tpu.memory_space<vmem>>, vector<1x8x128xf32>
    %128 = vector.shape_cast %127 : vector<1x8x128xf32> to vector<8x128xf32>
    %129 = vector.shape_cast %112 : vector<8x128xf32> to vector<1x8x128xf32>
    tpu.vector_store %arg9[%c1_62, %c0_63, %c0_64], %129 {strides = array<i32>} : memref<8x8x128xf32, #tpu.memory_space<vmem>>, vector<1x8x128xf32>,
    %c0_65 = arith.constant 0 : index
    %c0_66 = arith.constant 0 : index
    %130 = vector.load %arg5[%c0_65, %c0_66] : memref<512x128xbf16, #tpu.memory_space<vmem>>, vector<512x128xbf16>
    %cst_67 = arith.constant dense<0.000000e+00> : vector<8x128xf32>
    %131 = tpu.matmul %126, %130, %cst_67 {dimension_numbers = #tpu.dot_dimension_numbers<[1], [0], [0], [1], [0, 0, 1, 1], [], []>} : vector<8x512xbf16>, vector<512x128xbf16>, vector<8x128xf32> -> vector<8x128xf32>
    %132 = vector.extract_strided_slice %36 {offsets = [16, 0], sizes = [8, 128], strides = [1, 1]} : vector<64x128xf32> to vector<8x128xf32>
    %133 = arith.addf %132, %131 : vector<8x128xf32>
    %134 = arith.addf %133, %41 : vector<8x128xf32>
    %135 = arith.mulf %118, %44 : vector<8x128xf32>
    %cst_68 = arith.constant 1.000000e+00 : f32
    %136 = vector.broadcast %cst_68 : f32 to vector<8x128xf32>
    %137 = arith.mulf %49, %136 : vector<8x128xf32>
    %138 = arith.mulf %137, %134 : vector<8x128xf32>
    %139 = arith.addf %135, %138 : vector<8x128xf32>
    %cst_69 = arith.constant 1.800000e+00 : f32
    %140 = vector.broadcast %cst_69 : f32 to vector<8x128xf32>
    %141 = arith.mulf %140, %121 : vector<8x128xf32>
    %cst_70 = arith.constant 0.00999999977 : f32
    %142 = vector.broadcast %cst_70 : f32 to vector<8x128xf32>
    %143 = arith.addf %142, %141 : vector<8x128xf32>
    %144 = arith.subf %139, %143 : vector<8x128xf32>
    %cst_71 = arith.constant 0.000000e+00 : f32
    %145 = vector.broadcast %cst_71 : f32 to vector<8x128xf32>
    %146 = arith.cmpf ogt, %144, %145 : vector<8x128xf32>
    %147 = arith.extui %146 : vector<8x128xi1> to vector<8x128xi32>
    %148 = arith.sitofp %147 : vector<8x128xi32> to vector<8x128xf32>
    %cst_72 = arith.constant 1.800000e+00 : f32
    %149 = vector.broadcast %cst_72 : f32 to vector<8x128xf32>
    %150 = arith.mulf %121, %149 : vector<8x128xf32>
    %cst_73 = arith.constant 0.00999999977 : f32
    %151 = vector.broadcast %cst_73 : f32 to vector<8x128xf32>
    %152 = arith.addf %150, %151 : vector<8x128xf32>
    %153 = arith.mulf %148, %152 : vector<8x128xf32>
    %154 = arith.subf %139, %153 : vector<8x128xf32>
    %155 = arith.mulf %47, %121 : vector<8x128xf32>
    %156 = arith.mulf %51, %148 : vector<8x128xf32>
    %157 = arith.addf %155, %156 : vector<8x128xf32>
    %158 = arith.extui %146 : vector<8x128xi1> to vector<8x128xi32>
    %159 = arith.sitofp %158 : vector<8x128xi32> to vector<8x128xf32>
    %160 = arith.truncf %159 : vector<8x128xf32> to vector<8x128xbf16>
    %161 = vector.extract_strided_slice %126 {offsets = [0, 0], sizes = [8, 384], strides = [1, 1]} : vector<8x512xbf16> to vector<8x384xbf16>
    %162 = tpu.concatenate %160, %161 in 1 : vector<8x128xbf16>, vector<8x384xbf16> -> vector<8x512xbf16>
    %c2_74 = arith.constant 2 : index
    %c0_75 = arith.constant 0 : index
    %c0_76 = arith.constant 0 : index
    %163 = vector.load %arg9[%c2_74, %c0_75, %c0_76] : memref<8x8x128xf32, #tpu.memory_space<vmem>>, vector<1x8x128xf32>
    %164 = vector.shape_cast %163 : vector<1x8x128xf32> to vector<8x128xf32>
    %165 = vector.shape_cast %148 : vector<8x128xf32> to vector<1x8x128xf32>
    tpu.vector_store %arg9[%c2_74, %c0_75, %c0_76], %165 {strides = array<i32>} : memref<8x8x128xf32, #tpu.memory_space<vmem>>, vector<1x8x128xf32>,
    %c0_77 = arith.constant 0 : index
    %c0_78 = arith.constant 0 : index
    %166 = vector.load %arg5[%c0_77, %c0_78] : memref<512x128xbf16, #tpu.memory_space<vmem>>, vector<512x128xbf16>
    %cst_79 = arith.constant dense<0.000000e+00> : vector<8x128xf32>
    %167 = tpu.matmul %162, %166, %cst_79 {dimension_numbers = #tpu.dot_dimension_numbers<[1], [0], [0], [1], [0, 0, 1, 1], [], []>} : vector<8x512xbf16>, vector<512x128xbf16>, vector<8x128xf32> -> vector<8x128xf32>
    %168 = vector.extract_strided_slice %36 {offsets = [24, 0], sizes = [8, 128], strides = [1, 1]} : vector<64x128xf32> to vector<8x128xf32>
    %169 = arith.addf %168, %167 : vector<8x128xf32>
    %170 = arith.addf %169, %41 : vector<8x128xf32>
    %171 = arith.mulf %154, %44 : vector<8x128xf32>
    %cst_80 = arith.constant 1.000000e+00 : f32
    %172 = vector.broadcast %cst_80 : f32 to vector<8x128xf32>
    %173 = arith.mulf %49, %172 : vector<8x128xf32>
    %174 = arith.mulf %173, %170 : vector<8x128xf32>
    %175 = arith.addf %171, %174 : vector<8x128xf32>
    %cst_81 = arith.constant 1.800000e+00 : f32
    %176 = vector.broadcast %cst_81 : f32 to vector<8x128xf32>
    %177 = arith.mulf %176, %157 : vector<8x128xf32>
    %cst_82 = arith.constant 0.00999999977 : f32
    %178 = vector.broadcast %cst_82 : f32 to vector<8x128xf32>
    %179 = arith.addf %178, %177 : vector<8x128xf32>
    %180 = arith.subf %175, %179 : vector<8x128xf32>
    %cst_83 = arith.constant 0.000000e+00 : f32
    %181 = vector.broadcast %cst_83 : f32 to vector<8x128xf32>
    %182 = arith.cmpf ogt, %180, %181 : vector<8x128xf32>
    %183 = arith.extui %182 : vector<8x128xi1> to vector<8x128xi32>
    %184 = arith.sitofp %183 : vector<8x128xi32> to vector<8x128xf32>
    %cst_84 = arith.constant 1.800000e+00 : f32
    %185 = vector.broadcast %cst_84 : f32 to vector<8x128xf32>
    %186 = arith.mulf %157, %185 : vector<8x128xf32>
    %cst_85 = arith.constant 0.00999999977 : f32
    %187 = vector.broadcast %cst_85 : f32 to vector<8x128xf32>
    %188 = arith.addf %186, %187 : vector<8x128xf32>
    %189 = arith.mulf %184, %188 : vector<8x128xf32>
    %190 = arith.subf %175, %189 : vector<8x128xf32>
    %191 = arith.mulf %47, %157 : vector<8x128xf32>
    %192 = arith.mulf %51, %184 : vector<8x128xf32>
    %193 = arith.addf %191, %192 : vector<8x128xf32>
    %194 = arith.extui %182 : vector<8x128xi1> to vector<8x128xi32>
    %195 = arith.sitofp %194 : vector<8x128xi32> to vector<8x128xf32>
    %196 = arith.truncf %195 : vector<8x128xf32> to vector<8x128xbf16>
    %197 = vector.extract_strided_slice %162 {offsets = [0, 0], sizes = [8, 384], strides = [1, 1]} : vector<8x512xbf16> to vector<8x384xbf16>
    %198 = tpu.concatenate %196, %197 in 1 : vector<8x128xbf16>, vector<8x384xbf16> -> vector<8x512xbf16>
    %c3_86 = arith.constant 3 : index
    %c0_87 = arith.constant 0 : index
    %c0_88 = arith.constant 0 : index
    %199 = vector.load %arg9[%c3_86, %c0_87, %c0_88] : memref<8x8x128xf32, #tpu.memory_space<vmem>>, vector<1x8x128xf32>
    %200 = vector.shape_cast %199 : vector<1x8x128xf32> to vector<8x128xf32>
    %201 = vector.shape_cast %184 : vector<8x128xf32> to vector<1x8x128xf32>
    tpu.vector_store %arg9[%c3_86, %c0_87, %c0_88], %201 {strides = array<i32>} : memref<8x8x128xf32, #tpu.memory_space<vmem>>, vector<1x8x128xf32>,
    %c0_89 = arith.constant 0 : index
    %c0_90 = arith.constant 0 : index
    %202 = vector.load %arg5[%c0_89, %c0_90] : memref<512x128xbf16, #tpu.memory_space<vmem>>, vector<512x128xbf16>
    %cst_91 = arith.constant dense<0.000000e+00> : vector<8x128xf32>
    %203 = tpu.matmul %198, %202, %cst_91 {dimension_numbers = #tpu.dot_dimension_numbers<[1], [0], [0], [1], [0, 0, 1, 1], [], []>} : vector<8x512xbf16>, vector<512x128xbf16>, vector<8x128xf32> -> vector<8x128xf32>
    %204 = vector.extract_strided_slice %36 {offsets = [32, 0], sizes = [8, 128], strides = [1, 1]} : vector<64x128xf32> to vector<8x128xf32>
    %205 = arith.addf %204, %203 : vector<8x128xf32>
    %206 = arith.addf %205, %41 : vector<8x128xf32>
    %207 = arith.mulf %190, %44 : vector<8x128xf32>
    %cst_92 = arith.constant 1.000000e+00 : f32
    %208 = vector.broadcast %cst_92 : f32 to vector<8x128xf32>
    %209 = arith.mulf %49, %208 : vector<8x128xf32>
    %210 = arith.mulf %209, %206 : vector<8x128xf32>
    %211 = arith.addf %207, %210 : vector<8x128xf32>
    %cst_93 = arith.constant 1.800000e+00 : f32
    %212 = vector.broadcast %cst_93 : f32 to vector<8x128xf32>
    %213 = arith.mulf %212, %193 : vector<8x128xf32>
    %cst_94 = arith.constant 0.00999999977 : f32
    %214 = vector.broadcast %cst_94 : f32 to vector<8x128xf32>
    %215 = arith.addf %214, %213 : vector<8x128xf32>
    %216 = arith.subf %211, %215 : vector<8x128xf32>
    %cst_95 = arith.constant 0.000000e+00 : f32
    %217 = vector.broadcast %cst_95 : f32 to vector<8x128xf32>
    %218 = arith.cmpf ogt, %216, %217 : vector<8x128xf32>
    %219 = arith.extui %218 : vector<8x128xi1> to vector<8x128xi32>
    %220 = arith.sitofp %219 : vector<8x128xi32> to vector<8x128xf32>
    %cst_96 = arith.constant 1.800000e+00 : f32
    %221 = vector.broadcast %cst_96 : f32 to vector<8x128xf32>
    %222 = arith.mulf %193, %221 : vector<8x128xf32>
    %cst_97 = arith.constant 0.00999999977 : f32
    %223 = vector.broadcast %cst_97 : f32 to vector<8x128xf32>
    %224 = arith.addf %222, %223 : vector<8x128xf32>
    %225 = arith.mulf %220, %224 : vector<8x128xf32>
    %226 = arith.subf %211, %225 : vector<8x128xf32>
    %227 = arith.mulf %47, %193 : vector<8x128xf32>
    %228 = arith.mulf %51, %220 : vector<8x128xf32>
    %229 = arith.addf %227, %228 : vector<8x128xf32>
    %230 = arith.extui %218 : vector<8x128xi1> to vector<8x128xi32>
    %231 = arith.sitofp %230 : vector<8x128xi32> to vector<8x128xf32>
    %232 = arith.truncf %231 : vector<8x128xf32> to vector<8x128xbf16>
    %233 = vector.extract_strided_slice %198 {offsets = [0, 0], sizes = [8, 384], strides = [1, 1]} : vector<8x512xbf16> to vector<8x384xbf16>
    %234 = tpu.concatenate %232, %233 in 1 : vector<8x128xbf16>, vector<8x384xbf16> -> vector<8x512xbf16>
    %c4 = arith.constant 4 : index
    %c0_98 = arith.constant 0 : index
    %c0_99 = arith.constant 0 : index
    %235 = vector.load %arg9[%c4, %c0_98, %c0_99] : memref<8x8x128xf32, #tpu.memory_space<vmem>>, vector<1x8x128xf32>
    %236 = vector.shape_cast %235 : vector<1x8x128xf32> to vector<8x128xf32>
    %237 = vector.shape_cast %220 : vector<8x128xf32> to vector<1x8x128xf32>
    tpu.vector_store %arg9[%c4, %c0_98, %c0_99], %237 {strides = array<i32>} : memref<8x8x128xf32, #tpu.memory_space<vmem>>, vector<1x8x128xf32>,
    %c0_100 = arith.constant 0 : index
    %c0_101 = arith.constant 0 : index
    %238 = vector.load %arg5[%c0_100, %c0_101] : memref<512x128xbf16, #tpu.memory_space<vmem>>, vector<512x128xbf16>
    %cst_102 = arith.constant dense<0.000000e+00> : vector<8x128xf32>
    %239 = tpu.matmul %234, %238, %cst_102 {dimension_numbers = #tpu.dot_dimension_numbers<[1], [0], [0], [1], [0, 0, 1, 1], [], []>} : vector<8x512xbf16>, vector<512x128xbf16>, vector<8x128xf32> -> vector<8x128xf32>
    %240 = vector.extract_strided_slice %36 {offsets = [40, 0], sizes = [8, 128], strides = [1, 1]} : vector<64x128xf32> to vector<8x128xf32>
    %241 = arith.addf %240, %239 : vector<8x128xf32>
    %242 = arith.addf %241, %41 : vector<8x128xf32>
    %243 = arith.mulf %226, %44 : vector<8x128xf32>
    %cst_103 = arith.constant 1.000000e+00 : f32
    %244 = vector.broadcast %cst_103 : f32 to vector<8x128xf32>
    %245 = arith.mulf %49, %244 : vector<8x128xf32>
    %246 = arith.mulf %245, %242 : vector<8x128xf32>
    %247 = arith.addf %243, %246 : vector<8x128xf32>
    %cst_104 = arith.constant 1.800000e+00 : f32
    %248 = vector.broadcast %cst_104 : f32 to vector<8x128xf32>
    %249 = arith.mulf %248, %229 : vector<8x128xf32>
    %cst_105 = arith.constant 0.00999999977 : f32
    %250 = vector.broadcast %cst_105 : f32 to vector<8x128xf32>
    %251 = arith.addf %250, %249 : vector<8x128xf32>
    %252 = arith.subf %247, %251 : vector<8x128xf32>
    %cst_106 = arith.constant 0.000000e+00 : f32
    %253 = vector.broadcast %cst_106 : f32 to vector<8x128xf32>
    %254 = arith.cmpf ogt, %252, %253 : vector<8x128xf32>
    %255 = arith.extui %254 : vector<8x128xi1> to vector<8x128xi32>
    %256 = arith.sitofp %255 : vector<8x128xi32> to vector<8x128xf32>
    %cst_107 = arith.constant 1.800000e+00 : f32
    %257 = vector.broadcast %cst_107 : f32 to vector<8x128xf32>
    %258 = arith.mulf %229, %257 : vector<8x128xf32>
    %cst_108 = arith.constant 0.00999999977 : f32
    %259 = vector.broadcast %cst_108 : f32 to vector<8x128xf32>
    %260 = arith.addf %258, %259 : vector<8x128xf32>
    %261 = arith.mulf %256, %260 : vector<8x128xf32>
    %262 = arith.subf %247, %261 : vector<8x128xf32>
    %263 = arith.mulf %47, %229 : vector<8x128xf32>
    %264 = arith.mulf %51, %256 : vector<8x128xf32>
    %265 = arith.addf %263, %264 : vector<8x128xf32>
    %266 = arith.extui %254 : vector<8x128xi1> to vector<8x128xi32>
    %267 = arith.sitofp %266 : vector<8x128xi32> to vector<8x128xf32>
    %268 = arith.truncf %267 : vector<8x128xf32> to vector<8x128xbf16>
    %269 = vector.extract_strided_slice %234 {offsets = [0, 0], sizes = [8, 384], strides = [1, 1]} : vector<8x512xbf16> to vector<8x384xbf16>
    %270 = tpu.concatenate %268, %269 in 1 : vector<8x128xbf16>, vector<8x384xbf16> -> vector<8x512xbf16>
    %c5_109 = arith.constant 5 : index
    %c0_110 = arith.constant 0 : index
    %c0_111 = arith.constant 0 : index
    %271 = vector.load %arg9[%c5_109, %c0_110, %c0_111] : memref<8x8x128xf32, #tpu.memory_space<vmem>>, vector<1x8x128xf32>
    %272 = vector.shape_cast %271 : vector<1x8x128xf32> to vector<8x128xf32>
    %273 = vector.shape_cast %256 : vector<8x128xf32> to vector<1x8x128xf32>
    tpu.vector_store %arg9[%c5_109, %c0_110, %c0_111], %273 {strides = array<i32>} : memref<8x8x128xf32, #tpu.memory_space<vmem>>, vector<1x8x128xf32>,
    %c0_112 = arith.constant 0 : index
    %c0_113 = arith.constant 0 : index
    %274 = vector.load %arg5[%c0_112, %c0_113] : memref<512x128xbf16, #tpu.memory_space<vmem>>, vector<512x128xbf16>
    %cst_114 = arith.constant dense<0.000000e+00> : vector<8x128xf32>
    %275 = tpu.matmul %270, %274, %cst_114 {dimension_numbers = #tpu.dot_dimension_numbers<[1], [0], [0], [1], [0, 0, 1, 1], [], []>} : vector<8x512xbf16>, vector<512x128xbf16>, vector<8x128xf32> -> vector<8x128xf32>
    %276 = vector.extract_strided_slice %36 {offsets = [48, 0], sizes = [8, 128], strides = [1, 1]} : vector<64x128xf32> to vector<8x128xf32>
    %277 = arith.addf %276, %275 : vector<8x128xf32>
    %278 = arith.addf %277, %41 : vector<8x128xf32>
    %279 = arith.mulf %262, %44 : vector<8x128xf32>
    %cst_115 = arith.constant 1.000000e+00 : f32
    %280 = vector.broadcast %cst_115 : f32 to vector<8x128xf32>
    %281 = arith.mulf %49, %280 : vector<8x128xf32>
    %282 = arith.mulf %281, %278 : vector<8x128xf32>
    %283 = arith.addf %279, %282 : vector<8x128xf32>
    %cst_116 = arith.constant 1.800000e+00 : f32
    %284 = vector.broadcast %cst_116 : f32 to vector<8x128xf32>
    %285 = arith.mulf %284, %265 : vector<8x128xf32>
    %cst_117 = arith.constant 0.00999999977 : f32
    %286 = vector.broadcast %cst_117 : f32 to vector<8x128xf32>
    %287 = arith.addf %286, %285 : vector<8x128xf32>
    %288 = arith.subf %283, %287 : vector<8x128xf32>
    %cst_118 = arith.constant 0.000000e+00 : f32
    %289 = vector.broadcast %cst_118 : f32 to vector<8x128xf32>
    %290 = arith.cmpf ogt, %288, %289 : vector<8x128xf32>
    %291 = arith.extui %290 : vector<8x128xi1> to vector<8x128xi32>
    %292 = arith.sitofp %291 : vector<8x128xi32> to vector<8x128xf32>
    %cst_119 = arith.constant 1.800000e+00 : f32
    %293 = vector.broadcast %cst_119 : f32 to vector<8x128xf32>
    %294 = arith.mulf %265, %293 : vector<8x128xf32>
    %cst_120 = arith.constant 0.00999999977 : f32
    %295 = vector.broadcast %cst_120 : f32 to vector<8x128xf32>
    %296 = arith.addf %294, %295 : vector<8x128xf32>
    %297 = arith.mulf %292, %296 : vector<8x128xf32>
    %298 = arith.subf %283, %297 : vector<8x128xf32>
    %299 = arith.mulf %47, %265 : vector<8x128xf32>
    %300 = arith.mulf %51, %292 : vector<8x128xf32>
    %301 = arith.addf %299, %300 : vector<8x128xf32>
    %302 = arith.extui %290 : vector<8x128xi1> to vector<8x128xi32>
    %303 = arith.sitofp %302 : vector<8x128xi32> to vector<8x128xf32>
    %304 = arith.truncf %303 : vector<8x128xf32> to vector<8x128xbf16>
    %305 = vector.extract_strided_slice %270 {offsets = [0, 0], sizes = [8, 384], strides = [1, 1]} : vector<8x512xbf16> to vector<8x384xbf16>
    %306 = tpu.concatenate %304, %305 in 1 : vector<8x128xbf16>, vector<8x384xbf16> -> vector<8x512xbf16>
    %c6 = arith.constant 6 : index
    %c0_121 = arith.constant 0 : index
    %c0_122 = arith.constant 0 : index
    %307 = vector.load %arg9[%c6, %c0_121, %c0_122] : memref<8x8x128xf32, #tpu.memory_space<vmem>>, vector<1x8x128xf32>
    %308 = vector.shape_cast %307 : vector<1x8x128xf32> to vector<8x128xf32>
    %309 = vector.shape_cast %292 : vector<8x128xf32> to vector<1x8x128xf32>
    tpu.vector_store %arg9[%c6, %c0_121, %c0_122], %309 {strides = array<i32>} : memref<8x8x128xf32, #tpu.memory_space<vmem>>, vector<1x8x128xf32>,
    %c0_123 = arith.constant 0 : index
    %c0_124 = arith.constant 0 : index
    %310 = vector.load %arg5[%c0_123, %c0_124] : memref<512x128xbf16, #tpu.memory_space<vmem>>, vector<512x128xbf16>
    %cst_125 = arith.constant dense<0.000000e+00> : vector<8x128xf32>
    %311 = tpu.matmul %306, %310, %cst_125 {dimension_numbers = #tpu.dot_dimension_numbers<[1], [0], [0], [1], [0, 0, 1, 1], [], []>} : vector<8x512xbf16>, vector<512x128xbf16>, vector<8x128xf32> -> vector<8x128xf32>
    %312 = vector.extract_strided_slice %36 {offsets = [56, 0], sizes = [8, 128], strides = [1, 1]} : vector<64x128xf32> to vector<8x128xf32>
    %313 = arith.addf %312, %311 : vector<8x128xf32>
    %314 = arith.addf %313, %41 : vector<8x128xf32>
    %315 = arith.mulf %298, %44 : vector<8x128xf32>
    %cst_126 = arith.constant 1.000000e+00 : f32
    %316 = vector.broadcast %cst_126 : f32 to vector<8x128xf32>
    %317 = arith.mulf %49, %316 : vector<8x128xf32>
    %318 = arith.mulf %317, %314 : vector<8x128xf32>
    %319 = arith.addf %315, %318 : vector<8x128xf32>
    %cst_127 = arith.constant 1.800000e+00 : f32
    %320 = vector.broadcast %cst_127 : f32 to vector<8x128xf32>
    %321 = arith.mulf %320, %301 : vector<8x128xf32>
    %cst_128 = arith.constant 0.00999999977 : f32
    %322 = vector.broadcast %cst_128 : f32 to vector<8x128xf32>
    %323 = arith.addf %322, %321 : vector<8x128xf32>
    %324 = arith.subf %319, %323 : vector<8x128xf32>
    %cst_129 = arith.constant 0.000000e+00 : f32
    %325 = vector.broadcast %cst_129 : f32 to vector<8x128xf32>
    %326 = arith.cmpf ogt, %324, %325 : vector<8x128xf32>
    %327 = arith.extui %326 : vector<8x128xi1> to vector<8x128xi32>
    %328 = arith.sitofp %327 : vector<8x128xi32> to vector<8x128xf32>
    %cst_130 = arith.constant 1.800000e+00 : f32
    %329 = vector.broadcast %cst_130 : f32 to vector<8x128xf32>
    %330 = arith.mulf %301, %329 : vector<8x128xf32>
    %cst_131 = arith.constant 0.00999999977 : f32
    %331 = vector.broadcast %cst_131 : f32 to vector<8x128xf32>
    %332 = arith.addf %330, %331 : vector<8x128xf32>
    %333 = arith.mulf %328, %332 : vector<8x128xf32>
    %334 = arith.subf %319, %333 : vector<8x128xf32>
    %335 = arith.mulf %47, %301 : vector<8x128xf32>
    %336 = arith.mulf %51, %328 : vector<8x128xf32>
    %337 = arith.addf %335, %336 : vector<8x128xf32>
    %338 = arith.extui %326 : vector<8x128xi1> to vector<8x128xi32>
    %339 = arith.sitofp %338 : vector<8x128xi32> to vector<8x128xf32>
    %340 = arith.truncf %339 : vector<8x128xf32> to vector<8x128xbf16>
    %341 = vector.extract_strided_slice %306 {offsets = [0, 0], sizes = [8, 384], strides = [1, 1]} : vector<8x512xbf16> to vector<8x384xbf16>
    %342 = tpu.concatenate %340, %341 in 1 : vector<8x128xbf16>, vector<8x384xbf16> -> vector<8x512xbf16>
    %c7 = arith.constant 7 : index
    %c0_132 = arith.constant 0 : index
    %c0_133 = arith.constant 0 : index
    %343 = vector.load %arg9[%c7, %c0_132, %c0_133] : memref<8x8x128xf32, #tpu.memory_space<vmem>>, vector<1x8x128xf32>
    %344 = vector.shape_cast %343 : vector<1x8x128xf32> to vector<8x128xf32>
    %345 = vector.shape_cast %328 : vector<8x128xf32> to vector<1x8x128xf32>
    tpu.vector_store %arg9[%c7, %c0_132, %c0_133], %345 {strides = array<i32>} : memref<8x8x128xf32, #tpu.memory_space<vmem>>, vector<1x8x128xf32>,
    %c0_134 = arith.constant 0 : index
    %c0_135 = arith.constant 0 : index
    %346 = vector.load %arg12[%c0_134, %c0_135] : memref<8x128xf32, #tpu.memory_space<vmem>>, vector<8x128xf32>
    tpu.vector_store %arg12[%c0_134, %c0_135], %334 {strides = array<i32>} : memref<8x128xf32, #tpu.memory_space<vmem>>, vector<8x128xf32>,
    %c0_136 = arith.constant 0 : index
    %c0_137 = arith.constant 0 : index
    %347 = vector.load %arg13[%c0_136, %c0_137] : memref<8x128xf32, #tpu.memory_space<vmem>>, vector<8x128xf32>
    tpu.vector_store %arg13[%c0_136, %c0_137], %337 {strides = array<i32>} : memref<8x128xf32, #tpu.memory_space<vmem>>, vector<8x128xf32>,
    %c0_138 = arith.constant 0 : index
    %c0_139 = arith.constant 0 : index
    %348 = vector.load %arg11[%c0_138, %c0_139] : memref<8x512xbf16, #tpu.memory_space<vmem>>, vector<8x512xbf16>
    tpu.vector_store %arg11[%c0_138, %c0_139], %342 {strides = array<i32>} : memref<8x512xbf16, #tpu.memory_space<vmem>>, vector<8x512xbf16>,
    return
  }
  func.func @transform_0(%arg0: i32, %arg1: i32) -> (i32, i32, i32) {
    %c0_i32 = arith.constant 0 : i32
    %c0_i32_0 = arith.constant 0 : i32
    return %arg1, %arg0, %c0_i32 : i32, i32, i32
  }
  func.func @transform_1(%arg0: i32, %arg1: i32) -> (i32, i32, i32) {
    %c0_i32 = arith.constant 0 : i32
    %c0_i32_0 = arith.constant 0 : i32
    %c0_i32_1 = arith.constant 0 : i32
    %c0_i32_2 = arith.constant 0 : i32
    return %c0_i32, %c0_i32_0, %c0_i32_1 : i32, i32, i32
  }
  func.func @transform_2(%arg0: i32, %arg1: i32) -> (i32, i32) {
    %c0_i32 = arith.constant 0 : i32
    %c0_i32_0 = arith.constant 0 : i32
    %c0_i32_1 = arith.constant 0 : i32
    return %c0_i32, %c0_i32_0 : i32, i32
  }
  func.func @transform_3(%arg0: i32, %arg1: i32) -> (i32, i32) {
    %c0_i32 = arith.constant 0 : i32
    %c0_i32_0 = arith.constant 0 : i32
    %c0_i32_1 = arith.constant 0 : i32
    return %c0_i32, %c0_i32_0 : i32, i32
  }
  func.func @transform_4(%arg0: i32, %arg1: i32) -> (i32, i32) {
    %c0_i32 = arith.constant 0 : i32
    %c0_i32_0 = arith.constant 0 : i32
    %c0_i32_1 = arith.constant 0 : i32
    return %c0_i32, %c0_i32_0 : i32, i32
  }
  func.func @transform_5(%arg0: i32, %arg1: i32) -> (i32, i32) {
    %c0_i32 = arith.constant 0 : i32
    %c0_i32_0 = arith.constant 0 : i32
    %c0_i32_1 = arith.constant 0 : i32
    return %c0_i32, %c0_i32_0 : i32, i32
  }
  func.func @transform_6(%arg0: i32, %arg1: i32) -> (i32, i32) {
    %c0_i32 = arith.constant 0 : i32
    %c0_i32_0 = arith.constant 0 : i32
    %c0_i32_1 = arith.constant 0 : i32
    return %c0_i32, %c0_i32_0 : i32, i32
  }
  func.func @transform_7(%arg0: i32, %arg1: i32) -> (i32, i32, i32) {
    %c0_i32 = arith.constant 0 : i32
    %c0_i32_0 = arith.constant 0 : i32
    return %arg1, %arg0, %c0_i32 : i32, i32, i32
  }
}

</mosaic_0001>

<llo_original>
// kernel: delayed_recurrent_block_forward.1
$region0: #{delayed_recurrent_block_forward.1}
  #allocation0 [shape = 'u32[]', space=smem, size = 0x4, offset = 0x4, fixed_abs, tag = 'smem constant byte address 0x4 - core index']
  #allocation1 [shape = 'u32[72,128]{1,0:T(1,128)}', space=vmem, size = 0x9000, scoped, tag = 'internal scratch']
  #allocation2 [shape = 'f32[3,8,128]{2,1,0:T(8,128)}', space=vmem, size = 0x3000, scoped, tag = 'scratch operand']
  #allocation3 [shape = 'bf16[8,512]{1,0:T(8,128)(2,1)}', space=vmem, size = 0x2000, scoped, tag = 'scratch operand']
  #allocation4 [shape = 'f32[8,128]{1,0:T(8,128)}', space=vmem, size = 0x1000, scoped, tag = 'scratch operand']
  #allocation5 [shape = 'f32[8,128]{1,0:T(8,128)}', space=vmem, size = 0x1000, scoped, tag = 'scratch operand']
  %s0 = inlined_call_operand.hbm [shape: f32[16,16,128], index: 0, kind: input, shape index: {}]
  %s1 = inlined_call_operand.hbm [shape: bf16[4,128,128], index: 1, kind: input, shape index: {}]
  %s2 = inlined_call_operand.vmem [shape: f32[1,128], index: 2, kind: input, shape index: {}]
  %s3 = inlined_call_operand.hbm [shape: bf16[512,128], index: 3, kind: input, shape index: {}]
  %s4 = inlined_call_operand.vmem [shape: f32[1,128], index: 4, kind: input, shape index: {}]
  %s5 = inlined_call_operand.vmem [shape: f32[1,128], index: 5, kind: input, shape index: {}]
  %s6 = inlined_call_operand.vmem [shape: f32[1,128], index: 6, kind: input, shape index: {}]
  %s7 = inlined_call_operand.hbm [shape: f32[16,16,128], index: 7, kind: output, shape index: {}]
  %s8 = sld [smem:[#allocation0]]
  $region77: #{delayed_recurrent_block_forward.1} parent=0
    _
  %s10 = ssub.s32 1, %s8
  %s11 = scalar_select 0, %s10, %s8
  $region1: #{delayed_recurrent_block_forward.1} parent=0
    #allocation6 [shape = 'u8[65536]{0}', space=vmem, size = 0x10000, scoped, tag = 'input window, operand 0']
    #allocation7 [shape = 's32[2]{0}', space=sflag, size = 0x8, scoped, tag = 'scoped memory for delayed_recurrent_block_forward.1']
    #allocation8 [shape = 's32[2]{0}', space=sflag, size = 0x8, scoped, tag = 'scoped memory for delayed_recurrent_block_forward.1']
    #allocation9 [shape = 'u8[131072]{0}', space=vmem, size = 0x20000, scoped, tag = 'input window, operand 1, single buffered']
    #allocation10 [shape = 's32[1]{0}', space=sflag, size = 0x4, scoped, tag = 'scoped memory for delayed_recurrent_block_forward.1']
    #allocation11 [shape = 'u8[131072]{0}', space=vmem, size = 0x20000, scoped, tag = 'input window, operand 3, single buffered']
    #allocation12 [shape = 'u8[65536]{0}', space=vmem, size = 0x10000, scoped, tag = 'output window, operand 0']
    %12 = vsyncpa [#allocation7], 0
    %s13 = scalar_lea.sflag [#allocation7], 1
    %14 = vsyncpa %s13, 0
    %15 = vsyncpa [#allocation10], 0
    %16 = vsyncpa [#allocation8], 0
    %s17 = scalar_lea.sflag [#allocation8], 1
    %18 = vsyncpa %s17, 0
    loop: start=0, step=1, limit=6
    $region2: #{delayed_recurrent_block_forward.1} parent=1 // loop_pre_header
      _
    $region3: #{delayed_recurrent_block_forward.1} parent=1 // loop_header
      %s20 = sphi 0, %s24
      %p21 = scmp.ge.s32.totalorder %s20, 6
      %s27 = sphi 0, %s39
      %s28 = sphi 0, %s35
      %s29 = sphi 0, %s27
      %s30 = sphi 0, %s28
      %s31 = sphi 0, %s29
      %s32 = sphi 0, %s30
      %s44 = sphi 0, %s46
      %s47 = sphi 0, %s44
      %s48 = sphi 0, %s47
      %s64 = sphi 0, %s48
      %s68 = sphi 0, %s68
      %s70 = sphi 0, %s68
      %s71 = sphi 0, %s70
      %s85 = sphi 0, %s71
      %s89 = sphi 0, %s89
      %s91 = sphi 0, %s89
      %s92 = sphi 0, %s91
      %s106 = sphi 0, %s92
      %s110 = sphi 0, %s110
      %s112 = sphi 0, %s110
      %s113 = sphi 0, %s112
      %s127 = sphi 0, %s113
      %s131 = sphi 0, %s131
      %s133 = sphi 0, %s131
      %s134 = sphi 0, %s133
      %s148 = sphi 0, %s134
      %s152 = sphi 0, %s152
      %s154 = sphi 0, %s152
      %s155 = sphi 0, %s154
      %s169 = sphi 0, %s155
      %s173 = sphi 0, %s173
      %s175 = sphi 0, %s173
      %s176 = sphi 0, %s175
      %s190 = sphi 0, %s176
      %s198 = sphi 0, %s200
      %s201 = sphi 0, %s198
      %s202 = sphi 0, %s201
      %s218 = sphi 0, %s202
    $region4: #{delayed_recurrent_block_forward.1} parent=1 // loop_header_branch
      %23 = sbr.rel (%p21) target = $region8
    $region5: #{delayed_recurrent_block_forward.1} parent=1 // loop_body
      %s25 = ssub.s32 %s20, 1
      %s26 = ssub.s32 %s20, 2
      %s33 = sadd.s32 1, %s28
      %p34 = scmp.ge.s32.totalorder %s33, 2
      %s35 = scalar_select %p34, 0, %s33
      %s36 = sadd.s32 1, %s27
      %s37 = scalar_select %p34, %s36, %s27
      %p38 = scmp.ge.s32.totalorder %s37, 2
      %s39 = scalar_select %p38, 0, %s37
      %s40 = ssub.s32 %s28, %s35
      %s41 = ssub.s32 %s27, %s39
      %s42 = sor.u32 %s40, %s41
      %p43 = scmp.eq.s32.totalorder %s42, 0
      %s45 = sadd.s32 %s44, 1
      %s46 = scalar_select %p43, %s44, %s45
      %p49 = pneg %p43
      %p50 = scmp.eq.s32.totalorder %s20, 3
      %p51 = por %p49, %p50
      %p52 = scmp.ne.s32.totalorder %s44, %s47
      %p53 = scmp.eq.s32.totalorder %s20, 0
      %p54 = por %p52, %p53
      %p55 = scmp.ne.s32.totalorder %s44, %s47
      %p56 = scmp.eq.s32.totalorder %s25, 3
      %p57 = por %p55, %p56
      %p58 = scmp.ne.s32.totalorder %s47, %s48
      %p59 = scmp.eq.s32.totalorder %s25, 0
      %p60 = por %p58, %p59
      %p61 = scmp.ne.s32.totalorder %s47, %s48
      %p62 = scmp.eq.s32.totalorder %s26, 3
      %p63 = por %p61, %p62
      %p65 = scmp.ne.s32.totalorder %s48, %s64
      %p66 = scmp.eq.s32.totalorder %s26, 0
      %p67 = por %p65, %p66
      %s69 = sadd.s32 %s68, 1
      %p72 = scmp.eq.s32.totalorder %s20, 3
      %p73 = scmp.ne.s32.totalorder %s68, %s70
      %p74 = scmp.eq.s32.totalorder %s20, 0
      %p75 = por %p73, %p74
      %p76 = scmp.ne.s32.totalorder %s68, %s70
      %p77 = scmp.eq.s32.totalorder %s25, 3
      %p78 = por %p76, %p77
      %p79 = scmp.ne.s32.totalorder %s70, %s71
      %p80 = scmp.eq.s32.totalorder %s25, 0
      %p81 = por %p79, %p80
      %p82 = scmp.ne.s32.totalorder %s70, %s71
      %p83 = scmp.eq.s32.totalorder %s26, 3
      %p84 = por %p82, %p83
      %p86 = scmp.ne.s32.totalorder %s71, %s85
      %p87 = scmp.eq.s32.totalorder %s26, 0
      %p88 = por %p86, %p87
      %s90 = sadd.s32 %s89, 1
      %p93 = scmp.eq.s32.totalorder %s20, 3
      %p94 = scmp.ne.s32.totalorder %s89, %s91
      %p95 = scmp.eq.s32.totalorder %s20, 0
      %p96 = por %p94, %p95
      %p97 = scmp.ne.s32.totalorder %s89, %s91
      %p98 = scmp.eq.s32.totalorder %s25, 3
      %p99 = por %p97, %p98
      %p100 = scmp.ne.s32.totalorder %s91, %s92
      %p101 = scmp.eq.s32.totalorder %s25, 0
      %p102 = por %p100, %p101
      %p103 = scmp.ne.s32.totalorder %s91, %s92
      %p104 = scmp.eq.s32.totalorder %s26, 3
      %p105 = por %p103, %p104
      %p107 = scmp.ne.s32.totalorder %s92, %s106
      %p108 = scmp.eq.s32.totalorder %s26, 0
      %p109 = por %p107, %p108
      %s111 = sadd.s32 %s110, 1
      %p114 = scmp.eq.s32.totalorder %s20, 3
      %p115 = scmp.ne.s32.totalorder %s110, %s112
      %p116 = scmp.eq.s32.totalorder %s20, 0
      %p117 = por %p115, %p116
      %p118 = scmp.ne.s32.totalorder %s110, %s112
      %p119 = scmp.eq.s32.totalorder %s25, 3
      %p120 = por %p118, %p119
      %p121 = scmp.ne.s32.totalorder %s112, %s113
      %p122 = scmp.eq.s32.totalorder %s25, 0
      %p123 = por %p121, %p122
      %p124 = scmp.ne.s32.totalorder %s112, %s113
      %p125 = scmp.eq.s32.totalorder %s26, 3
      %p126 = por %p124, %p125
      %p128 = scmp.ne.s32.totalorder %s113, %s127
      %p129 = scmp.eq.s32.totalorder %s26, 0
      %p130 = por %p128, %p129
      %s132 = sadd.s32 %s131, 1
      %p135 = scmp.eq.s32.totalorder %s20, 3
      %p136 = scmp.ne.s32.totalorder %s131, %s133
      %p137 = scmp.eq.s32.totalorder %s20, 0
      %p138 = por %p136, %p137
      %p139 = scmp.ne.s32.totalorder %s131, %s133
      %p140 = scmp.eq.s32.totalorder %s25, 3
      %p141 = por %p139, %p140
      %p142 = scmp.ne.s32.totalorder %s133, %s134
      %p143 = scmp.eq.s32.totalorder %s25, 0
      %p144 = por %p142, %p143
      %p145 = scmp.ne.s32.totalorder %s133, %s134
      %p146 = scmp.eq.s32.totalorder %s26, 3
      %p147 = por %p145, %p146
      %p149 = scmp.ne.s32.totalorder %s134, %s148
      %p150 = scmp.eq.s32.totalorder %s26, 0
      %p151 = por %p149, %p150
      %s153 = sadd.s32 %s152, 1
      %p156 = scmp.eq.s32.totalorder %s20, 3
      %p157 = scmp.ne.s32.totalorder %s152, %s154
      %p158 = scmp.eq.s32.totalorder %s20, 0
      %p159 = por %p157, %p158
      %p160 = scmp.ne.s32.totalorder %s152, %s154
      %p161 = scmp.eq.s32.totalorder %s25, 3
      %p162 = por %p160, %p161
      %p163 = scmp.ne.s32.totalorder %s154, %s155
      %p164 = scmp.eq.s32.totalorder %s25, 0
      %p165 = por %p163, %p164
      %p166 = scmp.ne.s32.totalorder %s154, %s155
      %p167 = scmp.eq.s32.totalorder %s26, 3
      %p168 = por %p166, %p167
      %p170 = scmp.ne.s32.totalorder %s155, %s169
      %p171 = scmp.eq.s32.totalorder %s26, 0
      %p172 = por %p170, %p171
      %s174 = sadd.s32 %s173, 1
      %p177 = scmp.eq.s32.totalorder %s20, 3
      %p178 = scmp.ne.s32.totalorder %s173, %s175
      %p179 = scmp.eq.s32.totalorder %s20, 0
      %p180 = por %p178, %p179
      %p181 = scmp.ne.s32.totalorder %s173, %s175
      %p182 = scmp.eq.s32.totalorder %s25, 3
      %p183 = por %p181, %p182
      %p184 = scmp.ne.s32.totalorder %s175, %s176
      %p185 = scmp.eq.s32.totalorder %s25, 0
      %p186 = por %p184, %p185
      %p187 = scmp.ne.s32.totalorder %s175, %s176
      %p188 = scmp.eq.s32.totalorder %s26, 3
      %p189 = por %p187, %p188
      %p191 = scmp.ne.s32.totalorder %s176, %s190
      %p192 = scmp.eq.s32.totalorder %s26, 0
      %p193 = por %p191, %p192
      %s194 = ssub.s32 %s28, %s35
      %s195 = ssub.s32 %s27, %s39
      %s196 = sor.u32 %s194, %s195
      %p197 = scmp.eq.s32.totalorder %s196, 0
      %s199 = sadd.s32 %s198, 1
      %s200 = scalar_select %p197, %s198, %s199
      %p203 = pneg %p197
      %p204 = scmp.eq.s32.totalorder %s20, 3
      %p205 = por %p203, %p204
      %p206 = scmp.ne.s32.totalorder %s198, %s201
      %p207 = scmp.eq.s32.totalorder %s20, 0
      %p208 = por %p206, %p207
      %p209 = scmp.ne.s32.totalorder %s198, %s201
      %p210 = scmp.eq.s32.totalorder %s25, 3
      %p211 = por %p209, %p210
      %p212 = scmp.ne.s32.totalorder %s201, %s202
      %p213 = scmp.eq.s32.totalorder %s25, 0
      %p214 = por %p212, %p213
      %p215 = scmp.ne.s32.totalorder %s201, %s202
      %p216 = scmp.eq.s32.totalorder %s26, 3
      %p217 = por %p215, %p216
      %p219 = scmp.ne.s32.totalorder %s202, %s218
      %p220 = scmp.eq.s32.totalorder %s26, 0
      %p221 = por %p219, %p220
      %p222 = scmp.le.s32.totalorder 1, %s20
      %p223 = scmp.lt.s32.totalorder %s20, 5
      %p224 = pnand %p222, %p223
      %p225 = pneg %p224
      // Predicated region
      $region9: #{delayed_recurrent_block_forward.1} parent=5 // pred_check
        _
      $region10: #{delayed_recurrent_block_forward.1} parent=5 // pred_check_branch
        %227 = sbr.rel (%p224) target = $region12
      $region11: #{delayed_recurrent_block_forward.1} parent=5 // pred_region
        %s228 = ssub.s32 %s20, 1
        // Predicated region
        $region13: #{delayed_recurrent_block_forward.1} parent=11 // pred_check
          %p229 = pneg %p81
        $region14: #{delayed_recurrent_block_forward.1} parent=11 // pred_check_branch
          %231 = sbr.rel (%p229) target = $region16
        $region15: #{delayed_recurrent_block_forward.1} parent=11 // pred_region
          %233 = vsyncadd [#allocation10], 0
          %s234 = sshll.u32 %s1, 4
          %s235 = int_to_ptr.hbm [resolvable:$true] %s234
          %s236 = sshll.u32 [#allocation9], 4
          %s237 = int_to_ptr.vmem [resolvable:$true] %s236
          %242 = dma.hbm_to_vmem [thread:$0]  %s235, 4096, %s237, [#allocation10], 64, 64, 4
        $region16: #{delayed_recurrent_block_forward.1} parent=11 // pred_fallthru
          _
        // Predicated region
        $region17: #{delayed_recurrent_block_forward.1} parent=11 // pred_check
          %p243 = pneg %p102
        $region18: #{delayed_recurrent_block_forward.1} parent=11 // pred_check_branch
          %245 = sbr.rel (%p243) target = $region20
        $region19: #{delayed_recurrent_block_forward.1} parent=11 // pred_region
          _
        $region20: #{delayed_recurrent_block_forward.1} parent=11 // pred_fallthru
          _
        // Predicated region
        $region21: #{delayed_recurrent_block_forward.1} parent=11 // pred_check
          %p246 = pneg %p123
        $region22: #{delayed_recurrent_block_forward.1} parent=11 // pred_check_branch
          %248 = sbr.rel (%p246) target = $region24
        $region23: #{delayed_recurrent_block_forward.1} parent=11 // pred_region
          %250 = vsyncadd [#allocation10], 0
          %s251 = sshll.u32 %s3, 4
          %s252 = int_to_ptr.hbm [resolvable:$true] %s251
          %s253 = sshll.u32 [#allocation11], 4
          %s254 = int_to_ptr.vmem [resolvable:$true] %s253
          %259 = dma.hbm_to_vmem [thread:$0]  %s252, 4096, %s254, [#allocation10], 64, 64, 4
        $region24: #{delayed_recurrent_block_forward.1} parent=11 // pred_fallthru
          _
        // Predicated region
        $region25: #{delayed_recurrent_block_forward.1} parent=11 // pred_check
          %p260 = pneg %p144
        $region26: #{delayed_recurrent_block_forward.1} parent=11 // pred_check_branch
          %262 = sbr.rel (%p260) target = $region28
        $region27: #{delayed_recurrent_block_forward.1} parent=11 // pred_region
          _
        $region28: #{delayed_recurrent_block_forward.1} parent=11 // pred_fallthru
          _
        // Predicated region
        $region29: #{delayed_recurrent_block_forward.1} parent=11 // pred_check
          %p263 = pneg %p165
        $region30: #{delayed_recurrent_block_forward.1} parent=11 // pred_check_branch
          %265 = sbr.rel (%p263) target = $region32
        $region31: #{delayed_recurrent_block_forward.1} parent=11 // pred_region
          _
        $region32: #{delayed_recurrent_block_forward.1} parent=11 // pred_fallthru
          _
        // Predicated region
        $region33: #{delayed_recurrent_block_forward.1} parent=11 // pred_check
          %p266 = pneg %p186
        $region34: #{delayed_recurrent_block_forward.1} parent=11 // pred_check_branch
          %268 = sbr.rel (%p266) target = $region36
        $region35: #{delayed_recurrent_block_forward.1} parent=11 // pred_region
          _
        $region36: #{delayed_recurrent_block_forward.1} parent=11 // pred_fallthru
          _
      $region12: #{delayed_recurrent_block_forward.1} parent=5 // pred_fallthru
        _
      %p269 = scmp.lt.s32.totalorder %s20, 4
      // Predicated region
      $region37: #{delayed_recurrent_block_forward.1} parent=5 // pred_check
        %p270 = pneg %p269
      $region38: #{delayed_recurrent_block_forward.1} parent=5 // pred_check_branch
        %272 = sbr.rel (%p270) target = $region40
      $region39: #{delayed_recurrent_block_forward.1} parent=5 // pred_region
        // Predicated region
        $region41: #{delayed_recurrent_block_forward.1} parent=39 // pred_check
          %p273 = pneg %p54
        $region42: #{delayed_recurrent_block_forward.1} parent=39 // pred_check_branch
          %275 = sbr.rel (%p273) target = $region44
        $region43: #{delayed_recurrent_block_forward.1} parent=39 // pred_region
          %s276 = sand.u32 %s44, 1
          %s277 = scalar_lea.sflag [#allocation7], %s276
          %s278 = sand.u32 %s44, 1
          %s279 = smul.addr %s278, 64
          %s280 = scalar_lea.vmem [#allocation6], %s279
          %s281 = smul.u32 8, %s28
          %283 = vsyncadd %s277, 0
          %s284 = smul.addr %s281, 2
          %s285 = sadd.s32 %s27, %s284
          %s286 = smul.addr %s285, 8
          %s287 = scalar_lea.hbm %s0, %s286
          %s288 = sshll.u32 %s287, 4
          %s289 = int_to_ptr.hbm [resolvable:$true] %s288
          %s290 = sshll.u32 %s280, 4
          %s291 = int_to_ptr.vmem [resolvable:$true] %s290
          %296 = dma.hbm_to_vmem [thread:$0]  %s289, 1024, %s291, %s277, 256, 128, 8
        $region44: #{delayed_recurrent_block_forward.1} parent=39 // pred_fallthru
          _
      $region40: #{delayed_recurrent_block_forward.1} parent=5 // pred_fallthru
        _
      %p297 = scmp.le.s32.totalorder 1, %s20
      %p298 = scmp.lt.s32.totalorder %s20, 5
      %p299 = pnand %p297, %p298
      %p300 = pneg %p299
      // Predicated region
      $region45: #{delayed_recurrent_block_forward.1} parent=5 // pred_check
        _
      $region46: #{delayed_recurrent_block_forward.1} parent=5 // pred_check_branch
        %302 = sbr.rel (%p299) target = $region48
      $region47: #{delayed_recurrent_block_forward.1} parent=5 // pred_region
        %s303 = ssub.s32 %s20, 1
        %s304 = sand.u32 %s47, 1
        %s305 = scalar_lea.sflag [#allocation7], %s304
        %s306 = sand.u32 %s47, 1
        %s307 = smul.addr %s306, 64
        %s308 = scalar_lea.vmem [#allocation6], %s307
        // Predicated region
        $region49: #{delayed_recurrent_block_forward.1} parent=47 // pred_check
          %p309 = pneg %p60
        $region50: #{delayed_recurrent_block_forward.1} parent=47 // pred_check_branch
          %311 = sbr.rel (%p309) target = $region52
        $region51: #{delayed_recurrent_block_forward.1} parent=47 // pred_region
          %313 = dma.done %s305, 1024
        $region52: #{delayed_recurrent_block_forward.1} parent=47 // pred_fallthru
          _
        // Predicated region
        $region53: #{delayed_recurrent_block_forward.1} parent=47 // pred_check
          %p314 = pneg %p81
        $region54: #{delayed_recurrent_block_forward.1} parent=47 // pred_check_branch
          %316 = sbr.rel (%p314) target = $region56
        $region55: #{delayed_recurrent_block_forward.1} parent=47 // pred_region
          %318 = dma.done [#allocation10], 4096
        $region56: #{delayed_recurrent_block_forward.1} parent=47 // pred_fallthru
          _
        // Predicated region
        $region57: #{delayed_recurrent_block_forward.1} parent=47 // pred_check
          %p319 = pneg %p123
        $region58: #{delayed_recurrent_block_forward.1} parent=47 // pred_check_branch
          %321 = sbr.rel (%p319) target = $region60
        $region59: #{delayed_recurrent_block_forward.1} parent=47 // pred_region
          %323 = dma.done [#allocation10], 4096
        $region60: #{delayed_recurrent_block_forward.1} parent=47 // pred_fallthru
          _
        %s324 = sand.u32 %s47, 1
        %s325 = scalar_lea.sflag [#allocation7], %s324
        %s326 = sand.u32 %s47, 1
        %s327 = smul.addr %s326, 64
        %s328 = scalar_lea.vmem [#allocation6], %s327
        %p329 = pneg %p60
        %p330 = pneg %p57
        %p331 = pneg %p81
        %p332 = pneg %p78
        %p333 = pneg %p102
        %p334 = pneg %p99
        %p335 = pneg %p123
        %p336 = pneg %p120
        %p337 = pneg %p144
        %p338 = pneg %p141
        %p339 = pneg %p165
        %p340 = pneg %p162
        %p341 = pneg %p186
        %p342 = pneg %p183
        %p343 = pneg %p214
        %p344 = pneg %p211
        %s345 = sand.u32 %s201, 1
        %s346 = scalar_lea.sflag [#allocation8], %s345
        %s347 = sand.u32 %s201, 1
        %s348 = smul.addr %s347, 64
        %s349 = scalar_lea.vmem [#allocation12], %s348
        %s350 = smul.u32 8, %s30
        %s351 = smul.u32 8, %s30
        %p353 = scmp.eq.s32.totalorder %s30, 0
        // Predicated region
        $region61: #{delayed_recurrent_block_forward.1} parent=47 // pred_check
          %p354 = pneg %p353
        $region62: #{delayed_recurrent_block_forward.1} parent=47 // pred_check_branch
          %356 = sbr.rel (%p354) target = $region64
        $region63: #{delayed_recurrent_block_forward.1} parent=47 // pred_region
          %357 = vst [vmem:[#allocation2] sm:$0xff] 0.0
          %358 = vst [vmem:[#allocation2 + $0x8] sm:$0xff] 0.0
          %359 = vst [vmem:[#allocation2 + $0x10] sm:$0xff] 0.0
          %360 = vst [vmem:[#allocation3] sm:$0xff] 0
          %361 = vst [vmem:[#allocation3 + $0x8] sm:$0xff] 0
          %362 = vst [vmem:[#allocation4] sm:$0xff] 0.0
          %363 = vst [vmem:[#allocation5] sm:$0xff] 0.0
        $region64: #{delayed_recurrent_block_forward.1} parent=47 // pred_fallthru
          _
        %v364 = vld [vmem:[#allocation2] sm:$0xff]
        %v365 = vld [vmem:[#allocation2 + $0x8] sm:$0xff]
        %v366 = vld [vmem:[#allocation2 + $0x10] sm:$0xff]
        %v367 = vld [vmem:[%s308] sm:$0xff]
        %v368 = vld [vmem:[%s308 + $0x8] sm:$0xff]
        %v369 = vld [vmem:[%s308 + $0x10] sm:$0xff]
        %v370 = vld [vmem:[%s308 + $0x18] sm:$0xff]
        %v371 = vld [vmem:[%s308 + $0x20] sm:$0xff]
        %v372 = vld [vmem:[%s308 + $0x28] sm:$0xff]
        %v373 = vld [vmem:[%s308 + $0x30] sm:$0xff]
        %v374 = vld [vmem:[%s308 + $0x38] sm:$0xff]
        %v375 = vld [vmem:[%s2] sm:$0x1]
        %v377 = vperm.slane %v375, 0
        %v379 = vpack.c.bf16 %v368, %v367
        %v380 = vpack.c.bf16 %v370, %v369
        %v381 = vpack.c.bf16 %v372, %v371
        %v382 = vpack.c.bf16 %v374, %v373
        %v383 = vld [vmem:[#allocation9] sm:$0xf]
        %v384 = vld [vmem:[#allocation9 + $0x4] sm:$0xf]
        %v385 = vld [vmem:[#allocation9 + $0x8] sm:$0xf]
        %v386 = vld [vmem:[#allocation9 + $0xc] sm:$0xf]
        %v387 = vld [vmem:[#allocation9 + $0x10] sm:$0xf]
        %v388 = vld [vmem:[#allocation9 + $0x14] sm:$0xf]
        %v389 = vld [vmem:[#allocation9 + $0x18] sm:$0xf]
        %v390 = vld [vmem:[#allocation9 + $0x1c] sm:$0xf]
        %v391 = vld [vmem:[#allocation9 + $0x20] sm:$0xf]
        %v392 = vld [vmem:[#allocation9 + $0x24] sm:$0xf]
        %v393 = vld [vmem:[#allocation9 + $0x28] sm:$0xf]
        %v394 = vld [vmem:[#allocation9 + $0x2c] sm:$0xf]
        %v395 = vld [vmem:[#allocation9 + $0x30] sm:$0xf]
        %v396 = vld [vmem:[#allocation9 + $0x34] sm:$0xf]
        %v397 = vld [vmem:[#allocation9 + $0x38] sm:$0xf]
        %v398 = vld [vmem:[#allocation9 + $0x3c] sm:$0xf]
        %v415 = vunpack.c.l.b16 %v383
        %v416 = vunpack.c.l.b16 %v384
        %v417 = vunpack.c.l.b16 %v385
        %v418 = vunpack.c.l.b16 %v386
        %v419 = vunpack.c.l.b16 %v387
        %v420 = vunpack.c.l.b16 %v388
        %v421 = vunpack.c.l.b16 %v389
        %v422 = vunpack.c.l.b16 %v390
        %v423 = vunpack.c.l.b16 %v391
        %v424 = vunpack.c.l.b16 %v392
        %v425 = vunpack.c.l.b16 %v393
        %v426 = vunpack.c.l.b16 %v394
        %v427 = vunpack.c.l.b16 %v395
        %v428 = vunpack.c.l.b16 %v396
        %v429 = vunpack.c.l.b16 %v397
        %v430 = vunpack.c.l.b16 %v398
        %v431 = vpack.c.b16 %v416, %v415
        %v432 = vpack.c.b16 %v418, %v417
        %v433 = vpack.c.b16 %v420, %v419
        %v434 = vpack.c.b16 %v422, %v421
        %v435 = vpack.c.b16 %v424, %v423
        %v436 = vpack.c.b16 %v426, %v425
        %v437 = vpack.c.b16 %v428, %v427
        %v438 = vpack.c.b16 %v430, %v429
        %447 = vmatpush.bf16.msra.mxu0 %v438
        %448 = vmatpush.bf16.msra.mxu0 %v437
        %449 = vmatpush.bf16.msra.mxu0 %v436
        %450 = vmatpush.bf16.msra.mxu0 %v435
        %451 = vmatpush.bf16.msra.mxu0 %v434
        %452 = vmatpush.bf16.msra.mxu0 %v433
        %453 = vmatpush.bf16.msra.mxu0 %v432
        %454 = vmatpush.bf16.msra.mxu0 %v431
        %455 = vmatmul.bf16.gmra.mxu0 %v379
        %v456 = vpop.f32.mrf.mxu0
        %v457 = vadd.f32 0.0, %v456
        %v458 = vpop.f32.mrf.mxu0
        %v459 = vadd.f32 0.0, %v458
        %460 = vmatmul.bf16.gmra.mxu0 %v380
        %v461 = vpop.f32.mrf.mxu0
        %v462 = vadd.f32 0.0, %v461
        %v463 = vpop.f32.mrf.mxu0
        %v464 = vadd.f32 0.0, %v463
        %465 = vmatmul.bf16.gmra.mxu0 %v381
        %v466 = vpop.f32.mrf.mxu0
        %v467 = vadd.f32 0.0, %v466
        %v468 = vpop.f32.mrf.mxu0
        %v469 = vadd.f32 0.0, %v468
        %470 = vmatmul.bf16.gmra.mxu0 %v382
        %v471 = vpop.f32.mrf.mxu0
        %v472 = vadd.f32 0.0, %v471
        %v473 = vpop.f32.mrf.mxu0
        %v474 = vadd.f32 0.0, %v473
        %475 = vdwg.mxu0
        %v476 = vadd.f32 %v377, %v457
        %v477 = vadd.f32 %v377, %v459
        %v478 = vadd.f32 %v377, %v462
        %v479 = vadd.f32 %v377, %v464
        %v480 = vadd.f32 %v377, %v467
        %v481 = vadd.f32 %v377, %v469
        %v482 = vadd.f32 %v377, %v472
        %v483 = vadd.f32 %v377, %v474
        %v484 = vpack.c.bf16 %v367, %v366
        %v485 = vpack.c.bf16 %v369, %v368
        %v486 = vpack.c.bf16 %v371, %v370
        %v487 = vpack.c.bf16 %v373, %v372
        %s488 = scalar_lea.vmem [#allocation9], 64
        %v489 = vld [vmem:[%s488] sm:$0xf]
        %v490 = vld [vmem:[%s488 + $0x4] sm:$0xf]
        %v491 = vld [vmem:[%s488 + $0x8] sm:$0xf]
        %v492 = vld [vmem:[%s488 + $0xc] sm:$0xf]
        %v493 = vld [vmem:[%s488 + $0x10] sm:$0xf]
        %v494 = vld [vmem:[%s488 + $0x14] sm:$0xf]
        %v495 = vld [vmem:[%s488 + $0x18] sm:$0xf]
        %v496 = vld [vmem:[%s488 + $0x1c] sm:$0xf]
        %v497 = vld [vmem:[%s488 + $0x20] sm:$0xf]
        %v498 = vld [vmem:[%s488 + $0x24] sm:$0xf]
        %v499 = vld [vmem:[%s488 + $0x28] sm:$0xf]
        %v500 = vld [vmem:[%s488 + $0x2c] sm:$0xf]
        %v501 = vld [vmem:[%s488 + $0x30] sm:$0xf]
        %v502 = vld [vmem:[%s488 + $0x34] sm:$0xf]
        %v503 = vld [vmem:[%s488 + $0x38] sm:$0xf]
        %v504 = vld [vmem:[%s488 + $0x3c] sm:$0xf]
        %v521 = vunpack.c.l.b16 %v489
        %v522 = vunpack.c.l.b16 %v490
        %v523 = vunpack.c.l.b16 %v491
        %v524 = vunpack.c.l.b16 %v492
        %v525 = vunpack.c.l.b16 %v493
        %v526 = vunpack.c.l.b16 %v494
        %v527 = vunpack.c.l.b16 %v495
        %v528 = vunpack.c.l.b16 %v496
        %v529 = vunpack.c.l.b16 %v497
        %v530 = vunpack.c.l.b16 %v498
        %v531 = vunpack.c.l.b16 %v499
        %v532 = vunpack.c.l.b16 %v500
        %v533 = vunpack.c.l.b16 %v501
        %v534 = vunpack.c.l.b16 %v502
        %v535 = vunpack.c.l.b16 %v503
        %v536 = vunpack.c.l.b16 %v504
        %v537 = vpack.c.b16 %v522, %v521
        %v538 = vpack.c.b16 %v524, %v523
        %v539 = vpack.c.b16 %v526, %v525
        %v540 = vpack.c.b16 %v528, %v527
        %v541 = vpack.c.b16 %v530, %v529
        %v542 = vpack.c.b16 %v532, %v531
        %v543 = vpack.c.b16 %v534, %v533
        %v544 = vpack.c.b16 %v536, %v535
        %553 = vmatpush.bf16.msra.mxu0 %v544
        %554 = vmatpush.bf16.msra.mxu0 %v543
        %555 = vmatpush.bf16.msra.mxu0 %v542
        %556 = vmatpush.bf16.msra.mxu0 %v541
        %557 = vmatpush.bf16.msra.mxu0 %v540
        %558 = vmatpush.bf16.msra.mxu0 %v539
        %559 = vmatpush.bf16.msra.mxu0 %v538
        %560 = vmatpush.bf16.msra.mxu0 %v537
        %561 = vmatmul.bf16.gmra.mxu0 %v484
        %v562 = vpop.f32.mrf.mxu0
        %v563 = vadd.f32 0.0, %v562
        %v564 = vpop.f32.mrf.mxu0
        %v565 = vadd.f32 0.0, %v564
        %566 = vmatmul.bf16.gmra.mxu0 %v485
        %v567 = vpop.f32.mrf.mxu0
        %v568 = vadd.f32 0.0, %v567
        %v569 = vpop.f32.mrf.mxu0
        %v570 = vadd.f32 0.0, %v569
        %571 = vmatmul.bf16.gmra.mxu0 %v486
        %v572 = vpop.f32.mrf.mxu0
        %v573 = vadd.f32 0.0, %v572
        %v574 = vpop.f32.mrf.mxu0
        %v575 = vadd.f32 0.0, %v574
        %576 = vmatmul.bf16.gmra.mxu0 %v487
        %v577 = vpop.f32.mrf.mxu0
        %v578 = vadd.f32 0.0, %v577
        %v579 = vpop.f32.mrf.mxu0
        %v580 = vadd.f32 0.0, %v579
        %581 = vdwg.mxu0
        %v582 = vadd.f32 %v476, %v563
        %v583 = vadd.f32 %v477, %v565
        %v584 = vadd.f32 %v478, %v568
        %v585 = vadd.f32 %v479, %v570
        %v586 = vadd.f32 %v480, %v573
        %v587 = vadd.f32 %v481, %v575
        %v588 = vadd.f32 %v482, %v578
        %v589 = vadd.f32 %v483, %v580
        %v590 = vpack.c.bf16 %v366, %v365
        %s591 = scalar_lea.vmem [#allocation9], 128
        %v592 = vld [vmem:[%s591] sm:$0xf]
        %v593 = vld [vmem:[%s591 + $0x4] sm:$0xf]
        %v594 = vld [vmem:[%s591 + $0x8] sm:$0xf]
        %v595 = vld [vmem:[%s591 + $0xc] sm:$0xf]
        %v596 = vld [vmem:[%s591 + $0x10] sm:$0xf]
        %v597 = vld [vmem:[%s591 + $0x14] sm:$0xf]
        %v598 = vld [vmem:[%s591 + $0x18] sm:$0xf]
        %v599 = vld [vmem:[%s591 + $0x1c] sm:$0xf]
        %v600 = vld [vmem:[%s591 + $0x20] sm:$0xf]
        %v601 = vld [vmem:[%s591 + $0x24] sm:$0xf]
        %v602 = vld [vmem:[%s591 + $0x28] sm:$0xf]
        %v603 = vld [vmem:[%s591 + $0x2c] sm:$0xf]
        %v604 = vld [vmem:[%s591 + $0x30] sm:$0xf]
        %v605 = vld [vmem:[%s591 + $0x34] sm:$0xf]
        %v606 = vld [vmem:[%s591 + $0x38] sm:$0xf]
        %v607 = vld [vmem:[%s591 + $0x3c] sm:$0xf]
        %v624 = vunpack.c.l.b16 %v592
        %v625 = vunpack.c.l.b16 %v593
        %v626 = vunpack.c.l.b16 %v594
        %v627 = vunpack.c.l.b16 %v595
        %v628 = vunpack.c.l.b16 %v596
        %v629 = vunpack.c.l.b16 %v597
        %v630 = vunpack.c.l.b16 %v598
        %v631 = vunpack.c.l.b16 %v599
        %v632 = vunpack.c.l.b16 %v600
        %v633 = vunpack.c.l.b16 %v601
        %v634 = vunpack.c.l.b16 %v602
        %v635 = vunpack.c.l.b16 %v603
        %v636 = vunpack.c.l.b16 %v604
        %v637 = vunpack.c.l.b16 %v605
        %v638 = vunpack.c.l.b16 %v606
        %v639 = vunpack.c.l.b16 %v607
        %v640 = vpack.c.b16 %v625, %v624
        %v641 = vpack.c.b16 %v627, %v626
        %v642 = vpack.c.b16 %v629, %v628
        %v643 = vpack.c.b16 %v631, %v630
        %v644 = vpack.c.b16 %v633, %v632
        %v645 = vpack.c.b16 %v635, %v634
        %v646 = vpack.c.b16 %v637, %v636
        %v647 = vpack.c.b16 %v639, %v638
        %656 = vmatpush.bf16.msra.mxu0 %v647
        %657 = vmatpush.bf16.msra.mxu0 %v646
        %658 = vmatpush.bf16.msra.mxu0 %v645
        %659 = vmatpush.bf16.msra.mxu0 %v644
        %660 = vmatpush.bf16.msra.mxu0 %v643
        %661 = vmatpush.bf16.msra.mxu0 %v642
        %662 = vmatpush.bf16.msra.mxu0 %v641
        %663 = vmatpush.bf16.msra.mxu0 %v640
        %664 = vmatmul.bf16.gmra.mxu0 %v590
        %v665 = vpop.f32.mrf.mxu0
        %v666 = vadd.f32 0.0, %v665
        %v667 = vpop.f32.mrf.mxu0
        %v668 = vadd.f32 0.0, %v667
        %669 = vmatmul.bf16.gmra.mxu0 %v379
        %v670 = vpop.f32.mrf.mxu0
        %v671 = vadd.f32 0.0, %v670
        %v672 = vpop.f32.mrf.mxu0
        %v673 = vadd.f32 0.0, %v672
        %674 = vmatmul.bf16.gmra.mxu0 %v380
        %v675 = vpop.f32.mrf.mxu0
        %v676 = vadd.f32 0.0, %v675
        %v677 = vpop.f32.mrf.mxu0
        %v678 = vadd.f32 0.0, %v677
        %679 = vmatmul.bf16.gmra.mxu0 %v381
        %v680 = vpop.f32.mrf.mxu0
        %v681 = vadd.f32 0.0, %v680
        %v682 = vpop.f32.mrf.mxu0
        %v683 = vadd.f32 0.0, %v682
        %684 = vdwg.mxu0
        %v685 = vadd.f32 %v582, %v666
        %v686 = vadd.f32 %v583, %v668
        %v687 = vadd.f32 %v584, %v671
        %v688 = vadd.f32 %v585, %v673
        %v689 = vadd.f32 %v586, %v676
        %v690 = vadd.f32 %v587, %v678
        %v691 = vadd.f32 %v588, %v681
        %v692 = vadd.f32 %v589, %v683
        %v693 = vpack.c.bf16 %v365, %v364
        %s694 = scalar_lea.vmem [#allocation9], 192
        %v695 = vld [vmem:[%s694] sm:$0xf]
        %v696 = vld [vmem:[%s694 + $0x4] sm:$0xf]
        %v697 = vld [vmem:[%s694 + $0x8] sm:$0xf]
        %v698 = vld [vmem:[%s694 + $0xc] sm:$0xf]
        %v699 = vld [vmem:[%s694 + $0x10] sm:$0xf]
        %v700 = vld [vmem:[%s694 + $0x14] sm:$0xf]
        %v701 = vld [vmem:[%s694 + $0x18] sm:$0xf]
        %v702 = vld [vmem:[%s694 + $0x1c] sm:$0xf]
        %v703 = vld [vmem:[%s694 + $0x20] sm:$0xf]
        %v704 = vld [vmem:[%s694 + $0x24] sm:$0xf]
        %v705 = vld [vmem:[%s694 + $0x28] sm:$0xf]
        %v706 = vld [vmem:[%s694 + $0x2c] sm:$0xf]
        %v707 = vld [vmem:[%s694 + $0x30] sm:$0xf]
        %v708 = vld [vmem:[%s694 + $0x34] sm:$0xf]
        %v709 = vld [vmem:[%s694 + $0x38] sm:$0xf]
        %v710 = vld [vmem:[%s694 + $0x3c] sm:$0xf]
        %v727 = vunpack.c.l.b16 %v695
        %v728 = vunpack.c.l.b16 %v696
        %v729 = vunpack.c.l.b16 %v697
        %v730 = vunpack.c.l.b16 %v698
        %v731 = vunpack.c.l.b16 %v699
        %v732 = vunpack.c.l.b16 %v700
        %v733 = vunpack.c.l.b16 %v701
        %v734 = vunpack.c.l.b16 %v702
        %v735 = vunpack.c.l.b16 %v703
        %v736 = vunpack.c.l.b16 %v704
        %v737 = vunpack.c.l.b16 %v705
        %v738 = vunpack.c.l.b16 %v706
        %v739 = vunpack.c.l.b16 %v707
        %v740 = vunpack.c.l.b16 %v708
        %v741 = vunpack.c.l.b16 %v709
        %v742 = vunpack.c.l.b16 %v710
        %v743 = vpack.c.b16 %v728, %v727
        %v744 = vpack.c.b16 %v730, %v729
        %v745 = vpack.c.b16 %v732, %v731
        %v746 = vpack.c.b16 %v734, %v733
        %v747 = vpack.c.b16 %v736, %v735
        %v748 = vpack.c.b16 %v738, %v737
        %v749 = vpack.c.b16 %v740, %v739
        %v750 = vpack.c.b16 %v742, %v741
        %759 = vmatpush.bf16.msra.mxu0 %v750
        %760 = vmatpush.bf16.msra.mxu0 %v749
        %761 = vmatpush.bf16.msra.mxu0 %v748
        %762 = vmatpush.bf16.msra.mxu0 %v747
        %763 = vmatpush.bf16.msra.mxu0 %v746
        %764 = vmatpush.bf16.msra.mxu0 %v745
        %765 = vmatpush.bf16.msra.mxu0 %v744
        %766 = vmatpush.bf16.msra.mxu0 %v743
        %767 = vmatmul.bf16.gmra.mxu0 %v693
        %v768 = vpop.f32.mrf.mxu0
        %v769 = vadd.f32 0.0, %v768
        %v770 = vpop.f32.mrf.mxu0
        %v771 = vadd.f32 0.0, %v770
        %772 = vmatmul.bf16.gmra.mxu0 %v484
        %v773 = vpop.f32.mrf.mxu0
        %v774 = vadd.f32 0.0, %v773
        %v775 = vpop.f32.mrf.mxu0
        %v776 = vadd.f32 0.0, %v775
        %777 = vmatmul.bf16.gmra.mxu0 %v485
        %v778 = vpop.f32.mrf.mxu0
        %v779 = vadd.f32 0.0, %v778
        %v780 = vpop.f32.mrf.mxu0
        %v781 = vadd.f32 0.0, %v780
        %782 = vmatmul.bf16.gmra.mxu0 %v486
        %v783 = vpop.f32.mrf.mxu0
        %v784 = vadd.f32 0.0, %v783
        %v785 = vpop.f32.mrf.mxu0
        %v786 = vadd.f32 0.0, %v785
        %787 = vdwg.mxu0
        %v788 = vadd.f32 %v685, %v769
        %v789 = vadd.f32 %v686, %v771
        %v790 = vadd.f32 %v687, %v774
        %v791 = vadd.f32 %v688, %v776
        %v792 = vadd.f32 %v689, %v779
        %v793 = vadd.f32 %v690, %v781
        %v794 = vadd.f32 %v691, %v784
        %v795 = vadd.f32 %v692, %v786
        %s796 = scalar_lea.vmem %s308, 40 [#allocation6]
        %v797 = vld [vmem:[%s796] sm:$0xff]
        %v798 = vld [vmem:[%s796 + $0x8] sm:$0xff]
        %v799 = vld [vmem:[%s796 + $0x10] sm:$0xff]
        %800 = vst [vmem:[#allocation2] sm:$0xff] %v797
        %801 = vst [vmem:[#allocation2 + $0x8] sm:$0xff] %v798
        %802 = vst [vmem:[#allocation2 + $0x10] sm:$0xff] %v799
        %v803 = vld [vmem:[%s4] sm:$0x1]
        %v805 = vperm.slane %v803, 0
        %v807 = vld [vmem:[%s5] sm:$0x1]
        %v809 = vperm.slane %v807, 0
        %v811 = vld [vmem:[%s6] sm:$0x1]
        %v813 = vperm.slane %v811, 0
        %v815 = vsub.f32 1.0, %v809
        %v816 = vsub.f32 1.0, %v813
        %s817 = scalar_select %p353, 1, 0
        %v818 = vstv %s817
        %vm819 = vcmp.eq.s32.totalorder %v818, 1
        %v820 = vsel %vm819, 0.0, %v805
        %v821 = vld [vmem:[#allocation4] sm:$0xff]
        %v822 = vld [vmem:[#allocation5] sm:$0xff]
        %v823 = vld [vmem:[#allocation3] sm:$0xff]
        %v824 = vld [vmem:[#allocation3 + $0x8] sm:$0xff]
        %v825 = vld [vmem:[#allocation11] sm:$0xf]
        %v826 = vld [vmem:[#allocation11 + $0x4] sm:$0xf]
        %v827 = vld [vmem:[#allocation11 + $0x8] sm:$0xf]
        %v828 = vld [vmem:[#allocation11 + $0xc] sm:$0xf]
        %v829 = vld [vmem:[#allocation11 + $0x10] sm:$0xf]
        %v830 = vld [vmem:[#allocation11 + $0x14] sm:$0xf]
        %v831 = vld [vmem:[#allocation11 + $0x18] sm:$0xf]
        %v832 = vld [vmem:[#allocation11 + $0x1c] sm:$0xf]
        %v833 = vld [vmem:[#allocation11 + $0x20] sm:$0xf]
        %v834 = vld [vmem:[#allocation11 + $0x24] sm:$0xf]
        %v835 = vld [vmem:[#allocation11 + $0x28] sm:$0xf]
        %v836 = vld [vmem:[#allocation11 + $0x2c] sm:$0xf]
        %v837 = vld [vmem:[#allocation11 + $0x30] sm:$0xf]
        %v838 = vld [vmem:[#allocation11 + $0x34] sm:$0xf]
        %v839 = vld [vmem:[#allocation11 + $0x38] sm:$0xf]
        %v840 = vld [vmem:[#allocation11 + $0x3c] sm:$0xf]
        %v841 = vld [vmem:[#allocation11 + $0x40] sm:$0xf]
        %v842 = vld [vmem:[#allocation11 + $0x44] sm:$0xf]
        %v843 = vld [vmem:[#allocation11 + $0x48] sm:$0xf]
        %v844 = vld [vmem:[#allocation11 + $0x4c] sm:$0xf]
        %v845 = vld [vmem:[#allocation11 + $0x50] sm:$0xf]
        %v846 = vld [vmem:[#allocation11 + $0x54] sm:$0xf]
        %v847 = vld [vmem:[#allocation11 + $0x58] sm:$0xf]
        %v848 = vld [vmem:[#allocation11 + $0x5c] sm:$0xf]
        %v849 = vld [vmem:[#allocation11 + $0x60] sm:$0xf]
        %v850 = vld [vmem:[#allocation11 + $0x64] sm:$0xf]
        %v851 = vld [vmem:[#allocation11 + $0x68] sm:$0xf]
        %v852 = vld [vmem:[#allocation11 + $0x6c] sm:$0xf]
        %v853 = vld [vmem:[#allocation11 + $0x70] sm:$0xf]
        %v854 = vld [vmem:[#allocation11 + $0x74] sm:$0xf]
        %v855 = vld [vmem:[#allocation11 + $0x78] sm:$0xf]
        %v856 = vld [vmem:[#allocation11 + $0x7c] sm:$0xf]
        %v857 = vld [vmem:[#allocation11 + $0x80] sm:$0xf]
        %v858 = vld [vmem:[#allocation11 + $0x84] sm:$0xf]
        %v859 = vld [vmem:[#allocation11 + $0x88] sm:$0xf]
        %v860 = vld [vmem:[#allocation11 + $0x8c] sm:$0xf]
        %v861 = vld [vmem:[#allocation11 + $0x90] sm:$0xf]
        %v862 = vld [vmem:[#allocation11 + $0x94] sm:$0xf]
        %v863 = vld [vmem:[#allocation11 + $0x98] sm:$0xf]
        %v864 = vld [vmem:[#allocation11 + $0x9c] sm:$0xf]
        %v865 = vld [vmem:[#allocation11 + $0xa0] sm:$0xf]
        %v866 = vld [vmem:[#allocation11 + $0xa4] sm:$0xf]
        %v867 = vld [vmem:[#allocation11 + $0xa8] sm:$0xf]
        %v868 = vld [vmem:[#allocation11 + $0xac] sm:$0xf]
        %v869 = vld [vmem:[#allocation11 + $0xb0] sm:$0xf]
        %v870 = vld [vmem:[#allocation11 + $0xb4] sm:$0xf]
        %v871 = vld [vmem:[#allocation11 + $0xb8] sm:$0xf]
        %v872 = vld [vmem:[#allocation11 + $0xbc] sm:$0xf]
        %v873 = vld [vmem:[#allocation11 + $0xc0] sm:$0xf]
        %v874 = vld [vmem:[#allocation11 + $0xc4] sm:$0xf]
        %v875 = vld [vmem:[#allocation11 + $0xc8] sm:$0xf]
        %v876 = vld [vmem:[#allocation11 + $0xcc] sm:$0xf]
        %v877 = vld [vmem:[#allocation11 + $0xd0] sm:$0xf]
        %v878 = vld [vmem:[#allocation11 + $0xd4] sm:$0xf]
        %v879 = vld [vmem:[#allocation11 + $0xd8] sm:$0xf]
        %v880 = vld [vmem:[#allocation11 + $0xdc] sm:$0xf]
        %v881 = vld [vmem:[#allocation11 + $0xe0] sm:$0xf]
        %v882 = vld [vmem:[#allocation11 + $0xe4] sm:$0xf]
        %v883 = vld [vmem:[#allocation11 + $0xe8] sm:$0xf]
        %v884 = vld [vmem:[#allocation11 + $0xec] sm:$0xf]
        %v885 = vld [vmem:[#allocation11 + $0xf0] sm:$0xf]
        %v886 = vld [vmem:[#allocation11 + $0xf4] sm:$0xf]
        %v887 = vld [vmem:[#allocation11 + $0xf8] sm:$0xf]
        %v888 = vld [vmem:[#allocation11 + $0xfc] sm:$0xf]
        %v891 = vunpack.c.l.b16 %v823
        %v892 = vunpack.c.h.b16 %v823
        %v893 = vunpack.c.l.b16 %v824
        %v894 = vunpack.c.h.b16 %v824
        %v895 = vpack.c.b16 %v891, %v891
        %v896 = vpack.c.b16 %v892, %v892
        %v897 = vpack.c.b16 %v893, %v893
        %v898 = vpack.c.b16 %v894, %v894
        %v967 = vunpack.c.l.b16 %v825
        %v968 = vunpack.c.l.b16 %v826
        %v969 = vunpack.c.l.b16 %v827
        %v970 = vunpack.c.l.b16 %v828
        %v971 = vunpack.c.l.b16 %v829
        %v972 = vunpack.c.l.b16 %v830
        %v973 = vunpack.c.l.b16 %v831
        %v974 = vunpack.c.l.b16 %v832
        %v975 = vunpack.c.l.b16 %v833
        %v976 = vunpack.c.l.b16 %v834
        %v977 = vunpack.c.l.b16 %v835
        %v978 = vunpack.c.l.b16 %v836
        %v979 = vunpack.c.l.b16 %v837
        %v980 = vunpack.c.l.b16 %v838
        %v981 = vunpack.c.l.b16 %v839
        %v982 = vunpack.c.l.b16 %v840
        %v983 = vunpack.c.l.b16 %v841
        %v984 = vunpack.c.l.b16 %v842
        %v985 = vunpack.c.l.b16 %v843
        %v986 = vunpack.c.l.b16 %v844
        %v987 = vunpack.c.l.b16 %v845
        %v988 = vunpack.c.l.b16 %v846
        %v989 = vunpack.c.l.b16 %v847
        %v990 = vunpack.c.l.b16 %v848
        %v991 = vunpack.c.l.b16 %v849
        %v992 = vunpack.c.l.b16 %v850
        %v993 = vunpack.c.l.b16 %v851
        %v994 = vunpack.c.l.b16 %v852
        %v995 = vunpack.c.l.b16 %v853
        %v996 = vunpack.c.l.b16 %v854
        %v997 = vunpack.c.l.b16 %v855
        %v998 = vunpack.c.l.b16 %v856
        %v999 = vunpack.c.l.b16 %v857
        %v1000 = vunpack.c.l.b16 %v858
        %v1001 = vunpack.c.l.b16 %v859
        %v1002 = vunpack.c.l.b16 %v860
        %v1003 = vunpack.c.l.b16 %v861
        %v1004 = vunpack.c.l.b16 %v862
        %v1005 = vunpack.c.l.b16 %v863
        %v1006 = vunpack.c.l.b16 %v864
        %v1007 = vunpack.c.l.b16 %v865
        %v1008 = vunpack.c.l.b16 %v866
        %v1009 = vunpack.c.l.b16 %v867
        %v1010 = vunpack.c.l.b16 %v868
        %v1011 = vunpack.c.l.b16 %v869
        %v1012 = vunpack.c.l.b16 %v870
        %v1013 = vunpack.c.l.b16 %v871
        %v1014 = vunpack.c.l.b16 %v872
        %v1015 = vunpack.c.l.b16 %v873
        %v1016 = vunpack.c.l.b16 %v874
        %v1017 = vunpack.c.l.b16 %v875
        %v1018 = vunpack.c.l.b16 %v876
        %v1019 = vunpack.c.l.b16 %v877
        %v1020 = vunpack.c.l.b16 %v878
        %v1021 = vunpack.c.l.b16 %v879
        %v1022 = vunpack.c.l.b16 %v880
        %v1023 = vunpack.c.l.b16 %v881
        %v1024 = vunpack.c.l.b16 %v882
        %v1025 = vunpack.c.l.b16 %v883
        %v1026 = vunpack.c.l.b16 %v884
        %v1027 = vunpack.c.l.b16 %v885
        %v1028 = vunpack.c.l.b16 %v886
        %v1029 = vunpack.c.l.b16 %v887
        %v1030 = vunpack.c.l.b16 %v888
        %v1031 = vpack.c.b16 %v968, %v967
        %v1032 = vpack.c.b16 %v970, %v969
        %v1033 = vpack.c.b16 %v972, %v971
        %v1034 = vpack.c.b16 %v974, %v973
        %v1035 = vpack.c.b16 %v976, %v975
        %v1036 = vpack.c.b16 %v978, %v977
        %v1037 = vpack.c.b16 %v980, %v979
        %v1038 = vpack.c.b16 %v982, %v981
        %v1039 = vpack.c.b16 %v984, %v983
        %v1040 = vpack.c.b16 %v986, %v985
        %v1041 = vpack.c.b16 %v988, %v987
        %v1042 = vpack.c.b16 %v990, %v989
        %v1043 = vpack.c.b16 %v992, %v991
        %v1044 = vpack.c.b16 %v994, %v993
        %v1045 = vpack.c.b16 %v996, %v995
        %v1046 = vpack.c.b16 %v998, %v997
        %v1047 = vpack.c.b16 %v1000, %v999
        %v1048 = vpack.c.b16 %v1002, %v1001
        %v1049 = vpack.c.b16 %v1004, %v1003
        %v1050 = vpack.c.b16 %v1006, %v1005
        %v1051 = vpack.c.b16 %v1008, %v1007
        %v1052 = vpack.c.b16 %v1010, %v1009
        %v1053 = vpack.c.b16 %v1012, %v1011
        %v1054 = vpack.c.b16 %v1014, %v1013
        %v1055 = vpack.c.b16 %v1016, %v1015
        %v1056 = vpack.c.b16 %v1018, %v1017
        %v1057 = vpack.c.b16 %v1020, %v1019
        %v1058 = vpack.c.b16 %v1022, %v1021
        %v1059 = vpack.c.b16 %v1024, %v1023
        %v1060 = vpack.c.b16 %v1026, %v1025
        %v1061 = vpack.c.b16 %v1028, %v1027
        %v1062 = vpack.c.b16 %v1030, %v1029
        %1095 = vmatpush.bf16.msra.mxu0 %v1038
        %1096 = vmatpush.bf16.msra.mxu0 %v1037
        %1097 = vmatpush.bf16.msra.mxu0 %v1036
        %1098 = vmatpush.bf16.msra.mxu0 %v1035
        %1099 = vmatpush.bf16.msra.mxu0 %v1034
        %1100 = vmatpush.bf16.msra.mxu0 %v1033
        %1101 = vmatpush.bf16.msra.mxu0 %v1032
        %1102 = vmatpush.bf16.msra.mxu0 %v1031
        %1103 = vmatmul.bf16.gmra.mxu0 %v895
        %v1104 = vpop.f32.mrf.mxu0
        %v1105 = vadd.f32 0.0, %v1104
        %v1106 = vpop.f32.mrf.mxu0
        %1107 = vdwg.mxu0
        %1108 = vmatpush.bf16.msra.mxu0 %v1046
        %1109 = vmatpush.bf16.msra.mxu0 %v1045
        %1110 = vmatpush.bf16.msra.mxu0 %v1044
        %1111 = vmatpush.bf16.msra.mxu0 %v1043
        %1112 = vmatpush.bf16.msra.mxu0 %v1042
        %1113 = vmatpush.bf16.msra.mxu0 %v1041
        %1114 = vmatpush.bf16.msra.mxu0 %v1040
        %1115 = vmatpush.bf16.msra.mxu0 %v1039
        %1116 = vmatmul.bf16.gmra.mxu0 %v896
        %v1117 = vpop.f32.mrf.mxu0
        %v1118 = vadd.f32 %v1105, %v1117
        %v1119 = vpop.f32.mrf.mxu0
        %1120 = vdwg.mxu0
        %1121 = vmatpush.bf16.msra.mxu0 %v1054
        %1122 = vmatpush.bf16.msra.mxu0 %v1053
        %1123 = vmatpush.bf16.msra.mxu0 %v1052
        %1124 = vmatpush.bf16.msra.mxu0 %v1051
        %1125 = vmatpush.bf16.msra.mxu0 %v1050
        %1126 = vmatpush.bf16.msra.mxu0 %v1049
        %1127 = vmatpush.bf16.msra.mxu0 %v1048
        %1128 = vmatpush.bf16.msra.mxu0 %v1047
        %1129 = vmatmul.bf16.gmra.mxu0 %v897
        %v1130 = vpop.f32.mrf.mxu0
        %v1131 = vadd.f32 %v1118, %v1130
        %v1132 = vpop.f32.mrf.mxu0
        %1133 = vdwg.mxu0
        %1134 = vmatpush.bf16.msra.mxu0 %v1062
        %1135 = vmatpush.bf16.msra.mxu0 %v1061
        %1136 = vmatpush.bf16.msra.mxu0 %v1060
        %1137 = vmatpush.bf16.msra.mxu0 %v1059
        %1138 = vmatpush.bf16.msra.mxu0 %v1058
        %1139 = vmatpush.bf16.msra.mxu0 %v1057
        %1140 = vmatpush.bf16.msra.mxu0 %v1056
        %1141 = vmatpush.bf16.msra.mxu0 %v1055
        %1142 = vmatmul.bf16.gmra.mxu0 %v898
        %v1143 = vpop.f32.mrf.mxu0
        %v1144 = vadd.f32 %v1131, %v1143
        %v1145 = vpop.f32.mrf.mxu0
        %1146 = vdwg.mxu0
        %v1147 = vadd.f32 %v788, %v1144
        %v1148 = vadd.f32 %v1147, %v820
        %v1149 = vmul.f32 %v821, %v809
        %v1150 = vmul.f32 %v815, %v1148
        %v1151 = vadd.f32 %v1149, %v1150
        %v1152 = vmul.f32 %v822, 1.8
        %v1153 = vadd.f32 %v1152, 0.01
        %v1154 = vsub.f32 %v1151, %v1153
        %vm1155 = vcmp.gt.f32.partialorder %v1154, 0.0
        %v1156 = vsel %vm1155, 1, 0
        %v1157 = vcvt.s32.f32 %v1156
        %v1158 = vmul.f32 %v1157, %v1153
        %v1159 = vsub.f32 %v1151, %v1158
        %v1160 = vmul.f32 %v813, %v822
        %v1161 = vmul.f32 %v816, %v1157
        %v1162 = vadd.f32 %v1160, %v1161
        %v1163 = vpack.c.bf16 %v1157, %v1157
        %1164 = vst [vmem:[%s349] sm:$0xff] %v1157
        %v1165 = vld [vmem:[#allocation11] sm:$0xf]
        %v1166 = vld [vmem:[#allocation11 + $0x4] sm:$0xf]
        %v1167 = vld [vmem:[#allocation11 + $0x8] sm:$0xf]
        %v1168 = vld [vmem:[#allocation11 + $0xc] sm:$0xf]
        %v1169 = vld [vmem:[#allocation11 + $0x10] sm:$0xf]
        %v1170 = vld [vmem:[#allocation11 + $0x14] sm:$0xf]
        %v1171 = vld [vmem:[#allocation11 + $0x18] sm:$0xf]
        %v1172 = vld [vmem:[#allocation11 + $0x1c] sm:$0xf]
        %v1173 = vld [vmem:[#allocation11 + $0x20] sm:$0xf]
        %v1174 = vld [vmem:[#allocation11 + $0x24] sm:$0xf]
        %v1175 = vld [vmem:[#allocation11 + $0x28] sm:$0xf]
        %v1176 = vld [vmem:[#allocation11 + $0x2c] sm:$0xf]
        %v1177 = vld [vmem:[#allocation11 + $0x30] sm:$0xf]
        %v1178 = vld [vmem:[#allocation11 + $0x34] sm:$0xf]
        %v1179 = vld [vmem:[#allocation11 + $0x38] sm:$0xf]
        %v1180 = vld [vmem:[#allocation11 + $0x3c] sm:$0xf]
        %v1181 = vld [vmem:[#allocation11 + $0x40] sm:$0xf]
        %v1182 = vld [vmem:[#allocation11 + $0x44] sm:$0xf]
        %v1183 = vld [vmem:[#allocation11 + $0x48] sm:$0xf]
        %v1184 = vld [vmem:[#allocation11 + $0x4c] sm:$0xf]
        %v1185 = vld [vmem:[#allocation11 + $0x50] sm:$0xf]
        %v1186 = vld [vmem:[#allocation11 + $0x54] sm:$0xf]
        %v1187 = vld [vmem:[#allocation11 + $0x58] sm:$0xf]
        %v1188 = vld [vmem:[#allocation11 + $0x5c] sm:$0xf]
        %v1189 = vld [vmem:[#allocation11 + $0x60] sm:$0xf]
        %v1190 = vld [vmem:[#allocation11 + $0x64] sm:$0xf]
        %v1191 = vld [vmem:[#allocation11 + $0x68] sm:$0xf]
        %v1192 = vld [vmem:[#allocation11 + $0x6c] sm:$0xf]
        %v1193 = vld [vmem:[#allocation11 + $0x70] sm:$0xf]
        %v1194 = vld [vmem:[#allocation11 + $0x74] sm:$0xf]
        %v1195 = vld [vmem:[#allocation11 + $0x78] sm:$0xf]
        %v1196 = vld [vmem:[#allocation11 + $0x7c] sm:$0xf]
        %v1197 = vld [vmem:[#allocation11 + $0x80] sm:$0xf]
        %v1198 = vld [vmem:[#allocation11 + $0x84] sm:$0xf]
        %v1199 = vld [vmem:[#allocation11 + $0x88] sm:$0xf]
        %v1200 = vld [vmem:[#allocation11 + $0x8c] sm:$0xf]
        %v1201 = vld [vmem:[#allocation11 + $0x90] sm:$0xf]
        %v1202 = vld [vmem:[#allocation11 + $0x94] sm:$0xf]
        %v1203 = vld [vmem:[#allocation11 + $0x98] sm:$0xf]
        %v1204 = vld [vmem:[#allocation11 + $0x9c] sm:$0xf]
        %v1205 = vld [vmem:[#allocation11 + $0xa0] sm:$0xf]
        %v1206 = vld [vmem:[#allocation11 + $0xa4] sm:$0xf]
        %v1207 = vld [vmem:[#allocation11 + $0xa8] sm:$0xf]
        %v1208 = vld [vmem:[#allocation11 + $0xac] sm:$0xf]
        %v1209 = vld [vmem:[#allocation11 + $0xb0] sm:$0xf]
        %v1210 = vld [vmem:[#allocation11 + $0xb4] sm:$0xf]
        %v1211 = vld [vmem:[#allocation11 + $0xb8] sm:$0xf]
        %v1212 = vld [vmem:[#allocation11 + $0xbc] sm:$0xf]
        %v1213 = vld [vmem:[#allocation11 + $0xc0] sm:$0xf]
        %v1214 = vld [vmem:[#allocation11 + $0xc4] sm:$0xf]
        %v1215 = vld [vmem:[#allocation11 + $0xc8] sm:$0xf]
        %v1216 = vld [vmem:[#allocation11 + $0xcc] sm:$0xf]
        %v1217 = vld [vmem:[#allocation11 + $0xd0] sm:$0xf]
        %v1218 = vld [vmem:[#allocation11 + $0xd4] sm:$0xf]
        %v1219 = vld [vmem:[#allocation11 + $0xd8] sm:$0xf]
        %v1220 = vld [vmem:[#allocation11 + $0xdc] sm:$0xf]
        %v1221 = vld [vmem:[#allocation11 + $0xe0] sm:$0xf]
        %v1222 = vld [vmem:[#allocation11 + $0xe4] sm:$0xf]
        %v1223 = vld [vmem:[#allocation11 + $0xe8] sm:$0xf]
        %v1224 = vld [vmem:[#allocation11 + $0xec] sm:$0xf]
        %v1225 = vld [vmem:[#allocation11 + $0xf0] sm:$0xf]
        %v1226 = vld [vmem:[#allocation11 + $0xf4] sm:$0xf]
        %v1227 = vld [vmem:[#allocation11 + $0xf8] sm:$0xf]
        %v1228 = vld [vmem:[#allocation11 + $0xfc] sm:$0xf]
        %v1293 = vunpack.c.l.b16 %v1165
        %v1294 = vunpack.c.l.b16 %v1166
        %v1295 = vunpack.c.l.b16 %v1167
        %v1296 = vunpack.c.l.b16 %v1168
        %v1297 = vunpack.c.l.b16 %v1169
        %v1298 = vunpack.c.l.b16 %v1170
        %v1299 = vunpack.c.l.b16 %v1171
        %v1300 = vunpack.c.l.b16 %v1172
        %v1301 = vunpack.c.l.b16 %v1173
        %v1302 = vunpack.c.l.b16 %v1174
        %v1303 = vunpack.c.l.b16 %v1175
        %v1304 = vunpack.c.l.b16 %v1176
        %v1305 = vunpack.c.l.b16 %v1177
        %v1306 = vunpack.c.l.b16 %v1178
        %v1307 = vunpack.c.l.b16 %v1179
        %v1308 = vunpack.c.l.b16 %v1180
        %v1309 = vunpack.c.l.b16 %v1181
        %v1310 = vunpack.c.l.b16 %v1182
        %v1311 = vunpack.c.l.b16 %v1183
        %v1312 = vunpack.c.l.b16 %v1184
        %v1313 = vunpack.c.l.b16 %v1185
        %v1314 = vunpack.c.l.b16 %v1186
        %v1315 = vunpack.c.l.b16 %v1187
        %v1316 = vunpack.c.l.b16 %v1188
        %v1317 = vunpack.c.l.b16 %v1189
        %v1318 = vunpack.c.l.b16 %v1190
        %v1319 = vunpack.c.l.b16 %v1191
        %v1320 = vunpack.c.l.b16 %v1192
        %v1321 = vunpack.c.l.b16 %v1193
        %v1322 = vunpack.c.l.b16 %v1194
        %v1323 = vunpack.c.l.b16 %v1195
        %v1324 = vunpack.c.l.b16 %v1196
        %v1325 = vunpack.c.l.b16 %v1197
        %v1326 = vunpack.c.l.b16 %v1198
        %v1327 = vunpack.c.l.b16 %v1199
        %v1328 = vunpack.c.l.b16 %v1200
        %v1329 = vunpack.c.l.b16 %v1201
        %v1330 = vunpack.c.l.b16 %v1202
        %v1331 = vunpack.c.l.b16 %v1203
        %v1332 = vunpack.c.l.b16 %v1204
        %v1333 = vunpack.c.l.b16 %v1205
        %v1334 = vunpack.c.l.b16 %v1206
        %v1335 = vunpack.c.l.b16 %v1207
        %v1336 = vunpack.c.l.b16 %v1208
        %v1337 = vunpack.c.l.b16 %v1209
        %v1338 = vunpack.c.l.b16 %v1210
        %v1339 = vunpack.c.l.b16 %v1211
        %v1340 = vunpack.c.l.b16 %v1212
        %v1341 = vunpack.c.l.b16 %v1213
        %v1342 = vunpack.c.l.b16 %v1214
        %v1343 = vunpack.c.l.b16 %v1215
        %v1344 = vunpack.c.l.b16 %v1216
        %v1345 = vunpack.c.l.b16 %v1217
        %v1346 = vunpack.c.l.b16 %v1218
        %v1347 = vunpack.c.l.b16 %v1219
        %v1348 = vunpack.c.l.b16 %v1220
        %v1349 = vunpack.c.l.b16 %v1221
        %v1350 = vunpack.c.l.b16 %v1222
        %v1351 = vunpack.c.l.b16 %v1223
        %v1352 = vunpack.c.l.b16 %v1224
        %v1353 = vunpack.c.l.b16 %v1225
        %v1354 = vunpack.c.l.b16 %v1226
        %v1355 = vunpack.c.l.b16 %v1227
        %v1356 = vunpack.c.l.b16 %v1228
        %v1357 = vpack.c.b16 %v1294, %v1293
        %v1358 = vpack.c.b16 %v1296, %v1295
        %v1359 = vpack.c.b16 %v1298, %v1297
        %v1360 = vpack.c.b16 %v1300, %v1299
        %v1361 = vpack.c.b16 %v1302, %v1301
        %v1362 = vpack.c.b16 %v1304, %v1303
        %v1363 = vpack.c.b16 %v1306, %v1305
        %v1364 = vpack.c.b16 %v1308, %v1307
        %v1365 = vpack.c.b16 %v1310, %v1309
        %v1366 = vpack.c.b16 %v1312, %v1311
        %v1367 = vpack.c.b16 %v1314, %v1313
        %v1368 = vpack.c.b16 %v1316, %v1315
        %v1369 = vpack.c.b16 %v1318, %v1317
        %v1370 = vpack.c.b16 %v1320, %v1319
        %v1371 = vpack.c.b16 %v1322, %v1321
        %v1372 = vpack.c.b16 %v1324, %v1323
        %v1373 = vpack.c.b16 %v1326, %v1325
        %v1374 = vpack.c.b16 %v1328, %v1327
        %v1375 = vpack.c.b16 %v1330, %v1329
        %v1376 = vpack.c.b16 %v1332, %v1331
        %v1377 = vpack.c.b16 %v1334, %v1333
        %v1378 = vpack.c.b16 %v1336, %v1335
        %v1379 = vpack.c.b16 %v1338, %v1337
        %v1380 = vpack.c.b16 %v1340, %v1339
        %v1381 = vpack.c.b16 %v1342, %v1341
        %v1382 = vpack.c.b16 %v1344, %v1343
        %v1383 = vpack.c.b16 %v1346, %v1345
        %v1384 = vpack.c.b16 %v1348, %v1347
        %v1385 = vpack.c.b16 %v1350, %v1349
        %v1386 = vpack.c.b16 %v1352, %v1351
        %v1387 = vpack.c.b16 %v1354, %v1353
        %v1388 = vpack.c.b16 %v1356, %v1355
        %1421 = vmatpush.bf16.msra.mxu0 %v1364
        %1422 = vmatpush.bf16.msra.mxu0 %v1363
        %1423 = vmatpush.bf16.msra.mxu0 %v1362
        %1424 = vmatpush.bf16.msra.mxu0 %v1361
        %1425 = vmatpush.bf16.msra.mxu0 %v1360
        %1426 = vmatpush.bf16.msra.mxu0 %v1359
        %1427 = vmatpush.bf16.msra.mxu0 %v1358
        %1428 = vmatpush.bf16.msra.mxu0 %v1357
        %1429 = vmatmul.bf16.gmra.mxu0 %v1163
        %v1430 = vpop.f32.mrf.mxu0
        %v1431 = vadd.f32 0.0, %v1430
        %v1432 = vpop.f32.mrf.mxu0
        %1433 = vdwg.mxu0
        %1434 = vmatpush.bf16.msra.mxu0 %v1372
        %1435 = vmatpush.bf16.msra.mxu0 %v1371
        %1436 = vmatpush.bf16.msra.mxu0 %v1370
        %1437 = vmatpush.bf16.msra.mxu0 %v1369
        %1438 = vmatpush.bf16.msra.mxu0 %v1368
        %1439 = vmatpush.bf16.msra.mxu0 %v1367
        %1440 = vmatpush.bf16.msra.mxu0 %v1366
        %1441 = vmatpush.bf16.msra.mxu0 %v1365
        %1442 = vmatmul.bf16.gmra.mxu0 %v895
        %v1443 = vpop.f32.mrf.mxu0
        %v1444 = vadd.f32 %v1431, %v1443
        %v1445 = vpop.f32.mrf.mxu0
        %1446 = vdwg.mxu0
        %1447 = vmatpush.bf16.msra.mxu0 %v1380
        %1448 = vmatpush.bf16.msra.mxu0 %v1379
        %1449 = vmatpush.bf16.msra.mxu0 %v1378
        %1450 = vmatpush.bf16.msra.mxu0 %v1377
        %1451 = vmatpush.bf16.msra.mxu0 %v1376
        %1452 = vmatpush.bf16.msra.mxu0 %v1375
        %1453 = vmatpush.bf16.msra.mxu0 %v1374
        %1454 = vmatpush.bf16.msra.mxu0 %v1373
        %1455 = vmatmul.bf16.gmra.mxu0 %v896
        %v1456 = vpop.f32.mrf.mxu0
        %v1457 = vadd.f32 %v1444, %v1456
        %v1458 = vpop.f32.mrf.mxu0
        %1459 = vdwg.mxu0
        %1460 = vmatpush.bf16.msra.mxu0 %v1388
        %1461 = vmatpush.bf16.msra.mxu0 %v1387
        %1462 = vmatpush.bf16.msra.mxu0 %v1386
        %1463 = vmatpush.bf16.msra.mxu0 %v1385
        %1464 = vmatpush.bf16.msra.mxu0 %v1384
        %1465 = vmatpush.bf16.msra.mxu0 %v1383
        %1466 = vmatpush.bf16.msra.mxu0 %v1382
        %1467 = vmatpush.bf16.msra.mxu0 %v1381
        %1468 = vmatmul.bf16.gmra.mxu0 %v897
        %v1469 = vpop.f32.mrf.mxu0
        %v1470 = vadd.f32 %v1457, %v1469
        %v1471 = vpop.f32.mrf.mxu0
        %1472 = vdwg.mxu0
        %v1473 = vadd.f32 %v789, %v1470
        %v1474 = vadd.f32 %v1473, %v805
        %v1475 = vmul.f32 %v1159, %v809
        %v1476 = vmul.f32 %v815, %v1474
        %v1477 = vadd.f32 %v1475, %v1476
        %v1478 = vmul.f32 %v1162, 1.8
        %v1479 = vadd.f32 %v1478, 0.01
        %v1480 = vsub.f32 %v1477, %v1479
        %vm1481 = vcmp.gt.f32.partialorder %v1480, 0.0
        %v1482 = vsel %vm1481, 1, 0
        %v1483 = vcvt.s32.f32 %v1482
        %v1484 = vmul.f32 %v1483, %v1479
        %v1485 = vsub.f32 %v1477, %v1484
        %v1486 = vmul.f32 %v813, %v1162
        %v1487 = vmul.f32 %v816, %v1483
        %v1488 = vadd.f32 %v1486, %v1487
        %v1489 = vpack.c.bf16 %v1483, %v1483
        %s1490 = scalar_lea.vmem %s349, 8 [#allocation12]
        %1491 = vst [vmem:[%s1490] sm:$0xff] %v1483
        %v1492 = vld [vmem:[#allocation11] sm:$0xf]
        %v1493 = vld [vmem:[#allocation11 + $0x4] sm:$0xf]
        %v1494 = vld [vmem:[#allocation11 + $0x8] sm:$0xf]
        %v1495 = vld [vmem:[#allocation11 + $0xc] sm:$0xf]
        %v1496 = vld [vmem:[#allocation11 + $0x10] sm:$0xf]
        %v1497 = vld [vmem:[#allocation11 + $0x14] sm:$0xf]
        %v1498 = vld [vmem:[#allocation11 + $0x18] sm:$0xf]
        %v1499 = vld [vmem:[#allocation11 + $0x1c] sm:$0xf]
        %v1500 = vld [vmem:[#allocation11 + $0x20] sm:$0xf]
        %v1501 = vld [vmem:[#allocation11 + $0x24] sm:$0xf]
        %v1502 = vld [vmem:[#allocation11 + $0x28] sm:$0xf]
        %v1503 = vld [vmem:[#allocation11 + $0x2c] sm:$0xf]
        %v1504 = vld [vmem:[#allocation11 + $0x30] sm:$0xf]
        %v1505 = vld [vmem:[#allocation11 + $0x34] sm:$0xf]
        %v1506 = vld [vmem:[#allocation11 + $0x38] sm:$0xf]
        %v1507 = vld [vmem:[#allocation11 + $0x3c] sm:$0xf]
        %v1508 = vld [vmem:[#allocation11 + $0x40] sm:$0xf]
        %v1509 = vld [vmem:[#allocation11 + $0x44] sm:$0xf]
        %v1510 = vld [vmem:[#allocation11 + $0x48] sm:$0xf]
        %v1511 = vld [vmem:[#allocation11 + $0x4c] sm:$0xf]
        %v1512 = vld [vmem:[#allocation11 + $0x50] sm:$0xf]
        %v1513 = vld [vmem:[#allocation11 + $0x54] sm:$0xf]
        %v1514 = vld [vmem:[#allocation11 + $0x58] sm:$0xf]
        %v1515 = vld [vmem:[#allocation11 + $0x5c] sm:$0xf]
        %v1516 = vld [vmem:[#allocation11 + $0x60] sm:$0xf]
        %v1517 = vld [vmem:[#allocation11 + $0x64] sm:$0xf]
        %v1518 = vld [vmem:[#allocation11 + $0x68] sm:$0xf]
        %v1519 = vld [vmem:[#allocation11 + $0x6c] sm:$0xf]
        %v1520 = vld [vmem:[#allocation11 + $0x70] sm:$0xf]
        %v1521 = vld [vmem:[#allocation11 + $0x74] sm:$0xf]
        %v1522 = vld [vmem:[#allocation11 + $0x78] sm:$0xf]
        %v1523 = vld [vmem:[#allocation11 + $0x7c] sm:$0xf]
        %v1524 = vld [vmem:[#allocation11 + $0x80] sm:$0xf]
        %v1525 = vld [vmem:[#allocation11 + $0x84] sm:$0xf]
        %v1526 = vld [vmem:[#allocation11 + $0x88] sm:$0xf]
        %v1527 = vld [vmem:[#allocation11 + $0x8c] sm:$0xf]
        %v1528 = vld [vmem:[#allocation11 + $0x90] sm:$0xf]
        %v1529 = vld [vmem:[#allocation11 + $0x94] sm:$0xf]
        %v1530 = vld [vmem:[#allocation11 + $0x98] sm:$0xf]
        %v1531 = vld [vmem:[#allocation11 + $0x9c] sm:$0xf]
        %v1532 = vld [vmem:[#allocation11 + $0xa0] sm:$0xf]
        %v1533 = vld [vmem:[#allocation11 + $0xa4] sm:$0xf]
        %v1534 = vld [vmem:[#allocation11 + $0xa8] sm:$0xf]
        %v1535 = vld [vmem:[#allocation11 + $0xac] sm:$0xf]
        %v1536 = vld [vmem:[#allocation11 + $0xb0] sm:$0xf]
        %v1537 = vld [vmem:[#allocation11 + $0xb4] sm:$0xf]
        %v1538 = vld [vmem:[#allocation11 + $0xb8] sm:$0xf]
        %v1539 = vld [vmem:[#allocation11 + $0xbc] sm:$0xf]
        %v1540 = vld [vmem:[#allocation11 + $0xc0] sm:$0xf]
        %v1541 = vld [vmem:[#allocation11 + $0xc4] sm:$0xf]
        %v1542 = vld [vmem:[#allocation11 + $0xc8] sm:$0xf]
        %v1543 = vld [vmem:[#allocation11 + $0xcc] sm:$0xf]
        %v1544 = vld [vmem:[#allocation11 + $0xd0] sm:$0xf]
        %v1545 = vld [vmem:[#allocation11 + $0xd4] sm:$0xf]
        %v1546 = vld [vmem:[#allocation11 + $0xd8] sm:$0xf]
        %v1547 = vld [vmem:[#allocation11 + $0xdc] sm:$0xf]
        %v1548 = vld [vmem:[#allocation11 + $0xe0] sm:$0xf]
        %v1549 = vld [vmem:[#allocation11 + $0xe4] sm:$0xf]
        %v1550 = vld [vmem:[#allocation11 + $0xe8] sm:$0xf]
        %v1551 = vld [vmem:[#allocation11 + $0xec] sm:$0xf]
        %v1552 = vld [vmem:[#allocation11 + $0xf0] sm:$0xf]
        %v1553 = vld [vmem:[#allocation11 + $0xf4] sm:$0xf]
        %v1554 = vld [vmem:[#allocation11 + $0xf8] sm:$0xf]
        %v1555 = vld [vmem:[#allocation11 + $0xfc] sm:$0xf]
        %v1620 = vunpack.c.l.b16 %v1492
        %v1621 = vunpack.c.l.b16 %v1493
        %v1622 = vunpack.c.l.b16 %v1494
        %v1623 = vunpack.c.l.b16 %v1495
        %v1624 = vunpack.c.l.b16 %v1496
        %v1625 = vunpack.c.l.b16 %v1497
        %v1626 = vunpack.c.l.b16 %v1498
        %v1627 = vunpack.c.l.b16 %v1499
        %v1628 = vunpack.c.l.b16 %v1500
        %v1629 = vunpack.c.l.b16 %v1501
        %v1630 = vunpack.c.l.b16 %v1502
        %v1631 = vunpack.c.l.b16 %v1503
        %v1632 = vunpack.c.l.b16 %v1504
        %v1633 = vunpack.c.l.b16 %v1505
        %v1634 = vunpack.c.l.b16 %v1506
        %v1635 = vunpack.c.l.b16 %v1507
        %v1636 = vunpack.c.l.b16 %v1508
        %v1637 = vunpack.c.l.b16 %v1509
        %v1638 = vunpack.c.l.b16 %v1510
        %v1639 = vunpack.c.l.b16 %v1511
        %v1640 = vunpack.c.l.b16 %v1512
        %v1641 = vunpack.c.l.b16 %v1513
        %v1642 = vunpack.c.l.b16 %v1514
        %v1643 = vunpack.c.l.b16 %v1515
        %v1644 = vunpack.c.l.b16 %v1516
        %v1645 = vunpack.c.l.b16 %v1517
        %v1646 = vunpack.c.l.b16 %v1518
        %v1647 = vunpack.c.l.b16 %v1519
        %v1648 = vunpack.c.l.b16 %v1520
        %v1649 = vunpack.c.l.b16 %v1521
        %v1650 = vunpack.c.l.b16 %v1522
        %v1651 = vunpack.c.l.b16 %v1523
        %v1652 = vunpack.c.l.b16 %v1524
        %v1653 = vunpack.c.l.b16 %v1525
        %v1654 = vunpack.c.l.b16 %v1526
        %v1655 = vunpack.c.l.b16 %v1527
        %v1656 = vunpack.c.l.b16 %v1528
        %v1657 = vunpack.c.l.b16 %v1529
        %v1658 = vunpack.c.l.b16 %v1530
        %v1659 = vunpack.c.l.b16 %v1531
        %v1660 = vunpack.c.l.b16 %v1532
        %v1661 = vunpack.c.l.b16 %v1533
        %v1662 = vunpack.c.l.b16 %v1534
        %v1663 = vunpack.c.l.b16 %v1535
        %v1664 = vunpack.c.l.b16 %v1536
        %v1665 = vunpack.c.l.b16 %v1537
        %v1666 = vunpack.c.l.b16 %v1538
        %v1667 = vunpack.c.l.b16 %v1539
        %v1668 = vunpack.c.l.b16 %v1540
        %v1669 = vunpack.c.l.b16 %v1541
        %v1670 = vunpack.c.l.b16 %v1542
        %v1671 = vunpack.c.l.b16 %v1543
        %v1672 = vunpack.c.l.b16 %v1544
        %v1673 = vunpack.c.l.b16 %v1545
        %v1674 = vunpack.c.l.b16 %v1546
        %v1675 = vunpack.c.l.b16 %v1547
        %v1676 = vunpack.c.l.b16 %v1548
        %v1677 = vunpack.c.l.b16 %v1549
        %v1678 = vunpack.c.l.b16 %v1550
        %v1679 = vunpack.c.l.b16 %v1551
        %v1680 = vunpack.c.l.b16 %v1552
        %v1681 = vunpack.c.l.b16 %v1553
        %v1682 = vunpack.c.l.b16 %v1554
        %v1683 = vunpack.c.l.b16 %v1555
        %v1684 = vpack.c.b16 %v1621, %v1620
        %v1685 = vpack.c.b16 %v1623, %v1622
        %v1686 = vpack.c.b16 %v1625, %v1624
        %v1687 = vpack.c.b16 %v1627, %v1626
        %v1688 = vpack.c.b16 %v1629, %v1628
        %v1689 = vpack.c.b16 %v1631, %v1630
        %v1690 = vpack.c.b16 %v1633, %v1632
        %v1691 = vpack.c.b16 %v1635, %v1634
        %v1692 = vpack.c.b16 %v1637, %v1636
        %v1693 = vpack.c.b16 %v1639, %v1638
        %v1694 = vpack.c.b16 %v1641, %v1640
        %v1695 = vpack.c.b16 %v1643, %v1642
        %v1696 = vpack.c.b16 %v1645, %v1644
        %v1697 = vpack.c.b16 %v1647, %v1646
        %v1698 = vpack.c.b16 %v1649, %v1648
        %v1699 = vpack.c.b16 %v1651, %v1650
        %v1700 = vpack.c.b16 %v1653, %v1652
        %v1701 = vpack.c.b16 %v1655, %v1654
        %v1702 = vpack.c.b16 %v1657, %v1656
        %v1703 = vpack.c.b16 %v1659, %v1658
        %v1704 = vpack.c.b16 %v1661, %v1660
        %v1705 = vpack.c.b16 %v1663, %v1662
        %v1706 = vpack.c.b16 %v1665, %v1664
        %v1707 = vpack.c.b16 %v1667, %v1666
        %v1708 = vpack.c.b16 %v1669, %v1668
        %v1709 = vpack.c.b16 %v1671, %v1670
        %v1710 = vpack.c.b16 %v1673, %v1672
        %v1711 = vpack.c.b16 %v1675, %v1674
        %v1712 = vpack.c.b16 %v1677, %v1676
        %v1713 = vpack.c.b16 %v1679, %v1678
        %v1714 = vpack.c.b16 %v1681, %v1680
        %v1715 = vpack.c.b16 %v1683, %v1682
        %1748 = vmatpush.bf16.msra.mxu0 %v1691
        %1749 = vmatpush.bf16.msra.mxu0 %v1690
        %1750 = vmatpush.bf16.msra.mxu0 %v1689
        %1751 = vmatpush.bf16.msra.mxu0 %v1688
        %1752 = vmatpush.bf16.msra.mxu0 %v1687
        %1753 = vmatpush.bf16.msra.mxu0 %v1686
        %1754 = vmatpush.bf16.msra.mxu0 %v1685
        %1755 = vmatpush.bf16.msra.mxu0 %v1684
        %1756 = vmatmul.bf16.gmra.mxu0 %v1489
        %v1757 = vpop.f32.mrf.mxu0
        %v1758 = vadd.f32 0.0, %v1757
        %v1759 = vpop.f32.mrf.mxu0
        %1760 = vdwg.mxu0
        %1761 = vmatpush.bf16.msra.mxu0 %v1699
        %1762 = vmatpush.bf16.msra.mxu0 %v1698
        %1763 = vmatpush.bf16.msra.mxu0 %v1697
        %1764 = vmatpush.bf16.msra.mxu0 %v1696
        %1765 = vmatpush.bf16.msra.mxu0 %v1695
        %1766 = vmatpush.bf16.msra.mxu0 %v1694
        %1767 = vmatpush.bf16.msra.mxu0 %v1693
        %1768 = vmatpush.bf16.msra.mxu0 %v1692
        %1769 = vmatmul.bf16.gmra.mxu0 %v1163
        %v1770 = vpop.f32.mrf.mxu0
        %v1771 = vadd.f32 %v1758, %v1770
        %v1772 = vpop.f32.mrf.mxu0
        %1773 = vdwg.mxu0
        %1774 = vmatpush.bf16.msra.mxu0 %v1707
        %1775 = vmatpush.bf16.msra.mxu0 %v1706
        %1776 = vmatpush.bf16.msra.mxu0 %v1705
        %1777 = vmatpush.bf16.msra.mxu0 %v1704
        %1778 = vmatpush.bf16.msra.mxu0 %v1703
        %1779 = vmatpush.bf16.msra.mxu0 %v1702
        %1780 = vmatpush.bf16.msra.mxu0 %v1701
        %1781 = vmatpush.bf16.msra.mxu0 %v1700
        %1782 = vmatmul.bf16.gmra.mxu0 %v895
        %v1783 = vpop.f32.mrf.mxu0
        %v1784 = vadd.f32 %v1771, %v1783
        %v1785 = vpop.f32.mrf.mxu0
        %1786 = vdwg.mxu0
        %1787 = vmatpush.bf16.msra.mxu0 %v1715
        %1788 = vmatpush.bf16.msra.mxu0 %v1714
        %1789 = vmatpush.bf16.msra.mxu0 %v1713
        %1790 = vmatpush.bf16.msra.mxu0 %v1712
        %1791 = vmatpush.bf16.msra.mxu0 %v1711
        %1792 = vmatpush.bf16.msra.mxu0 %v1710
        %1793 = vmatpush.bf16.msra.mxu0 %v1709
        %1794 = vmatpush.bf16.msra.mxu0 %v1708
        %1795 = vmatmul.bf16.gmra.mxu0 %v896
        %v1796 = vpop.f32.mrf.mxu0
        %v1797 = vadd.f32 %v1784, %v1796
        %v1798 = vpop.f32.mrf.mxu0
        %1799 = vdwg.mxu0
        %v1800 = vadd.f32 %v790, %v1797
        %v1801 = vadd.f32 %v1800, %v805
        %v1802 = vmul.f32 %v1485, %v809
        %v1803 = vmul.f32 %v815, %v1801
        %v1804 = vadd.f32 %v1802, %v1803
        %v1805 = vmul.f32 %v1488, 1.8
        %v1806 = vadd.f32 %v1805, 0.01
        %v1807 = vsub.f32 %v1804, %v1806
        %vm1808 = vcmp.gt.f32.partialorder %v1807, 0.0
        %v1809 = vsel %vm1808, 1, 0
        %v1810 = vcvt.s32.f32 %v1809
        %v1811 = vmul.f32 %v1810, %v1806
        %v1812 = vsub.f32 %v1804, %v1811
        %v1813 = vmul.f32 %v813, %v1488
        %v1814 = vmul.f32 %v816, %v1810
        %v1815 = vadd.f32 %v1813, %v1814
        %v1816 = vpack.c.bf16 %v1810, %v1810
        %s1817 = scalar_lea.vmem %s349, 16 [#allocation12]
        %1818 = vst [vmem:[%s1817] sm:$0xff] %v1810
        %v1819 = vld [vmem:[#allocation11] sm:$0xf]
        %v1820 = vld [vmem:[#allocation11 + $0x4] sm:$0xf]
        %v1821 = vld [vmem:[#allocation11 + $0x8] sm:$0xf]
        %v1822 = vld [vmem:[#allocation11 + $0xc] sm:$0xf]
        %v1823 = vld [vmem:[#allocation11 + $0x10] sm:$0xf]
        %v1824 = vld [vmem:[#allocation11 + $0x14] sm:$0xf]
        %v1825 = vld [vmem:[#allocation11 + $0x18] sm:$0xf]
        %v1826 = vld [vmem:[#allocation11 + $0x1c] sm:$0xf]
        %v1827 = vld [vmem:[#allocation11 + $0x20] sm:$0xf]
        %v1828 = vld [vmem:[#allocation11 + $0x24] sm:$0xf]
        %v1829 = vld [vmem:[#allocation11 + $0x28] sm:$0xf]
        %v1830 = vld [vmem:[#allocation11 + $0x2c] sm:$0xf]
        %v1831 = vld [vmem:[#allocation11 + $0x30] sm:$0xf]
        %v1832 = vld [vmem:[#allocation11 + $0x34] sm:$0xf]
        %v1833 = vld [vmem:[#allocation11 + $0x38] sm:$0xf]
        %v1834 = vld [vmem:[#allocation11 + $0x3c] sm:$0xf]
        %v1835 = vld [vmem:[#allocation11 + $0x40] sm:$0xf]
        %v1836 = vld [vmem:[#allocation11 + $0x44] sm:$0xf]
        %v1837 = vld [vmem:[#allocation11 + $0x48] sm:$0xf]
        %v1838 = vld [vmem:[#allocation11 + $0x4c] sm:$0xf]
        %v1839 = vld [vmem:[#allocation11 + $0x50] sm:$0xf]
        %v1840 = vld [vmem:[#allocation11 + $0x54] sm:$0xf]
        %v1841 = vld [vmem:[#allocation11 + $0x58] sm:$0xf]
        %v1842 = vld [vmem:[#allocation11 + $0x5c] sm:$0xf]
        %v1843 = vld [vmem:[#allocation11 + $0x60] sm:$0xf]
        %v1844 = vld [vmem:[#allocation11 + $0x64] sm:$0xf]
        %v1845 = vld [vmem:[#allocation11 + $0x68] sm:$0xf]
        %v1846 = vld [vmem:[#allocation11 + $0x6c] sm:$0xf]
        %v1847 = vld [vmem:[#allocation11 + $0x70] sm:$0xf]
        %v1848 = vld [vmem:[#allocation11 + $0x74] sm:$0xf]
        %v1849 = vld [vmem:[#allocation11 + $0x78] sm:$0xf]
        %v1850 = vld [vmem:[#allocation11 + $0x7c] sm:$0xf]
        %v1851 = vld [vmem:[#allocation11 + $0x80] sm:$0xf]
        %v1852 = vld [vmem:[#allocation11 + $0x84] sm:$0xf]
        %v1853 = vld [vmem:[#allocation11 + $0x88] sm:$0xf]
        %v1854 = vld [vmem:[#allocation11 + $0x8c] sm:$0xf]
        %v1855 = vld [vmem:[#allocation11 + $0x90] sm:$0xf]
        %v1856 = vld [vmem:[#allocation11 + $0x94] sm:$0xf]
        %v1857 = vld [vmem:[#allocation11 + $0x98] sm:$0xf]
        %v1858 = vld [vmem:[#allocation11 + $0x9c] sm:$0xf]
        %v1859 = vld [vmem:[#allocation11 + $0xa0] sm:$0xf]
        %v1860 = vld [vmem:[#allocation11 + $0xa4] sm:$0xf]
        %v1861 = vld [vmem:[#allocation11 + $0xa8] sm:$0xf]
        %v1862 = vld [vmem:[#allocation11 + $0xac] sm:$0xf]
        %v1863 = vld [vmem:[#allocation11 + $0xb0] sm:$0xf]
        %v1864 = vld [vmem:[#allocation11 + $0xb4] sm:$0xf]
        %v1865 = vld [vmem:[#allocation11 + $0xb8] sm:$0xf]
        %v1866 = vld [vmem:[#allocation11 + $0xbc] sm:$0xf]
        %v1867 = vld [vmem:[#allocation11 + $0xc0] sm:$0xf]
        %v1868 = vld [vmem:[#allocation11 + $0xc4] sm:$0xf]
        %v1869 = vld [vmem:[#allocation11 + $0xc8] sm:$0xf]
        %v1870 = vld [vmem:[#allocation11 + $0xcc] sm:$0xf]
        %v1871 = vld [vmem:[#allocation11 + $0xd0] sm:$0xf]
        %v1872 = vld [vmem:[#allocation11 + $0xd4] sm:$0xf]
        %v1873 = vld [vmem:[#allocation11 + $0xd8] sm:$0xf]
        %v1874 = vld [vmem:[#allocation11 + $0xdc] sm:$0xf]
        %v1875 = vld [vmem:[#allocation11 + $0xe0] sm:$0xf]
        %v1876 = vld [vmem:[#allocation11 + $0xe4] sm:$0xf]
        %v1877 = vld [vmem:[#allocation11 + $0xe8] sm:$0xf]
        %v1878 = vld [vmem:[#allocation11 + $0xec] sm:$0xf]
        %v1879 = vld [vmem:[#allocation11 + $0xf0] sm:$0xf]
        %v1880 = vld [vmem:[#allocation11 + $0xf4] sm:$0xf]
        %v1881 = vld [vmem:[#allocation11 + $0xf8] sm:$0xf]
        %v1882 = vld [vmem:[#allocation11 + $0xfc] sm:$0xf]
        %v1947 = vunpack.c.l.b16 %v1819
        %v1948 = vunpack.c.l.b16 %v1820
        %v1949 = vunpack.c.l.b16 %v1821
        %v1950 = vunpack.c.l.b16 %v1822
        %v1951 = vunpack.c.l.b16 %v1823
        %v1952 = vunpack.c.l.b16 %v1824
        %v1953 = vunpack.c.l.b16 %v1825
        %v1954 = vunpack.c.l.b16 %v1826
        %v1955 = vunpack.c.l.b16 %v1827
        %v1956 = vunpack.c.l.b16 %v1828
        %v1957 = vunpack.c.l.b16 %v1829
        %v1958 = vunpack.c.l.b16 %v1830
        %v1959 = vunpack.c.l.b16 %v1831
        %v1960 = vunpack.c.l.b16 %v1832
        %v1961 = vunpack.c.l.b16 %v1833
        %v1962 = vunpack.c.l.b16 %v1834
        %v1963 = vunpack.c.l.b16 %v1835
        %v1964 = vunpack.c.l.b16 %v1836
        %v1965 = vunpack.c.l.b16 %v1837
        %v1966 = vunpack.c.l.b16 %v1838
        %v1967 = vunpack.c.l.b16 %v1839
        %v1968 = vunpack.c.l.b16 %v1840
        %v1969 = vunpack.c.l.b16 %v1841
        %v1970 = vunpack.c.l.b16 %v1842
        %v1971 = vunpack.c.l.b16 %v1843
        %v1972 = vunpack.c.l.b16 %v1844
        %v1973 = vunpack.c.l.b16 %v1845
        %v1974 = vunpack.c.l.b16 %v1846
        %v1975 = vunpack.c.l.b16 %v1847
        %v1976 = vunpack.c.l.b16 %v1848
        %v1977 = vunpack.c.l.b16 %v1849
        %v1978 = vunpack.c.l.b16 %v1850
        %v1979 = vunpack.c.l.b16 %v1851
        %v1980 = vunpack.c.l.b16 %v1852
        %v1981 = vunpack.c.l.b16 %v1853
        %v1982 = vunpack.c.l.b16 %v1854
        %v1983 = vunpack.c.l.b16 %v1855
        %v1984 = vunpack.c.l.b16 %v1856
        %v1985 = vunpack.c.l.b16 %v1857
        %v1986 = vunpack.c.l.b16 %v1858
        %v1987 = vunpack.c.l.b16 %v1859
        %v1988 = vunpack.c.l.b16 %v1860
        %v1989 = vunpack.c.l.b16 %v1861
        %v1990 = vunpack.c.l.b16 %v1862
        %v1991 = vunpack.c.l.b16 %v1863
        %v1992 = vunpack.c.l.b16 %v1864
        %v1993 = vunpack.c.l.b16 %v1865
        %v1994 = vunpack.c.l.b16 %v1866
        %v1995 = vunpack.c.l.b16 %v1867
        %v1996 = vunpack.c.l.b16 %v1868
        %v1997 = vunpack.c.l.b16 %v1869
        %v1998 = vunpack.c.l.b16 %v1870
        %v1999 = vunpack.c.l.b16 %v1871
        %v2000 = vunpack.c.l.b16 %v1872
        %v2001 = vunpack.c.l.b16 %v1873
        %v2002 = vunpack.c.l.b16 %v1874
        %v2003 = vunpack.c.l.b16 %v1875
        %v2004 = vunpack.c.l.b16 %v1876
        %v2005 = vunpack.c.l.b16 %v1877
        %v2006 = vunpack.c.l.b16 %v1878
        %v2007 = vunpack.c.l.b16 %v1879
        %v2008 = vunpack.c.l.b16 %v1880
        %v2009 = vunpack.c.l.b16 %v1881
        %v2010 = vunpack.c.l.b16 %v1882
        %v2011 = vpack.c.b16 %v1948, %v1947
        %v2012 = vpack.c.b16 %v1950, %v1949
        %v2013 = vpack.c.b16 %v1952, %v1951
        %v2014 = vpack.c.b16 %v1954, %v1953
        %v2015 = vpack.c.b16 %v1956, %v1955
        %v2016 = vpack.c.b16 %v1958, %v1957
        %v2017 = vpack.c.b16 %v1960, %v1959
        %v2018 = vpack.c.b16 %v1962, %v1961
        %v2019 = vpack.c.b16 %v1964, %v1963
        %v2020 = vpack.c.b16 %v1966, %v1965
        %v2021 = vpack.c.b16 %v1968, %v1967
        %v2022 = vpack.c.b16 %v1970, %v1969
        %v2023 = vpack.c.b16 %v1972, %v1971
        %v2024 = vpack.c.b16 %v1974, %v1973
        %v2025 = vpack.c.b16 %v1976, %v1975
        %v2026 = vpack.c.b16 %v1978, %v1977
        %v2027 = vpack.c.b16 %v1980, %v1979
        %v2028 = vpack.c.b16 %v1982, %v1981
        %v2029 = vpack.c.b16 %v1984, %v1983
        %v2030 = vpack.c.b16 %v1986, %v1985
        %v2031 = vpack.c.b16 %v1988, %v1987
        %v2032 = vpack.c.b16 %v1990, %v1989
        %v2033 = vpack.c.b16 %v1992, %v1991
        %v2034 = vpack.c.b16 %v1994, %v1993
        %v2035 = vpack.c.b16 %v1996, %v1995
        %v2036 = vpack.c.b16 %v1998, %v1997
        %v2037 = vpack.c.b16 %v2000, %v1999
        %v2038 = vpack.c.b16 %v2002, %v2001
        %v2039 = vpack.c.b16 %v2004, %v2003
        %v2040 = vpack.c.b16 %v2006, %v2005
        %v2041 = vpack.c.b16 %v2008, %v2007
        %v2042 = vpack.c.b16 %v2010, %v2009
        %2075 = vmatpush.bf16.msra.mxu0 %v2018
        %2076 = vmatpush.bf16.msra.mxu0 %v2017
        %2077 = vmatpush.bf16.msra.mxu0 %v2016
        %2078 = vmatpush.bf16.msra.mxu0 %v2015
        %2079 = vmatpush.bf16.msra.mxu0 %v2014
        %2080 = vmatpush.bf16.msra.mxu0 %v2013
        %2081 = vmatpush.bf16.msra.mxu0 %v2012
        %2082 = vmatpush.bf16.msra.mxu0 %v2011
        %2083 = vmatmul.bf16.gmra.mxu0 %v1816
        %v2084 = vpop.f32.mrf.mxu0
        %v2085 = vadd.f32 0.0, %v2084
        %v2086 = vpop.f32.mrf.mxu0
        %2087 = vdwg.mxu0
        %2088 = vmatpush.bf16.msra.mxu0 %v2026
        %2089 = vmatpush.bf16.msra.mxu0 %v2025
        %2090 = vmatpush.bf16.msra.mxu0 %v2024
        %2091 = vmatpush.bf16.msra.mxu0 %v2023
        %2092 = vmatpush.bf16.msra.mxu0 %v2022
        %2093 = vmatpush.bf16.msra.mxu0 %v2021
        %2094 = vmatpush.bf16.msra.mxu0 %v2020
        %2095 = vmatpush.bf16.msra.mxu0 %v2019
        %2096 = vmatmul.bf16.gmra.mxu0 %v1489
        %v2097 = vpop.f32.mrf.mxu0
        %v2098 = vadd.f32 %v2085, %v2097
        %v2099 = vpop.f32.mrf.mxu0
        %2100 = vdwg.mxu0
        %2101 = vmatpush.bf16.msra.mxu0 %v2034
        %2102 = vmatpush.bf16.msra.mxu0 %v2033
        %2103 = vmatpush.bf16.msra.mxu0 %v2032
        %2104 = vmatpush.bf16.msra.mxu0 %v2031
        %2105 = vmatpush.bf16.msra.mxu0 %v2030
        %2106 = vmatpush.bf16.msra.mxu0 %v2029
        %2107 = vmatpush.bf16.msra.mxu0 %v2028
        %2108 = vmatpush.bf16.msra.mxu0 %v2027
        %2109 = vmatmul.bf16.gmra.mxu0 %v1163
        %v2110 = vpop.f32.mrf.mxu0
        %v2111 = vadd.f32 %v2098, %v2110
        %v2112 = vpop.f32.mrf.mxu0
        %2113 = vdwg.mxu0
        %2114 = vmatpush.bf16.msra.mxu0 %v2042
        %2115 = vmatpush.bf16.msra.mxu0 %v2041
        %2116 = vmatpush.bf16.msra.mxu0 %v2040
        %2117 = vmatpush.bf16.msra.mxu0 %v2039
        %2118 = vmatpush.bf16.msra.mxu0 %v2038
        %2119 = vmatpush.bf16.msra.mxu0 %v2037
        %2120 = vmatpush.bf16.msra.mxu0 %v2036
        %2121 = vmatpush.bf16.msra.mxu0 %v2035
        %2122 = vmatmul.bf16.gmra.mxu0 %v895
        %v2123 = vpop.f32.mrf.mxu0
        %v2124 = vadd.f32 %v2111, %v2123
        %v2125 = vpop.f32.mrf.mxu0
        %2126 = vdwg.mxu0
        %v2127 = vadd.f32 %v791, %v2124
        %v2128 = vadd.f32 %v2127, %v805
        %v2129 = vmul.f32 %v1812, %v809
        %v2130 = vmul.f32 %v815, %v2128
        %v2131 = vadd.f32 %v2129, %v2130
        %v2132 = vmul.f32 %v1815, 1.8
        %v2133 = vadd.f32 %v2132, 0.01
        %v2134 = vsub.f32 %v2131, %v2133
        %vm2135 = vcmp.gt.f32.partialorder %v2134, 0.0
        %v2136 = vsel %vm2135, 1, 0
        %v2137 = vcvt.s32.f32 %v2136
        %v2138 = vmul.f32 %v2137, %v2133
        %v2139 = vsub.f32 %v2131, %v2138
        %v2140 = vmul.f32 %v813, %v1815
        %v2141 = vmul.f32 %v816, %v2137
        %v2142 = vadd.f32 %v2140, %v2141
        %v2143 = vpack.c.bf16 %v2137, %v2137
        %s2144 = scalar_lea.vmem %s349, 24 [#allocation12]
        %2145 = vst [vmem:[%s2144] sm:$0xff] %v2137
        %v2146 = vld [vmem:[#allocation11] sm:$0xf]
        %v2147 = vld [vmem:[#allocation11 + $0x4] sm:$0xf]
        %v2148 = vld [vmem:[#allocation11 + $0x8] sm:$0xf]
        %v2149 = vld [vmem:[#allocation11 + $0xc] sm:$0xf]
        %v2150 = vld [vmem:[#allocation11 + $0x10] sm:$0xf]
        %v2151 = vld [vmem:[#allocation11 + $0x14] sm:$0xf]
        %v2152 = vld [vmem:[#allocation11 + $0x18] sm:$0xf]
        %v2153 = vld [vmem:[#allocation11 + $0x1c] sm:$0xf]
        %v2154 = vld [vmem:[#allocation11 + $0x20] sm:$0xf]
        %v2155 = vld [vmem:[#allocation11 + $0x24] sm:$0xf]
        %v2156 = vld [vmem:[#allocation11 + $0x28] sm:$0xf]
        %v2157 = vld [vmem:[#allocation11 + $0x2c] sm:$0xf]
        %v2158 = vld [vmem:[#allocation11 + $0x30] sm:$0xf]
        %v2159 = vld [vmem:[#allocation11 + $0x34] sm:$0xf]
        %v2160 = vld [vmem:[#allocation11 + $0x38] sm:$0xf]
        %v2161 = vld [vmem:[#allocation11 + $0x3c] sm:$0xf]
        %v2162 = vld [vmem:[#allocation11 + $0x40] sm:$0xf]
        %v2163 = vld [vmem:[#allocation11 + $0x44] sm:$0xf]
        %v2164 = vld [vmem:[#allocation11 + $0x48] sm:$0xf]
        %v2165 = vld [vmem:[#allocation11 + $0x4c] sm:$0xf]
        %v2166 = vld [vmem:[#allocation11 + $0x50] sm:$0xf]
        %v2167 = vld [vmem:[#allocation11 + $0x54] sm:$0xf]
        %v2168 = vld [vmem:[#allocation11 + $0x58] sm:$0xf]
        %v2169 = vld [vmem:[#allocation11 + $0x5c] sm:$0xf]
        %v2170 = vld [vmem:[#allocation11 + $0x60] sm:$0xf]
        %v2171 = vld [vmem:[#allocation11 + $0x64] sm:$0xf]
        %v2172 = vld [vmem:[#allocation11 + $0x68] sm:$0xf]
        %v2173 = vld [vmem:[#allocation11 + $0x6c] sm:$0xf]
        %v2174 = vld [vmem:[#allocation11 + $0x70] sm:$0xf]
        %v2175 = vld [vmem:[#allocation11 + $0x74] sm:$0xf]
        %v2176 = vld [vmem:[#allocation11 + $0x78] sm:$0xf]
        %v2177 = vld [vmem:[#allocation11 + $0x7c] sm:$0xf]
        %v2178 = vld [vmem:[#allocation11 + $0x80] sm:$0xf]
        %v2179 = vld [vmem:[#allocation11 + $0x84] sm:$0xf]
        %v2180 = vld [vmem:[#allocation11 + $0x88] sm:$0xf]
        %v2181 = vld [vmem:[#allocation11 + $0x8c] sm:$0xf]
        %v2182 = vld [vmem:[#allocation11 + $0x90] sm:$0xf]
        %v2183 = vld [vmem:[#allocation11 + $0x94] sm:$0xf]
        %v2184 = vld [vmem:[#allocation11 + $0x98] sm:$0xf]
        %v2185 = vld [vmem:[#allocation11 + $0x9c] sm:$0xf]
        %v2186 = vld [vmem:[#allocation11 + $0xa0] sm:$0xf]
        %v2187 = vld [vmem:[#allocation11 + $0xa4] sm:$0xf]
        %v2188 = vld [vmem:[#allocation11 + $0xa8] sm:$0xf]
        %v2189 = vld [vmem:[#allocation11 + $0xac] sm:$0xf]
        %v2190 = vld [vmem:[#allocation11 + $0xb0] sm:$0xf]
        %v2191 = vld [vmem:[#allocation11 + $0xb4] sm:$0xf]
        %v2192 = vld [vmem:[#allocation11 + $0xb8] sm:$0xf]
        %v2193 = vld [vmem:[#allocation11 + $0xbc] sm:$0xf]
        %v2194 = vld [vmem:[#allocation11 + $0xc0] sm:$0xf]
        %v2195 = vld [vmem:[#allocation11 + $0xc4] sm:$0xf]
        %v2196 = vld [vmem:[#allocation11 + $0xc8] sm:$0xf]
        %v2197 = vld [vmem:[#allocation11 + $0xcc] sm:$0xf]
        %v2198 = vld [vmem:[#allocation11 + $0xd0] sm:$0xf]
        %v2199 = vld [vmem:[#allocation11 + $0xd4] sm:$0xf]
        %v2200 = vld [vmem:[#allocation11 + $0xd8] sm:$0xf]
        %v2201 = vld [vmem:[#allocation11 + $0xdc] sm:$0xf]
        %v2202 = vld [vmem:[#allocation11 + $0xe0] sm:$0xf]
        %v2203 = vld [vmem:[#allocation11 + $0xe4] sm:$0xf]
        %v2204 = vld [vmem:[#allocation11 + $0xe8] sm:$0xf]
        %v2205 = vld [vmem:[#allocation11 + $0xec] sm:$0xf]
        %v2206 = vld [vmem:[#allocation11 + $0xf0] sm:$0xf]
        %v2207 = vld [vmem:[#allocation11 + $0xf4] sm:$0xf]
        %v2208 = vld [vmem:[#allocation11 + $0xf8] sm:$0xf]
        %v2209 = vld [vmem:[#allocation11 + $0xfc] sm:$0xf]
        %v2274 = vunpack.c.l.b16 %v2146
        %v2275 = vunpack.c.l.b16 %v2147
        %v2276 = vunpack.c.l.b16 %v2148
        %v2277 = vunpack.c.l.b16 %v2149
        %v2278 = vunpack.c.l.b16 %v2150
        %v2279 = vunpack.c.l.b16 %v2151
        %v2280 = vunpack.c.l.b16 %v2152
        %v2281 = vunpack.c.l.b16 %v2153
        %v2282 = vunpack.c.l.b16 %v2154
        %v2283 = vunpack.c.l.b16 %v2155
        %v2284 = vunpack.c.l.b16 %v2156
        %v2285 = vunpack.c.l.b16 %v2157
        %v2286 = vunpack.c.l.b16 %v2158
        %v2287 = vunpack.c.l.b16 %v2159
        %v2288 = vunpack.c.l.b16 %v2160
        %v2289 = vunpack.c.l.b16 %v2161
        %v2290 = vunpack.c.l.b16 %v2162
        %v2291 = vunpack.c.l.b16 %v2163
        %v2292 = vunpack.c.l.b16 %v2164
        %v2293 = vunpack.c.l.b16 %v2165
        %v2294 = vunpack.c.l.b16 %v2166
        %v2295 = vunpack.c.l.b16 %v2167
        %v2296 = vunpack.c.l.b16 %v2168
        %v2297 = vunpack.c.l.b16 %v2169
        %v2298 = vunpack.c.l.b16 %v2170
        %v2299 = vunpack.c.l.b16 %v2171
        %v2300 = vunpack.c.l.b16 %v2172
        %v2301 = vunpack.c.l.b16 %v2173
        %v2302 = vunpack.c.l.b16 %v2174
        %v2303 = vunpack.c.l.b16 %v2175
        %v2304 = vunpack.c.l.b16 %v2176
        %v2305 = vunpack.c.l.b16 %v2177
        %v2306 = vunpack.c.l.b16 %v2178
        %v2307 = vunpack.c.l.b16 %v2179
        %v2308 = vunpack.c.l.b16 %v2180
        %v2309 = vunpack.c.l.b16 %v2181
        %v2310 = vunpack.c.l.b16 %v2182
        %v2311 = vunpack.c.l.b16 %v2183
        %v2312 = vunpack.c.l.b16 %v2184
        %v2313 = vunpack.c.l.b16 %v2185
        %v2314 = vunpack.c.l.b16 %v2186
        %v2315 = vunpack.c.l.b16 %v2187
        %v2316 = vunpack.c.l.b16 %v2188
        %v2317 = vunpack.c.l.b16 %v2189
        %v2318 = vunpack.c.l.b16 %v2190
        %v2319 = vunpack.c.l.b16 %v2191
        %v2320 = vunpack.c.l.b16 %v2192
        %v2321 = vunpack.c.l.b16 %v2193
        %v2322 = vunpack.c.l.b16 %v2194
        %v2323 = vunpack.c.l.b16 %v2195
        %v2324 = vunpack.c.l.b16 %v2196
        %v2325 = vunpack.c.l.b16 %v2197
        %v2326 = vunpack.c.l.b16 %v2198
        %v2327 = vunpack.c.l.b16 %v2199
        %v2328 = vunpack.c.l.b16 %v2200
        %v2329 = vunpack.c.l.b16 %v2201
        %v2330 = vunpack.c.l.b16 %v2202
        %v2331 = vunpack.c.l.b16 %v2203
        %v2332 = vunpack.c.l.b16 %v2204
        %v2333 = vunpack.c.l.b16 %v2205
        %v2334 = vunpack.c.l.b16 %v2206
        %v2335 = vunpack.c.l.b16 %v2207
        %v2336 = vunpack.c.l.b16 %v2208
        %v2337 = vunpack.c.l.b16 %v2209
        %v2338 = vpack.c.b16 %v2275, %v2274
        %v2339 = vpack.c.b16 %v2277, %v2276
        %v2340 = vpack.c.b16 %v2279, %v2278
        %v2341 = vpack.c.b16 %v2281, %v2280
        %v2342 = vpack.c.b16 %v2283, %v2282
        %v2343 = vpack.c.b16 %v2285, %v2284
        %v2344 = vpack.c.b16 %v2287, %v2286
        %v2345 = vpack.c.b16 %v2289, %v2288
        %v2346 = vpack.c.b16 %v2291, %v2290
        %v2347 = vpack.c.b16 %v2293, %v2292
        %v2348 = vpack.c.b16 %v2295, %v2294
        %v2349 = vpack.c.b16 %v2297, %v2296
        %v2350 = vpack.c.b16 %v2299, %v2298
        %v2351 = vpack.c.b16 %v2301, %v2300
        %v2352 = vpack.c.b16 %v2303, %v2302
        %v2353 = vpack.c.b16 %v2305, %v2304
        %v2354 = vpack.c.b16 %v2307, %v2306
        %v2355 = vpack.c.b16 %v2309, %v2308
        %v2356 = vpack.c.b16 %v2311, %v2310
        %v2357 = vpack.c.b16 %v2313, %v2312
        %v2358 = vpack.c.b16 %v2315, %v2314
        %v2359 = vpack.c.b16 %v2317, %v2316
        %v2360 = vpack.c.b16 %v2319, %v2318
        %v2361 = vpack.c.b16 %v2321, %v2320
        %v2362 = vpack.c.b16 %v2323, %v2322
        %v2363 = vpack.c.b16 %v2325, %v2324
        %v2364 = vpack.c.b16 %v2327, %v2326
        %v2365 = vpack.c.b16 %v2329, %v2328
        %v2366 = vpack.c.b16 %v2331, %v2330
        %v2367 = vpack.c.b16 %v2333, %v2332
        %v2368 = vpack.c.b16 %v2335, %v2334
        %v2369 = vpack.c.b16 %v2337, %v2336
        %2402 = vmatpush.bf16.msra.mxu0 %v2345
        %2403 = vmatpush.bf16.msra.mxu0 %v2344
        %2404 = vmatpush.bf16.msra.mxu0 %v2343
        %2405 = vmatpush.bf16.msra.mxu0 %v2342
        %2406 = vmatpush.bf16.msra.mxu0 %v2341
        %2407 = vmatpush.bf16.msra.mxu0 %v2340
        %2408 = vmatpush.bf16.msra.mxu0 %v2339
        %2409 = vmatpush.bf16.msra.mxu0 %v2338
        %2410 = vmatmul.bf16.gmra.mxu0 %v2143
        %v2411 = vpop.f32.mrf.mxu0
        %v2412 = vadd.f32 0.0, %v2411
        %v2413 = vpop.f32.mrf.mxu0
        %2414 = vdwg.mxu0
        %2415 = vmatpush.bf16.msra.mxu0 %v2353
        %2416 = vmatpush.bf16.msra.mxu0 %v2352
        %2417 = vmatpush.bf16.msra.mxu0 %v2351
        %2418 = vmatpush.bf16.msra.mxu0 %v2350
        %2419 = vmatpush.bf16.msra.mxu0 %v2349
        %2420 = vmatpush.bf16.msra.mxu0 %v2348
        %2421 = vmatpush.bf16.msra.mxu0 %v2347
        %2422 = vmatpush.bf16.msra.mxu0 %v2346
        %2423 = vmatmul.bf16.gmra.mxu0 %v1816
        %v2424 = vpop.f32.mrf.mxu0
        %v2425 = vadd.f32 %v2412, %v2424
        %v2426 = vpop.f32.mrf.mxu0
        %2427 = vdwg.mxu0
        %2428 = vmatpush.bf16.msra.mxu0 %v2361
        %2429 = vmatpush.bf16.msra.mxu0 %v2360
        %2430 = vmatpush.bf16.msra.mxu0 %v2359
        %2431 = vmatpush.bf16.msra.mxu0 %v2358
        %2432 = vmatpush.bf16.msra.mxu0 %v2357
        %2433 = vmatpush.bf16.msra.mxu0 %v2356
        %2434 = vmatpush.bf16.msra.mxu0 %v2355
        %2435 = vmatpush.bf16.msra.mxu0 %v2354
        %2436 = vmatmul.bf16.gmra.mxu0 %v1489
        %v2437 = vpop.f32.mrf.mxu0
        %v2438 = vadd.f32 %v2425, %v2437
        %v2439 = vpop.f32.mrf.mxu0
        %2440 = vdwg.mxu0
        %2441 = vmatpush.bf16.msra.mxu0 %v2369
        %2442 = vmatpush.bf16.msra.mxu0 %v2368
        %2443 = vmatpush.bf16.msra.mxu0 %v2367
        %2444 = vmatpush.bf16.msra.mxu0 %v2366
        %2445 = vmatpush.bf16.msra.mxu0 %v2365
        %2446 = vmatpush.bf16.msra.mxu0 %v2364
        %2447 = vmatpush.bf16.msra.mxu0 %v2363
        %2448 = vmatpush.bf16.msra.mxu0 %v2362
        %2449 = vmatmul.bf16.gmra.mxu0 %v1163
        %v2450 = vpop.f32.mrf.mxu0
        %v2451 = vadd.f32 %v2438, %v2450
        %v2452 = vpop.f32.mrf.mxu0
        %2453 = vdwg.mxu0
        %v2454 = vadd.f32 %v792, %v2451
        %v2455 = vadd.f32 %v2454, %v805
        %v2456 = vmul.f32 %v2139, %v809
        %v2457 = vmul.f32 %v815, %v2455
        %v2458 = vadd.f32 %v2456, %v2457
        %v2459 = vmul.f32 %v2142, 1.8
        %v2460 = vadd.f32 %v2459, 0.01
        %v2461 = vsub.f32 %v2458, %v2460
        %vm2462 = vcmp.gt.f32.partialorder %v2461, 0.0
        %v2463 = vsel %vm2462, 1, 0
        %v2464 = vcvt.s32.f32 %v2463
        %v2465 = vmul.f32 %v2464, %v2460
        %v2466 = vsub.f32 %v2458, %v2465
        %v2467 = vmul.f32 %v813, %v2142
        %v2468 = vmul.f32 %v816, %v2464
        %v2469 = vadd.f32 %v2467, %v2468
        %v2470 = vpack.c.bf16 %v2464, %v2464
        %s2471 = scalar_lea.vmem %s349, 32 [#allocation12]
        %2472 = vst [vmem:[%s2471] sm:$0xff] %v2464
        %v2473 = vld [vmem:[#allocation11] sm:$0xf]
        %v2474 = vld [vmem:[#allocation11 + $0x4] sm:$0xf]
        %v2475 = vld [vmem:[#allocation11 + $0x8] sm:$0xf]
        %v2476 = vld [vmem:[#allocation11 + $0xc] sm:$0xf]
        %v2477 = vld [vmem:[#allocation11 + $0x10] sm:$0xf]
        %v2478 = vld [vmem:[#allocation11 + $0x14] sm:$0xf]
        %v2479 = vld [vmem:[#allocation11 + $0x18] sm:$0xf]
        %v2480 = vld [vmem:[#allocation11 + $0x1c] sm:$0xf]
        %v2481 = vld [vmem:[#allocation11 + $0x20] sm:$0xf]
        %v2482 = vld [vmem:[#allocation11 + $0x24] sm:$0xf]
        %v2483 = vld [vmem:[#allocation11 + $0x28] sm:$0xf]
        %v2484 = vld [vmem:[#allocation11 + $0x2c] sm:$0xf]
        %v2485 = vld [vmem:[#allocation11 + $0x30] sm:$0xf]
        %v2486 = vld [vmem:[#allocation11 + $0x34] sm:$0xf]
        %v2487 = vld [vmem:[#allocation11 + $0x38] sm:$0xf]
        %v2488 = vld [vmem:[#allocation11 + $0x3c] sm:$0xf]
        %v2489 = vld [vmem:[#allocation11 + $0x40] sm:$0xf]
        %v2490 = vld [vmem:[#allocation11 + $0x44] sm:$0xf]
        %v2491 = vld [vmem:[#allocation11 + $0x48] sm:$0xf]
        %v2492 = vld [vmem:[#allocation11 + $0x4c] sm:$0xf]
        %v2493 = vld [vmem:[#allocation11 + $0x50] sm:$0xf]
        %v2494 = vld [vmem:[#allocation11 + $0x54] sm:$0xf]
        %v2495 = vld [vmem:[#allocation11 + $0x58] sm:$0xf]
        %v2496 = vld [vmem:[#allocation11 + $0x5c] sm:$0xf]
        %v2497 = vld [vmem:[#allocation11 + $0x60] sm:$0xf]
        %v2498 = vld [vmem:[#allocation11 + $0x64] sm:$0xf]
        %v2499 = vld [vmem:[#allocation11 + $0x68] sm:$0xf]
        %v2500 = vld [vmem:[#allocation11 + $0x6c] sm:$0xf]
        %v2501 = vld [vmem:[#allocation11 + $0x70] sm:$0xf]
        %v2502 = vld [vmem:[#allocation11 + $0x74] sm:$0xf]
        %v2503 = vld [vmem:[#allocation11 + $0x78] sm:$0xf]
        %v2504 = vld [vmem:[#allocation11 + $0x7c] sm:$0xf]
        %v2505 = vld [vmem:[#allocation11 + $0x80] sm:$0xf]
        %v2506 = vld [vmem:[#allocation11 + $0x84] sm:$0xf]
        %v2507 = vld [vmem:[#allocation11 + $0x88] sm:$0xf]
        %v2508 = vld [vmem:[#allocation11 + $0x8c] sm:$0xf]
        %v2509 = vld [vmem:[#allocation11 + $0x90] sm:$0xf]
        %v2510 = vld [vmem:[#allocation11 + $0x94] sm:$0xf]
        %v2511 = vld [vmem:[#allocation11 + $0x98] sm:$0xf]
        %v2512 = vld [vmem:[#allocation11 + $0x9c] sm:$0xf]
        %v2513 = vld [vmem:[#allocation11 + $0xa0] sm:$0xf]
        %v2514 = vld [vmem:[#allocation11 + $0xa4] sm:$0xf]
        %v2515 = vld [vmem:[#allocation11 + $0xa8] sm:$0xf]
        %v2516 = vld [vmem:[#allocation11 + $0xac] sm:$0xf]
        %v2517 = vld [vmem:[#allocation11 + $0xb0] sm:$0xf]
        %v2518 = vld [vmem:[#allocation11 + $0xb4] sm:$0xf]
        %v2519 = vld [vmem:[#allocation11 + $0xb8] sm:$0xf]
        %v2520 = vld [vmem:[#allocation11 + $0xbc] sm:$0xf]
        %v2521 = vld [vmem:[#allocation11 + $0xc0] sm:$0xf]
        %v2522 = vld [vmem:[#allocation11 + $0xc4] sm:$0xf]
        %v2523 = vld [vmem:[#allocation11 + $0xc8] sm:$0xf]
        %v2524 = vld [vmem:[#allocation11 + $0xcc] sm:$0xf]
        %v2525 = vld [vmem:[#allocation11 + $0xd0] sm:$0xf]
        %v2526 = vld [vmem:[#allocation11 + $0xd4] sm:$0xf]
        %v2527 = vld [vmem:[#allocation11 + $0xd8] sm:$0xf]
        %v2528 = vld [vmem:[#allocation11 + $0xdc] sm:$0xf]
        %v2529 = vld [vmem:[#allocation11 + $0xe0] sm:$0xf]
        %v2530 = vld [vmem:[#allocation11 + $0xe4] sm:$0xf]
        %v2531 = vld [vmem:[#allocation11 + $0xe8] sm:$0xf]
        %v2532 = vld [vmem:[#allocation11 + $0xec] sm:$0xf]
        %v2533 = vld [vmem:[#allocation11 + $0xf0] sm:$0xf]
        %v2534 = vld [vmem:[#allocation11 + $0xf4] sm:$0xf]
        %v2535 = vld [vmem:[#allocation11 + $0xf8] sm:$0xf]
        %v2536 = vld [vmem:[#allocation11 + $0xfc] sm:$0xf]
        %v2601 = vunpack.c.l.b16 %v2473
        %v2602 = vunpack.c.l.b16 %v2474
        %v2603 = vunpack.c.l.b16 %v2475
        %v2604 = vunpack.c.l.b16 %v2476
        %v2605 = vunpack.c.l.b16 %v2477
        %v2606 = vunpack.c.l.b16 %v2478
        %v2607 = vunpack.c.l.b16 %v2479
        %v2608 = vunpack.c.l.b16 %v2480
        %v2609 = vunpack.c.l.b16 %v2481
        %v2610 = vunpack.c.l.b16 %v2482
        %v2611 = vunpack.c.l.b16 %v2483
        %v2612 = vunpack.c.l.b16 %v2484
        %v2613 = vunpack.c.l.b16 %v2485
        %v2614 = vunpack.c.l.b16 %v2486
        %v2615 = vunpack.c.l.b16 %v2487
        %v2616 = vunpack.c.l.b16 %v2488
        %v2617 = vunpack.c.l.b16 %v2489
        %v2618 = vunpack.c.l.b16 %v2490
        %v2619 = vunpack.c.l.b16 %v2491
        %v2620 = vunpack.c.l.b16 %v2492
        %v2621 = vunpack.c.l.b16 %v2493
        %v2622 = vunpack.c.l.b16 %v2494
        %v2623 = vunpack.c.l.b16 %v2495
        %v2624 = vunpack.c.l.b16 %v2496
        %v2625 = vunpack.c.l.b16 %v2497
        %v2626 = vunpack.c.l.b16 %v2498
        %v2627 = vunpack.c.l.b16 %v2499
        %v2628 = vunpack.c.l.b16 %v2500
        %v2629 = vunpack.c.l.b16 %v2501
        %v2630 = vunpack.c.l.b16 %v2502
        %v2631 = vunpack.c.l.b16 %v2503
        %v2632 = vunpack.c.l.b16 %v2504
        %v2633 = vunpack.c.l.b16 %v2505
        %v2634 = vunpack.c.l.b16 %v2506
        %v2635 = vunpack.c.l.b16 %v2507
        %v2636 = vunpack.c.l.b16 %v2508
        %v2637 = vunpack.c.l.b16 %v2509
        %v2638 = vunpack.c.l.b16 %v2510
        %v2639 = vunpack.c.l.b16 %v2511
        %v2640 = vunpack.c.l.b16 %v2512
        %v2641 = vunpack.c.l.b16 %v2513
        %v2642 = vunpack.c.l.b16 %v2514
        %v2643 = vunpack.c.l.b16 %v2515
        %v2644 = vunpack.c.l.b16 %v2516
        %v2645 = vunpack.c.l.b16 %v2517
        %v2646 = vunpack.c.l.b16 %v2518
        %v2647 = vunpack.c.l.b16 %v2519
        %v2648 = vunpack.c.l.b16 %v2520
        %v2649 = vunpack.c.l.b16 %v2521
        %v2650 = vunpack.c.l.b16 %v2522
        %v2651 = vunpack.c.l.b16 %v2523
        %v2652 = vunpack.c.l.b16 %v2524
        %v2653 = vunpack.c.l.b16 %v2525
        %v2654 = vunpack.c.l.b16 %v2526
        %v2655 = vunpack.c.l.b16 %v2527
        %v2656 = vunpack.c.l.b16 %v2528
        %v2657 = vunpack.c.l.b16 %v2529
        %v2658 = vunpack.c.l.b16 %v2530
        %v2659 = vunpack.c.l.b16 %v2531
        %v2660 = vunpack.c.l.b16 %v2532
        %v2661 = vunpack.c.l.b16 %v2533
        %v2662 = vunpack.c.l.b16 %v2534
        %v2663 = vunpack.c.l.b16 %v2535
        %v2664 = vunpack.c.l.b16 %v2536
        %v2665 = vpack.c.b16 %v2602, %v2601
        %v2666 = vpack.c.b16 %v2604, %v2603
        %v2667 = vpack.c.b16 %v2606, %v2605
        %v2668 = vpack.c.b16 %v2608, %v2607
        %v2669 = vpack.c.b16 %v2610, %v2609
        %v2670 = vpack.c.b16 %v2612, %v2611
        %v2671 = vpack.c.b16 %v2614, %v2613
        %v2672 = vpack.c.b16 %v2616, %v2615
        %v2673 = vpack.c.b16 %v2618, %v2617
        %v2674 = vpack.c.b16 %v2620, %v2619
        %v2675 = vpack.c.b16 %v2622, %v2621
        %v2676 = vpack.c.b16 %v2624, %v2623
        %v2677 = vpack.c.b16 %v2626, %v2625
        %v2678 = vpack.c.b16 %v2628, %v2627
        %v2679 = vpack.c.b16 %v2630, %v2629
        %v2680 = vpack.c.b16 %v2632, %v2631
        %v2681 = vpack.c.b16 %v2634, %v2633
        %v2682 = vpack.c.b16 %v2636, %v2635
        %v2683 = vpack.c.b16 %v2638, %v2637
        %v2684 = vpack.c.b16 %v2640, %v2639
        %v2685 = vpack.c.b16 %v2642, %v2641
        %v2686 = vpack.c.b16 %v2644, %v2643
        %v2687 = vpack.c.b16 %v2646, %v2645
        %v2688 = vpack.c.b16 %v2648, %v2647
        %v2689 = vpack.c.b16 %v2650, %v2649
        %v2690 = vpack.c.b16 %v2652, %v2651
        %v2691 = vpack.c.b16 %v2654, %v2653
        %v2692 = vpack.c.b16 %v2656, %v2655
        %v2693 = vpack.c.b16 %v2658, %v2657
        %v2694 = vpack.c.b16 %v2660, %v2659
        %v2695 = vpack.c.b16 %v2662, %v2661
        %v2696 = vpack.c.b16 %v2664, %v2663
        %2729 = vmatpush.bf16.msra.mxu0 %v2672
        %2730 = vmatpush.bf16.msra.mxu0 %v2671
        %2731 = vmatpush.bf16.msra.mxu0 %v2670
        %2732 = vmatpush.bf16.msra.mxu0 %v2669
        %2733 = vmatpush.bf16.msra.mxu0 %v2668
        %2734 = vmatpush.bf16.msra.mxu0 %v2667
        %2735 = vmatpush.bf16.msra.mxu0 %v2666
        %2736 = vmatpush.bf16.msra.mxu0 %v2665
        %2737 = vmatmul.bf16.gmra.mxu0 %v2470
        %v2738 = vpop.f32.mrf.mxu0
        %v2739 = vadd.f32 0.0, %v2738
        %v2740 = vpop.f32.mrf.mxu0
        %2741 = vdwg.mxu0
        %2742 = vmatpush.bf16.msra.mxu0 %v2680
        %2743 = vmatpush.bf16.msra.mxu0 %v2679
        %2744 = vmatpush.bf16.msra.mxu0 %v2678
        %2745 = vmatpush.bf16.msra.mxu0 %v2677
        %2746 = vmatpush.bf16.msra.mxu0 %v2676
        %2747 = vmatpush.bf16.msra.mxu0 %v2675
        %2748 = vmatpush.bf16.msra.mxu0 %v2674
        %2749 = vmatpush.bf16.msra.mxu0 %v2673
        %2750 = vmatmul.bf16.gmra.mxu0 %v2143
        %v2751 = vpop.f32.mrf.mxu0
        %v2752 = vadd.f32 %v2739, %v2751
        %v2753 = vpop.f32.mrf.mxu0
        %2754 = vdwg.mxu0
        %2755 = vmatpush.bf16.msra.mxu0 %v2688
        %2756 = vmatpush.bf16.msra.mxu0 %v2687
        %2757 = vmatpush.bf16.msra.mxu0 %v2686
        %2758 = vmatpush.bf16.msra.mxu0 %v2685
        %2759 = vmatpush.bf16.msra.mxu0 %v2684
        %2760 = vmatpush.bf16.msra.mxu0 %v2683
        %2761 = vmatpush.bf16.msra.mxu0 %v2682
        %2762 = vmatpush.bf16.msra.mxu0 %v2681
        %2763 = vmatmul.bf16.gmra.mxu0 %v1816
        %v2764 = vpop.f32.mrf.mxu0
        %v2765 = vadd.f32 %v2752, %v2764
        %v2766 = vpop.f32.mrf.mxu0
        %2767 = vdwg.mxu0
        %2768 = vmatpush.bf16.msra.mxu0 %v2696
        %2769 = vmatpush.bf16.msra.mxu0 %v2695
        %2770 = vmatpush.bf16.msra.mxu0 %v2694
        %2771 = vmatpush.bf16.msra.mxu0 %v2693
        %2772 = vmatpush.bf16.msra.mxu0 %v2692
        %2773 = vmatpush.bf16.msra.mxu0 %v2691
        %2774 = vmatpush.bf16.msra.mxu0 %v2690
        %2775 = vmatpush.bf16.msra.mxu0 %v2689
        %2776 = vmatmul.bf16.gmra.mxu0 %v1489
        %v2777 = vpop.f32.mrf.mxu0
        %v2778 = vadd.f32 %v2765, %v2777
        %v2779 = vpop.f32.mrf.mxu0
        %2780 = vdwg.mxu0
        %v2781 = vadd.f32 %v793, %v2778
        %v2782 = vadd.f32 %v2781, %v805
        %v2783 = vmul.f32 %v2466, %v809
        %v2784 = vmul.f32 %v815, %v2782
        %v2785 = vadd.f32 %v2783, %v2784
        %v2786 = vmul.f32 %v2469, 1.8
        %v2787 = vadd.f32 %v2786, 0.01
        %v2788 = vsub.f32 %v2785, %v2787
        %vm2789 = vcmp.gt.f32.partialorder %v2788, 0.0
        %v2790 = vsel %vm2789, 1, 0
        %v2791 = vcvt.s32.f32 %v2790
        %v2792 = vmul.f32 %v2791, %v2787
        %v2793 = vsub.f32 %v2785, %v2792
        %v2794 = vmul.f32 %v813, %v2469
        %v2795 = vmul.f32 %v816, %v2791
        %v2796 = vadd.f32 %v2794, %v2795
        %v2797 = vpack.c.bf16 %v2791, %v2791
        %s2798 = scalar_lea.vmem %s349, 40 [#allocation12]
        %2799 = vst [vmem:[%s2798] sm:$0xff] %v2791
        %v2800 = vld [vmem:[#allocation11] sm:$0xf]
        %v2801 = vld [vmem:[#allocation11 + $0x4] sm:$0xf]
        %v2802 = vld [vmem:[#allocation11 + $0x8] sm:$0xf]
        %v2803 = vld [vmem:[#allocation11 + $0xc] sm:$0xf]
        %v2804 = vld [vmem:[#allocation11 + $0x10] sm:$0xf]
        %v2805 = vld [vmem:[#allocation11 + $0x14] sm:$0xf]
        %v2806 = vld [vmem:[#allocation11 + $0x18] sm:$0xf]
        %v2807 = vld [vmem:[#allocation11 + $0x1c] sm:$0xf]
        %v2808 = vld [vmem:[#allocation11 + $0x20] sm:$0xf]
        %v2809 = vld [vmem:[#allocation11 + $0x24] sm:$0xf]
        %v2810 = vld [vmem:[#allocation11 + $0x28] sm:$0xf]
        %v2811 = vld [vmem:[#allocation11 + $0x2c] sm:$0xf]
        %v2812 = vld [vmem:[#allocation11 + $0x30] sm:$0xf]
        %v2813 = vld [vmem:[#allocation11 + $0x34] sm:$0xf]
        %v2814 = vld [vmem:[#allocation11 + $0x38] sm:$0xf]
        %v2815 = vld [vmem:[#allocation11 + $0x3c] sm:$0xf]
        %v2816 = vld [vmem:[#allocation11 + $0x40] sm:$0xf]
        %v2817 = vld [vmem:[#allocation11 + $0x44] sm:$0xf]
        %v2818 = vld [vmem:[#allocation11 + $0x48] sm:$0xf]
        %v2819 = vld [vmem:[#allocation11 + $0x4c] sm:$0xf]
        %v2820 = vld [vmem:[#allocation11 + $0x50] sm:$0xf]
        %v2821 = vld [vmem:[#allocation11 + $0x54] sm:$0xf]
        %v2822 = vld [vmem:[#allocation11 + $0x58] sm:$0xf]
        %v2823 = vld [vmem:[#allocation11 + $0x5c] sm:$0xf]
        %v2824 = vld [vmem:[#allocation11 + $0x60] sm:$0xf]
        %v2825 = vld [vmem:[#allocation11 + $0x64] sm:$0xf]
        %v2826 = vld [vmem:[#allocation11 + $0x68] sm:$0xf]
        %v2827 = vld [vmem:[#allocation11 + $0x6c] sm:$0xf]
        %v2828 = vld [vmem:[#allocation11 + $0x70] sm:$0xf]
        %v2829 = vld [vmem:[#allocation11 + $0x74] sm:$0xf]
        %v2830 = vld [vmem:[#allocation11 + $0x78] sm:$0xf]
        %v2831 = vld [vmem:[#allocation11 + $0x7c] sm:$0xf]
        %v2832 = vld [vmem:[#allocation11 + $0x80] sm:$0xf]
        %v2833 = vld [vmem:[#allocation11 + $0x84] sm:$0xf]
        %v2834 = vld [vmem:[#allocation11 + $0x88] sm:$0xf]
        %v2835 = vld [vmem:[#allocation11 + $0x8c] sm:$0xf]
        %v2836 = vld [vmem:[#allocation11 + $0x90] sm:$0xf]
        %v2837 = vld [vmem:[#allocation11 + $0x94] sm:$0xf]
        %v2838 = vld [vmem:[#allocation11 + $0x98] sm:$0xf]
        %v2839 = vld [vmem:[#allocation11 + $0x9c] sm:$0xf]
        %v2840 = vld [vmem:[#allocation11 + $0xa0] sm:$0xf]
        %v2841 = vld [vmem:[#allocation11 + $0xa4] sm:$0xf]
        %v2842 = vld [vmem:[#allocation11 + $0xa8] sm:$0xf]
        %v2843 = vld [vmem:[#allocation11 + $0xac] sm:$0xf]
        %v2844 = vld [vmem:[#allocation11 + $0xb0] sm:$0xf]
        %v2845 = vld [vmem:[#allocation11 + $0xb4] sm:$0xf]
        %v2846 = vld [vmem:[#allocation11 + $0xb8] sm:$0xf]
        %v2847 = vld [vmem:[#allocation11 + $0xbc] sm:$0xf]
        %v2848 = vld [vmem:[#allocation11 + $0xc0] sm:$0xf]
        %v2849 = vld [vmem:[#allocation11 + $0xc4] sm:$0xf]
        %v2850 = vld [vmem:[#allocation11 + $0xc8] sm:$0xf]
        %v2851 = vld [vmem:[#allocation11 + $0xcc] sm:$0xf]
        %v2852 = vld [vmem:[#allocation11 + $0xd0] sm:$0xf]
        %v2853 = vld [vmem:[#allocation11 + $0xd4] sm:$0xf]
        %v2854 = vld [vmem:[#allocation11 + $0xd8] sm:$0xf]
        %v2855 = vld [vmem:[#allocation11 + $0xdc] sm:$0xf]
        %v2856 = vld [vmem:[#allocation11 + $0xe0] sm:$0xf]
        %v2857 = vld [vmem:[#allocation11 + $0xe4] sm:$0xf]
        %v2858 = vld [vmem:[#allocation11 + $0xe8] sm:$0xf]
        %v2859 = vld [vmem:[#allocation11 + $0xec] sm:$0xf]
        %v2860 = vld [vmem:[#allocation11 + $0xf0] sm:$0xf]
        %v2861 = vld [vmem:[#allocation11 + $0xf4] sm:$0xf]
        %v2862 = vld [vmem:[#allocation11 + $0xf8] sm:$0xf]
        %v2863 = vld [vmem:[#allocation11 + $0xfc] sm:$0xf]
        %v2928 = vunpack.c.l.b16 %v2800
        %v2929 = vunpack.c.l.b16 %v2801
        %v2930 = vunpack.c.l.b16 %v2802
        %v2931 = vunpack.c.l.b16 %v2803
        %v2932 = vunpack.c.l.b16 %v2804
        %v2933 = vunpack.c.l.b16 %v2805
        %v2934 = vunpack.c.l.b16 %v2806
        %v2935 = vunpack.c.l.b16 %v2807
        %v2936 = vunpack.c.l.b16 %v2808
        %v2937 = vunpack.c.l.b16 %v2809
        %v2938 = vunpack.c.l.b16 %v2810
        %v2939 = vunpack.c.l.b16 %v2811
        %v2940 = vunpack.c.l.b16 %v2812
        %v2941 = vunpack.c.l.b16 %v2813
        %v2942 = vunpack.c.l.b16 %v2814
        %v2943 = vunpack.c.l.b16 %v2815
        %v2944 = vunpack.c.l.b16 %v2816
        %v2945 = vunpack.c.l.b16 %v2817
        %v2946 = vunpack.c.l.b16 %v2818
        %v2947 = vunpack.c.l.b16 %v2819
        %v2948 = vunpack.c.l.b16 %v2820
        %v2949 = vunpack.c.l.b16 %v2821
        %v2950 = vunpack.c.l.b16 %v2822
        %v2951 = vunpack.c.l.b16 %v2823
        %v2952 = vunpack.c.l.b16 %v2824
        %v2953 = vunpack.c.l.b16 %v2825
        %v2954 = vunpack.c.l.b16 %v2826
        %v2955 = vunpack.c.l.b16 %v2827
        %v2956 = vunpack.c.l.b16 %v2828
        %v2957 = vunpack.c.l.b16 %v2829
        %v2958 = vunpack.c.l.b16 %v2830
        %v2959 = vunpack.c.l.b16 %v2831
        %v2960 = vunpack.c.l.b16 %v2832
        %v2961 = vunpack.c.l.b16 %v2833
        %v2962 = vunpack.c.l.b16 %v2834
        %v2963 = vunpack.c.l.b16 %v2835
        %v2964 = vunpack.c.l.b16 %v2836
        %v2965 = vunpack.c.l.b16 %v2837
        %v2966 = vunpack.c.l.b16 %v2838
        %v2967 = vunpack.c.l.b16 %v2839
        %v2968 = vunpack.c.l.b16 %v2840
        %v2969 = vunpack.c.l.b16 %v2841
        %v2970 = vunpack.c.l.b16 %v2842
        %v2971 = vunpack.c.l.b16 %v2843
        %v2972 = vunpack.c.l.b16 %v2844
        %v2973 = vunpack.c.l.b16 %v2845
        %v2974 = vunpack.c.l.b16 %v2846
        %v2975 = vunpack.c.l.b16 %v2847
        %v2976 = vunpack.c.l.b16 %v2848
        %v2977 = vunpack.c.l.b16 %v2849
        %v2978 = vunpack.c.l.b16 %v2850
        %v2979 = vunpack.c.l.b16 %v2851
        %v2980 = vunpack.c.l.b16 %v2852
        %v2981 = vunpack.c.l.b16 %v2853
        %v2982 = vunpack.c.l.b16 %v2854
        %v2983 = vunpack.c.l.b16 %v2855
        %v2984 = vunpack.c.l.b16 %v2856
        %v2985 = vunpack.c.l.b16 %v2857
        %v2986 = vunpack.c.l.b16 %v2858
        %v2987 = vunpack.c.l.b16 %v2859
        %v2988 = vunpack.c.l.b16 %v2860
        %v2989 = vunpack.c.l.b16 %v2861
        %v2990 = vunpack.c.l.b16 %v2862
        %v2991 = vunpack.c.l.b16 %v2863
        %v2992 = vpack.c.b16 %v2929, %v2928
        %v2993 = vpack.c.b16 %v2931, %v2930
        %v2994 = vpack.c.b16 %v2933, %v2932
        %v2995 = vpack.c.b16 %v2935, %v2934
        %v2996 = vpack.c.b16 %v2937, %v2936
        %v2997 = vpack.c.b16 %v2939, %v2938
        %v2998 = vpack.c.b16 %v2941, %v2940
        %v2999 = vpack.c.b16 %v2943, %v2942
        %v3000 = vpack.c.b16 %v2945, %v2944
        %v3001 = vpack.c.b16 %v2947, %v2946
        %v3002 = vpack.c.b16 %v2949, %v2948
        %v3003 = vpack.c.b16 %v2951, %v2950
        %v3004 = vpack.c.b16 %v2953, %v2952
        %v3005 = vpack.c.b16 %v2955, %v2954
        %v3006 = vpack.c.b16 %v2957, %v2956
        %v3007 = vpack.c.b16 %v2959, %v2958
        %v3008 = vpack.c.b16 %v2961, %v2960
        %v3009 = vpack.c.b16 %v2963, %v2962
        %v3010 = vpack.c.b16 %v2965, %v2964
        %v3011 = vpack.c.b16 %v2967, %v2966
        %v3012 = vpack.c.b16 %v2969, %v2968
        %v3013 = vpack.c.b16 %v2971, %v2970
        %v3014 = vpack.c.b16 %v2973, %v2972
        %v3015 = vpack.c.b16 %v2975, %v2974
        %v3016 = vpack.c.b16 %v2977, %v2976
        %v3017 = vpack.c.b16 %v2979, %v2978
        %v3018 = vpack.c.b16 %v2981, %v2980
        %v3019 = vpack.c.b16 %v2983, %v2982
        %v3020 = vpack.c.b16 %v2985, %v2984
        %v3021 = vpack.c.b16 %v2987, %v2986
        %v3022 = vpack.c.b16 %v2989, %v2988
        %v3023 = vpack.c.b16 %v2991, %v2990
        %3056 = vmatpush.bf16.msra.mxu0 %v2999
        %3057 = vmatpush.bf16.msra.mxu0 %v2998
        %3058 = vmatpush.bf16.msra.mxu0 %v2997
        %3059 = vmatpush.bf16.msra.mxu0 %v2996
        %3060 = vmatpush.bf16.msra.mxu0 %v2995
        %3061 = vmatpush.bf16.msra.mxu0 %v2994
        %3062 = vmatpush.bf16.msra.mxu0 %v2993
        %3063 = vmatpush.bf16.msra.mxu0 %v2992
        %3064 = vmatmul.bf16.gmra.mxu0 %v2797
        %v3065 = vpop.f32.mrf.mxu0
        %v3066 = vadd.f32 0.0, %v3065
        %v3067 = vpop.f32.mrf.mxu0
        %3068 = vdwg.mxu0
        %3069 = vmatpush.bf16.msra.mxu0 %v3007
        %3070 = vmatpush.bf16.msra.mxu0 %v3006
        %3071 = vmatpush.bf16.msra.mxu0 %v3005
        %3072 = vmatpush.bf16.msra.mxu0 %v3004
        %3073 = vmatpush.bf16.msra.mxu0 %v3003
        %3074 = vmatpush.bf16.msra.mxu0 %v3002
        %3075 = vmatpush.bf16.msra.mxu0 %v3001
        %3076 = vmatpush.bf16.msra.mxu0 %v3000
        %3077 = vmatmul.bf16.gmra.mxu0 %v2470
        %v3078 = vpop.f32.mrf.mxu0
        %v3079 = vadd.f32 %v3066, %v3078
        %v3080 = vpop.f32.mrf.mxu0
        %3081 = vdwg.mxu0
        %3082 = vmatpush.bf16.msra.mxu0 %v3015
        %3083 = vmatpush.bf16.msra.mxu0 %v3014
        %3084 = vmatpush.bf16.msra.mxu0 %v3013
        %3085 = vmatpush.bf16.msra.mxu0 %v3012
        %3086 = vmatpush.bf16.msra.mxu0 %v3011
        %3087 = vmatpush.bf16.msra.mxu0 %v3010
        %3088 = vmatpush.bf16.msra.mxu0 %v3009
        %3089 = vmatpush.bf16.msra.mxu0 %v3008
        %3090 = vmatmul.bf16.gmra.mxu0 %v2143
        %v3091 = vpop.f32.mrf.mxu0
        %v3092 = vadd.f32 %v3079, %v3091
        %v3093 = vpop.f32.mrf.mxu0
        %3094 = vdwg.mxu0
        %3095 = vmatpush.bf16.msra.mxu0 %v3023
        %3096 = vmatpush.bf16.msra.mxu0 %v3022
        %3097 = vmatpush.bf16.msra.mxu0 %v3021
        %3098 = vmatpush.bf16.msra.mxu0 %v3020
        %3099 = vmatpush.bf16.msra.mxu0 %v3019
        %3100 = vmatpush.bf16.msra.mxu0 %v3018
        %3101 = vmatpush.bf16.msra.mxu0 %v3017
        %3102 = vmatpush.bf16.msra.mxu0 %v3016
        %3103 = vmatmul.bf16.gmra.mxu0 %v1816
        %v3104 = vpop.f32.mrf.mxu0
        %v3105 = vadd.f32 %v3092, %v3104
        %v3106 = vpop.f32.mrf.mxu0
        %3107 = vdwg.mxu0
        %v3108 = vadd.f32 %v794, %v3105
        %v3109 = vadd.f32 %v3108, %v805
        %v3110 = vmul.f32 %v2793, %v809
        %v3111 = vmul.f32 %v815, %v3109
        %v3112 = vadd.f32 %v3110, %v3111
        %v3113 = vmul.f32 %v2796, 1.8
        %v3114 = vadd.f32 %v3113, 0.01
        %v3115 = vsub.f32 %v3112, %v3114
        %vm3116 = vcmp.gt.f32.partialorder %v3115, 0.0
        %v3117 = vsel %vm3116, 1, 0
        %v3118 = vcvt.s32.f32 %v3117
        %v3119 = vmul.f32 %v3118, %v3114
        %v3120 = vsub.f32 %v3112, %v3119
        %v3121 = vmul.f32 %v813, %v2796
        %v3122 = vmul.f32 %v816, %v3118
        %v3123 = vadd.f32 %v3121, %v3122
        %v3124 = vpack.c.bf16 %v3118, %v3118
        %s3125 = scalar_lea.vmem %s349, 48 [#allocation12]
        %3126 = vst [vmem:[%s3125] sm:$0xff] %v3118
        %v3127 = vld [vmem:[#allocation11] sm:$0xf]
        %v3128 = vld [vmem:[#allocation11 + $0x4] sm:$0xf]
        %v3129 = vld [vmem:[#allocation11 + $0x8] sm:$0xf]
        %v3130 = vld [vmem:[#allocation11 + $0xc] sm:$0xf]
        %v3131 = vld [vmem:[#allocation11 + $0x10] sm:$0xf]
        %v3132 = vld [vmem:[#allocation11 + $0x14] sm:$0xf]
        %v3133 = vld [vmem:[#allocation11 + $0x18] sm:$0xf]
        %v3134 = vld [vmem:[#allocation11 + $0x1c] sm:$0xf]
        %v3135 = vld [vmem:[#allocation11 + $0x20] sm:$0xf]
        %v3136 = vld [vmem:[#allocation11 + $0x24] sm:$0xf]
        %v3137 = vld [vmem:[#allocation11 + $0x28] sm:$0xf]
        %v3138 = vld [vmem:[#allocation11 + $0x2c] sm:$0xf]
        %v3139 = vld [vmem:[#allocation11 + $0x30] sm:$0xf]
        %v3140 = vld [vmem:[#allocation11 + $0x34] sm:$0xf]
        %v3141 = vld [vmem:[#allocation11 + $0x38] sm:$0xf]
        %v3142 = vld [vmem:[#allocation11 + $0x3c] sm:$0xf]
        %v3143 = vld [vmem:[#allocation11 + $0x40] sm:$0xf]
        %v3144 = vld [vmem:[#allocation11 + $0x44] sm:$0xf]
        %v3145 = vld [vmem:[#allocation11 + $0x48] sm:$0xf]
        %v3146 = vld [vmem:[#allocation11 + $0x4c] sm:$0xf]
        %v3147 = vld [vmem:[#allocation11 + $0x50] sm:$0xf]
        %v3148 = vld [vmem:[#allocation11 + $0x54] sm:$0xf]
        %v3149 = vld [vmem:[#allocation11 + $0x58] sm:$0xf]
        %v3150 = vld [vmem:[#allocation11 + $0x5c] sm:$0xf]
        %v3151 = vld [vmem:[#allocation11 + $0x60] sm:$0xf]
        %v3152 = vld [vmem:[#allocation11 + $0x64] sm:$0xf]
        %v3153 = vld [vmem:[#allocation11 + $0x68] sm:$0xf]
        %v3154 = vld [vmem:[#allocation11 + $0x6c] sm:$0xf]
        %v3155 = vld [vmem:[#allocation11 + $0x70] sm:$0xf]
        %v3156 = vld [vmem:[#allocation11 + $0x74] sm:$0xf]
        %v3157 = vld [vmem:[#allocation11 + $0x78] sm:$0xf]
        %v3158 = vld [vmem:[#allocation11 + $0x7c] sm:$0xf]
        %v3159 = vld [vmem:[#allocation11 + $0x80] sm:$0xf]
        %v3160 = vld [vmem:[#allocation11 + $0x84] sm:$0xf]
        %v3161 = vld [vmem:[#allocation11 + $0x88] sm:$0xf]
        %v3162 = vld [vmem:[#allocation11 + $0x8c] sm:$0xf]
        %v3163 = vld [vmem:[#allocation11 + $0x90] sm:$0xf]
        %v3164 = vld [vmem:[#allocation11 + $0x94] sm:$0xf]
        %v3165 = vld [vmem:[#allocation11 + $0x98] sm:$0xf]
        %v3166 = vld [vmem:[#allocation11 + $0x9c] sm:$0xf]
        %v3167 = vld [vmem:[#allocation11 + $0xa0] sm:$0xf]
        %v3168 = vld [vmem:[#allocation11 + $0xa4] sm:$0xf]
        %v3169 = vld [vmem:[#allocation11 + $0xa8] sm:$0xf]
        %v3170 = vld [vmem:[#allocation11 + $0xac] sm:$0xf]
        %v3171 = vld [vmem:[#allocation11 + $0xb0] sm:$0xf]
        %v3172 = vld [vmem:[#allocation11 + $0xb4] sm:$0xf]
        %v3173 = vld [vmem:[#allocation11 + $0xb8] sm:$0xf]
        %v3174 = vld [vmem:[#allocation11 + $0xbc] sm:$0xf]
        %v3175 = vld [vmem:[#allocation11 + $0xc0] sm:$0xf]
        %v3176 = vld [vmem:[#allocation11 + $0xc4] sm:$0xf]
        %v3177 = vld [vmem:[#allocation11 + $0xc8] sm:$0xf]
        %v3178 = vld [vmem:[#allocation11 + $0xcc] sm:$0xf]
        %v3179 = vld [vmem:[#allocation11 + $0xd0] sm:$0xf]
        %v3180 = vld [vmem:[#allocation11 + $0xd4] sm:$0xf]
        %v3181 = vld [vmem:[#allocation11 + $0xd8] sm:$0xf]
        %v3182 = vld [vmem:[#allocation11 + $0xdc] sm:$0xf]
        %v3183 = vld [vmem:[#allocation11 + $0xe0] sm:$0xf]
        %v3184 = vld [vmem:[#allocation11 + $0xe4] sm:$0xf]
        %v3185 = vld [vmem:[#allocation11 + $0xe8] sm:$0xf]
        %v3186 = vld [vmem:[#allocation11 + $0xec] sm:$0xf]
        %v3187 = vld [vmem:[#allocation11 + $0xf0] sm:$0xf]
        %v3188 = vld [vmem:[#allocation11 + $0xf4] sm:$0xf]
        %v3189 = vld [vmem:[#allocation11 + $0xf8] sm:$0xf]
        %v3190 = vld [vmem:[#allocation11 + $0xfc] sm:$0xf]
        %v3255 = vunpack.c.l.b16 %v3127
        %v3256 = vunpack.c.l.b16 %v3128
        %v3257 = vunpack.c.l.b16 %v3129
        %v3258 = vunpack.c.l.b16 %v3130
        %v3259 = vunpack.c.l.b16 %v3131
        %v3260 = vunpack.c.l.b16 %v3132
        %v3261 = vunpack.c.l.b16 %v3133
        %v3262 = vunpack.c.l.b16 %v3134
        %v3263 = vunpack.c.l.b16 %v3135
        %v3264 = vunpack.c.l.b16 %v3136
        %v3265 = vunpack.c.l.b16 %v3137
        %v3266 = vunpack.c.l.b16 %v3138
        %v3267 = vunpack.c.l.b16 %v3139
        %v3268 = vunpack.c.l.b16 %v3140
        %v3269 = vunpack.c.l.b16 %v3141
        %v3270 = vunpack.c.l.b16 %v3142
        %v3271 = vunpack.c.l.b16 %v3143
        %v3272 = vunpack.c.l.b16 %v3144
        %v3273 = vunpack.c.l.b16 %v3145
        %v3274 = vunpack.c.l.b16 %v3146
        %v3275 = vunpack.c.l.b16 %v3147
        %v3276 = vunpack.c.l.b16 %v3148
        %v3277 = vunpack.c.l.b16 %v3149
        %v3278 = vunpack.c.l.b16 %v3150
        %v3279 = vunpack.c.l.b16 %v3151
        %v3280 = vunpack.c.l.b16 %v3152
        %v3281 = vunpack.c.l.b16 %v3153
        %v3282 = vunpack.c.l.b16 %v3154
        %v3283 = vunpack.c.l.b16 %v3155
        %v3284 = vunpack.c.l.b16 %v3156
        %v3285 = vunpack.c.l.b16 %v3157
        %v3286 = vunpack.c.l.b16 %v3158
        %v3287 = vunpack.c.l.b16 %v3159
        %v3288 = vunpack.c.l.b16 %v3160
        %v3289 = vunpack.c.l.b16 %v3161
        %v3290 = vunpack.c.l.b16 %v3162
        %v3291 = vunpack.c.l.b16 %v3163
        %v3292 = vunpack.c.l.b16 %v3164
        %v3293 = vunpack.c.l.b16 %v3165
        %v3294 = vunpack.c.l.b16 %v3166
        %v3295 = vunpack.c.l.b16 %v3167
        %v3296 = vunpack.c.l.b16 %v3168
        %v3297 = vunpack.c.l.b16 %v3169
        %v3298 = vunpack.c.l.b16 %v3170
        %v3299 = vunpack.c.l.b16 %v3171
        %v3300 = vunpack.c.l.b16 %v3172
        %v3301 = vunpack.c.l.b16 %v3173
        %v3302 = vunpack.c.l.b16 %v3174
        %v3303 = vunpack.c.l.b16 %v3175
        %v3304 = vunpack.c.l.b16 %v3176
        %v3305 = vunpack.c.l.b16 %v3177
        %v3306 = vunpack.c.l.b16 %v3178
        %v3307 = vunpack.c.l.b16 %v3179
        %v3308 = vunpack.c.l.b16 %v3180
        %v3309 = vunpack.c.l.b16 %v3181
        %v3310 = vunpack.c.l.b16 %v3182
        %v3311 = vunpack.c.l.b16 %v3183
        %v3312 = vunpack.c.l.b16 %v3184
        %v3313 = vunpack.c.l.b16 %v3185
        %v3314 = vunpack.c.l.b16 %v3186
        %v3315 = vunpack.c.l.b16 %v3187
        %v3316 = vunpack.c.l.b16 %v3188
        %v3317 = vunpack.c.l.b16 %v3189
        %v3318 = vunpack.c.l.b16 %v3190
        %v3319 = vpack.c.b16 %v3256, %v3255
        %v3320 = vpack.c.b16 %v3258, %v3257
        %v3321 = vpack.c.b16 %v3260, %v3259
        %v3322 = vpack.c.b16 %v3262, %v3261
        %v3323 = vpack.c.b16 %v3264, %v3263
        %v3324 = vpack.c.b16 %v3266, %v3265
        %v3325 = vpack.c.b16 %v3268, %v3267
        %v3326 = vpack.c.b16 %v3270, %v3269
        %v3327 = vpack.c.b16 %v3272, %v3271
        %v3328 = vpack.c.b16 %v3274, %v3273
        %v3329 = vpack.c.b16 %v3276, %v3275
        %v3330 = vpack.c.b16 %v3278, %v3277
        %v3331 = vpack.c.b16 %v3280, %v3279
        %v3332 = vpack.c.b16 %v3282, %v3281
        %v3333 = vpack.c.b16 %v3284, %v3283
        %v3334 = vpack.c.b16 %v3286, %v3285
        %v3335 = vpack.c.b16 %v3288, %v3287
        %v3336 = vpack.c.b16 %v3290, %v3289
        %v3337 = vpack.c.b16 %v3292, %v3291
        %v3338 = vpack.c.b16 %v3294, %v3293
        %v3339 = vpack.c.b16 %v3296, %v3295
        %v3340 = vpack.c.b16 %v3298, %v3297
        %v3341 = vpack.c.b16 %v3300, %v3299
        %v3342 = vpack.c.b16 %v3302, %v3301
        %v3343 = vpack.c.b16 %v3304, %v3303
        %v3344 = vpack.c.b16 %v3306, %v3305
        %v3345 = vpack.c.b16 %v3308, %v3307
        %v3346 = vpack.c.b16 %v3310, %v3309
        %v3347 = vpack.c.b16 %v3312, %v3311
        %v3348 = vpack.c.b16 %v3314, %v3313
        %v3349 = vpack.c.b16 %v3316, %v3315
        %v3350 = vpack.c.b16 %v3318, %v3317
        %3383 = vmatpush.bf16.msra.mxu0 %v3326
        %3384 = vmatpush.bf16.msra.mxu0 %v3325
        %3385 = vmatpush.bf16.msra.mxu0 %v3324
        %3386 = vmatpush.bf16.msra.mxu0 %v3323
        %3387 = vmatpush.bf16.msra.mxu0 %v3322
        %3388 = vmatpush.bf16.msra.mxu0 %v3321
        %3389 = vmatpush.bf16.msra.mxu0 %v3320
        %3390 = vmatpush.bf16.msra.mxu0 %v3319
        %3391 = vmatmul.bf16.gmra.mxu0 %v3124
        %v3392 = vpop.f32.mrf.mxu0
        %v3393 = vadd.f32 0.0, %v3392
        %v3394 = vpop.f32.mrf.mxu0
        %3395 = vdwg.mxu0
        %3396 = vmatpush.bf16.msra.mxu0 %v3334
        %3397 = vmatpush.bf16.msra.mxu0 %v3333
        %3398 = vmatpush.bf16.msra.mxu0 %v3332
        %3399 = vmatpush.bf16.msra.mxu0 %v3331
        %3400 = vmatpush.bf16.msra.mxu0 %v3330
        %3401 = vmatpush.bf16.msra.mxu0 %v3329
        %3402 = vmatpush.bf16.msra.mxu0 %v3328
        %3403 = vmatpush.bf16.msra.mxu0 %v3327
        %3404 = vmatmul.bf16.gmra.mxu0 %v2797
        %v3405 = vpop.f32.mrf.mxu0
        %v3406 = vadd.f32 %v3393, %v3405
        %v3407 = vpop.f32.mrf.mxu0
        %3408 = vdwg.mxu0
        %3409 = vmatpush.bf16.msra.mxu0 %v3342
        %3410 = vmatpush.bf16.msra.mxu0 %v3341
        %3411 = vmatpush.bf16.msra.mxu0 %v3340
        %3412 = vmatpush.bf16.msra.mxu0 %v3339
        %3413 = vmatpush.bf16.msra.mxu0 %v3338
        %3414 = vmatpush.bf16.msra.mxu0 %v3337
        %3415 = vmatpush.bf16.msra.mxu0 %v3336
        %3416 = vmatpush.bf16.msra.mxu0 %v3335
        %3417 = vmatmul.bf16.gmra.mxu0 %v2470
        %v3418 = vpop.f32.mrf.mxu0
        %v3419 = vadd.f32 %v3406, %v3418
        %v3420 = vpop.f32.mrf.mxu0
        %3421 = vdwg.mxu0
        %3422 = vmatpush.bf16.msra.mxu0 %v3350
        %3423 = vmatpush.bf16.msra.mxu0 %v3349
        %3424 = vmatpush.bf16.msra.mxu0 %v3348
        %3425 = vmatpush.bf16.msra.mxu0 %v3347
        %3426 = vmatpush.bf16.msra.mxu0 %v3346
        %3427 = vmatpush.bf16.msra.mxu0 %v3345
        %3428 = vmatpush.bf16.msra.mxu0 %v3344
        %3429 = vmatpush.bf16.msra.mxu0 %v3343
        %3430 = vmatmul.bf16.gmra.mxu0 %v2143
        %v3431 = vpop.f32.mrf.mxu0
        %v3432 = vadd.f32 %v3419, %v3431
        %v3433 = vpop.f32.mrf.mxu0
        %3434 = vdwg.mxu0
        %v3435 = vadd.f32 %v795, %v3432
        %v3436 = vadd.f32 %v3435, %v805
        %v3437 = vmul.f32 %v3120, %v809
        %v3438 = vmul.f32 %v815, %v3436
        %v3439 = vadd.f32 %v3437, %v3438
        %v3440 = vmul.f32 %v3123, 1.8
        %v3441 = vadd.f32 %v3440, 0.01
        %v3442 = vsub.f32 %v3439, %v3441
        %vm3443 = vcmp.gt.f32.partialorder %v3442, 0.0
        %v3444 = vsel %vm3443, 1, 0
        %v3445 = vcvt.s32.f32 %v3444
        %v3446 = vmul.f32 %v3445, %v3441
        %v3447 = vsub.f32 %v3439, %v3446
        %v3448 = vmul.f32 %v813, %v3123
        %v3449 = vmul.f32 %v816, %v3445
        %v3450 = vadd.f32 %v3448, %v3449
        %v3451 = vpack.c.bf16 %v3445, %v3445
        %s3452 = scalar_lea.vmem %s349, 56 [#allocation12]
        %3453 = vst [vmem:[%s3452] sm:$0xff] %v3445
        %3454 = vst [vmem:[#allocation4] sm:$0xff] %v3447
        %3455 = vst [vmem:[#allocation5] sm:$0xff] %v3450
        %v3460 = vunpack.c.l.b16 %v3451
        %v3461 = vunpack.c.l.b16 %v3124
        %v3462 = vunpack.c.l.b16 %v2797
        %v3463 = vunpack.c.l.b16 %v2470
        %v3464 = vpack.c.b16 %v3461, %v3460
        %v3465 = vpack.c.b16 %v3463, %v3462
        %3468 = vst [vmem:[#allocation3] sm:$0xff] %v3464
        %3469 = vst [vmem:[#allocation3 + $0x8] sm:$0xff] %v3465
        %s3470 = sand.u32 %s201, 1
        %s3471 = scalar_lea.sflag [#allocation8], %s3470
        %s3472 = sand.u32 %s201, 1
        %s3473 = smul.addr %s3472, 64
        %s3474 = scalar_lea.vmem [#allocation12], %s3473
        // Predicated region
        $region65: #{delayed_recurrent_block_forward.1} parent=47 // pred_check
          %p3475 = pneg %p211
        $region66: #{delayed_recurrent_block_forward.1} parent=47 // pred_check_branch
          %3477 = sbr.rel (%p3475) target = $region68
        $region67: #{delayed_recurrent_block_forward.1} parent=47 // pred_region
          %s3478 = smul.u32 8, %s30
          %3480 = vsyncadd %s3471, 0
          %s3481 = smul.addr %s3478, 2
          %s3482 = sadd.s32 %s29, %s3481
          %s3483 = smul.addr %s3482, 8
          %s3484 = scalar_lea.hbm %s7, %s3483
          %s3485 = sshll.u32 %s3474, 4
          %s3486 = int_to_ptr.vmem [resolvable:$true] %s3485
          %s3487 = sshll.u32 %s3484, 4
          %s3488 = int_to_ptr.hbm [resolvable:$true] %s3487
          %3493 = dma.vmem_to_hbm [thread:$0]  %s3486, 1024, %s3488, %s3471, 128, 256, 8
        $region68: #{delayed_recurrent_block_forward.1} parent=47 // pred_fallthru
          _
      $region48: #{delayed_recurrent_block_forward.1} parent=5 // pred_fallthru
        _
      %p3494 = scmp.le.s32.totalorder 2, %s20
      // Predicated region
      $region69: #{delayed_recurrent_block_forward.1} parent=5 // pred_check
        %p3495 = pneg %p3494
      $region70: #{delayed_recurrent_block_forward.1} parent=5 // pred_check_branch
        %3497 = sbr.rel (%p3495) target = $region72
      $region71: #{delayed_recurrent_block_forward.1} parent=5 // pred_region
        %s3498 = ssub.s32 %s20, 2
        // Predicated region
        $region73: #{delayed_recurrent_block_forward.1} parent=71 // pred_check
          %p3499 = pneg %p217
        $region74: #{delayed_recurrent_block_forward.1} parent=71 // pred_check_branch
          %3501 = sbr.rel (%p3499) target = $region76
        $region75: #{delayed_recurrent_block_forward.1} parent=71 // pred_region
          %s3502 = sand.u32 %s202, 1
          %s3503 = scalar_lea.sflag [#allocation8], %s3502
          %s3504 = sand.u32 %s202, 1
          %s3505 = smul.addr %s3504, 64
          %s3506 = scalar_lea.vmem [#allocation12], %s3505
          %3508 = dma.done %s3503, 1024
        $region76: #{delayed_recurrent_block_forward.1} parent=71 // pred_fallthru
          _
      $region72: #{delayed_recurrent_block_forward.1} parent=5 // pred_fallthru
        _
    $region6: #{delayed_recurrent_block_forward.1} parent=1 // loop_footer
      %s24 = sadd.s32 1, %s20
    $region7: #{delayed_recurrent_block_forward.1} parent=1 // loop_footer_branch
      %19 = sbr.rel target = $region3
    $region8: #{delayed_recurrent_block_forward.1} parent=1 // loop_exit
      _
    %3509 = vsyncpa [#allocation7], 1
    %s3510 = scalar_lea.sflag [#allocation7], 1
    %3511 = vsyncpa %s3510, 1
    %3512 = vsyncpa [#allocation10], 1
    %3513 = vsyncpa [#allocation8], 1
    %s3514 = scalar_lea.sflag [#allocation8], 1
    %3515 = vsyncpa %s3514, 1

</llo_original>
